<compile_context>
chip_gen: v7x
topology: tpu7x:2x2x1
jax: 0.10.0
libtpu: 0.0.40
codegen_flags: <defaults>
</compile_context>

<pallas_src>
import functools

import jax
import jax.numpy as jnp
from jax.experimental import pallas as pl
from jax.experimental.pallas import tpu as pltpu


def _round_up(x, m):
    return (x + m - 1) // m * m


# ----------------------------------------------------------------------------
# Kernel 1: fused 1x1 convs + sigmoid gate + 3x3 conv + per-batch min/max
# ----------------------------------------------------------------------------
def _sab_main_kernel(x_ref, y_ref, mask_ref,
                     w1_ref, b1_ref, w2_ref, b2_ref, w3_ref, b3_ref,
                     wc_ref, bc_ref,
                     outc_ref, x1_ref, mn_ref, mx_ref,
                     cat_ref, *, wp):
    """Layouts: activations are (C, L); L = flattened zero-padded spatial."""
    c16 = w1_ref.shape[0]
    L = cat_ref.shape[-1]
    mask = mask_ref[0]                                   # (1, L): 1 on interior

    # 1x1 convs as channel matmuls.
    x0 = jnp.dot(w1_ref[...], x_ref[0],
                 preferred_element_type=jnp.float32) + b1_ref[...]
    y0 = jnp.dot(w2_ref[...], y_ref[0],
                 preferred_element_type=jnp.float32) + b2_ref[...]

    # Spatial attention gate (only interior positions are consumed downstream).
    x1 = jax.nn.sigmoid(
        jnp.dot(w3_ref[...], x0, preferred_element_type=jnp.float32)
        + b3_ref[...])                                   # (1, L)
    x1_ref[0] = x1

    # cat = concat([x0, y0], channels) with the spatial border forced to zero
    # so the 3x3 conv below sees torch-style zero padding.
    cat_ref[pl.ds(0, c16), :] = x0 * mask
    cat_ref[pl.ds(c16, c16), :] = y0 * mask
    cat = cat_ref[...]                                   # (2*c16, L)

    # 3x3 conv: 9 shifted channel matmuls.  Tap (ky,kx) at flattened position
    # q needs cat[:, q + (ky-1)*wp + (kx-1)]; interior outputs never wrap, so
    # a lane roll by -delta is exact where it matters.
    out_c = None
    k = 0
    for ky in range(3):
        for kx in range(3):
            delta = (ky - 1) * wp + (kx - 1)
            shifted = cat if delta == 0 else pltpu.roll(
                cat, shift=(-delta) % L, axis=1)
            term = jnp.dot(wc_ref[k], shifted,
                           preferred_element_type=jnp.float32)
            out_c = term if out_c is None else out_c + term
            k += 1
    out_c = out_c + bc_ref[...]
    outc_ref[0] = out_c

    # Per-batch min/max of the *valid* attention product (border/tail masked
    # out).  Reduced across batch in the wrapper; keeps this axis "parallel".
    raw = out_c * x1
    valid = mask > 0.5
    mn_ref[0] = jnp.min(jnp.where(valid, raw, jnp.inf), keepdims=True)
    mx_ref[0] = jnp.max(jnp.where(valid, raw, -jnp.inf), keepdims=True)


# ----------------------------------------------------------------------------
# Kernel 2: normalize + mask + add h + add out_c + ReLU
# ----------------------------------------------------------------------------
def _finalize_kernel(mn_ref, inv_ref, outc_ref, x1_ref, mask_ref, h_ref,
                     out_ref):
    mn = mn_ref[0, 0]                                    # SMEM scalars
    inv = inv_ref[0, 0]
    out_c = outc_ref[0]                                  # (c16, HWh)
    raw = out_c * x1_ref[0]                              # recompute (cheap)
    norm = (raw - mn) * inv
    out = norm * mask_ref[0] + h_ref[0] + out_c
    out_ref[0] = jnp.maximum(out, 0.0)


# ----------------------------------------------------------------------------
# pallas_call wrappers
# ----------------------------------------------------------------------------
def _full_spec(a):
    return pl.BlockSpec(a.shape, lambda b: (0,) * a.ndim)


def _main_call(x_e, y_e, mask_e, wc9, p, *, wp):
    n, cx, L = x_e.shape
    cy = y_e.shape[1]
    c16 = p["w1"].shape[0]
    c2 = wc9.shape[2]
    kernel = functools.partial(_sab_main_kernel, wp=wp)
    return pl.pallas_call(
        kernel,
        grid=(n,),
        in_specs=[
            pl.BlockSpec((1, cx, L), lambda b: (b, 0, 0)),
            pl.BlockSpec((1, cy, L), lambda b: (b, 0, 0)),
            pl.BlockSpec((1, 1, L), lambda b: (0, 0, 0)),
            _full_spec(p["w1"]), _full_spec(p["b1"]),
            _full_spec(p["w2"]), _full_spec(p["b2"]),
            _full_spec(p["w3"]), _full_spec(p["b3"]),
            _full_spec(wc9), _full_spec(p["bc"]),
        ],
        out_specs=[
            pl.BlockSpec((1, c16, L), lambda b: (b, 0, 0)),
            pl.BlockSpec((1, 1, L), lambda b: (b, 0, 0)),
            pl.BlockSpec((1, 1, 1), lambda b: (b, 0, 0)),
            pl.BlockSpec((1, 1, 1), lambda b: (b, 0, 0)),
        ],
        out_shape=[
            jax.ShapeDtypeStruct((n, c16, L), jnp.float32),
            jax.ShapeDtypeStruct((n, 1, L), jnp.float32),
            jax.ShapeDtypeStruct((n, 1, 1), jnp.float32),
            jax.ShapeDtypeStruct((n, 1, 1), jnp.float32),
        ],
        scratch_shapes=[pltpu.VMEM((c2, L), jnp.float32)],
        compiler_params=pltpu.CompilerParams(
            dimension_semantics=("parallel",)),
    )(x_e, y_e, mask_e, p["w1"], p["b1"], p["w2"], p["b2"],
      p["w3"], p["b3"], wc9, p["bc"])


def _finalize_call(mn, inv, outc_h, x1_h, mask_h, h_f):
    n, c16, hwh = outc_h.shape
    return pl.pallas_call(
        _finalize_kernel,
        grid=(n,),
        in_specs=[
            pl.BlockSpec(memory_space=pltpu.MemorySpace.SMEM),
            pl.BlockSpec(memory_space=pltpu.MemorySpace.SMEM),
            pl.BlockSpec((1, c16, hwh), lambda b: (b, 0, 0)),
            pl.BlockSpec((1, 1, hwh), lambda b: (b, 0, 0)),
            pl.BlockSpec((1, 1, hwh), lambda b: (0, 0, 0)),
            pl.BlockSpec((1, c16, hwh), lambda b: (b, 0, 0)),
        ],
        out_specs=pl.BlockSpec((1, c16, hwh), lambda b: (b, 0, 0)),
        out_shape=jax.ShapeDtypeStruct((n, c16, hwh), jnp.float32),
        compiler_params=pltpu.CompilerParams(
            dimension_semantics=("parallel",)),
    )(mn, inv, outc_h, x1_h, mask_h, h_f)


# ----------------------------------------------------------------------------
# Glue (plain JAX): bilinear resize, zero-pad/flatten layout, window extract
# ----------------------------------------------------------------------------
def _bilinear_align_corners(y, out_h, out_w):
    """F.interpolate(mode='bilinear', align_corners=True) in plain JAX."""
    n, c, in_h, in_w = y.shape
    if (in_h, in_w) == (out_h, out_w):
        return y

    def src(out_sz, in_sz):
        if out_sz == 1:
            return jnp.zeros((out_sz,), jnp.float32)
        return jnp.arange(out_sz, dtype=jnp.float32) * ((in_sz - 1) / (out_sz - 1))

    sy, sx = src(out_h, in_h), src(out_w, in_w)
    y0 = jnp.floor(sy).astype(jnp.int32)
    x0 = jnp.floor(sx).astype(jnp.int32)
    y1 = jnp.minimum(y0 + 1, in_h - 1)
    x1 = jnp.minimum(x0 + 1, in_w - 1)
    wy = (sy - y0.astype(jnp.float32))[None, None, :, None]
    wx = (sx - x0.astype(jnp.float32))[None, None, None, :]
    g = lambda yi, xi: y[:, :, yi, :][:, :, :, xi]
    top = g(y0, x0) * (1 - wx) + g(y0, x1) * wx
    bot = g(y1, x0) * (1 - wx) + g(y1, x1) * wx
    return top * (1 - wy) + bot * wy


def sab_forward(x, y, h, params):
    """Inputs are NCHW float arrays (PyTorch convention)."""
    n, cx, H, W = x.shape
    c16 = params["w1"].shape[0]
    Hh, Wh = h.shape[2], h.shape[3]
    Hp, Wp = H + 2, W + 2
    L = _round_up(Hp * Wp, 128)

    x = x.astype(jnp.float32)
    y = _bilinear_align_corners(y.astype(jnp.float32), H, W)
    h = h.astype(jnp.float32)

    def pad_flat(t):
        """(N, C, H, W) -> (N, C, L): 1-px zero border, flatten, zero tail."""
        tp = jnp.pad(t, ((0, 0), (0, 0), (1, 1), (1, 1)))
        tf = tp.reshape(t.shape[0], t.shape[1], Hp * Wp)
        return jnp.pad(tf, ((0, 0), (0, 0), (0, L - Hp * Wp)))

    x_e = pad_flat(x)
    y_e = pad_flat(y)
    mask_e = pad_flat(jnp.ones((1, 1, H, W), jnp.float32))

    # 3x3 weights regrouped as (tap, out_ch, in_ch), tap = ky*3 + kx.
    wc9 = jnp.transpose(params["wc"], (2, 3, 0, 1)).reshape(9, c16, -1)

    out_c_p, x1_p, mn_b, mx_b = _main_call(x_e, y_e, mask_e, wc9, params, wp=Wp)

    mn = jnp.min(mn_b)
    mx = jnp.max(mx_b)
    inv = 1.0 / (mx - mn)   # matches torch semantics (no eps guard)

    def valid(t):
        """(N, C, L) -> (N, C, H, W): interior of the padded-flat layout."""
        return t[:, :, :Hp * Wp].reshape(n, t.shape[1], Hp, Wp)[
            :, :, 1:1 + H, 1:1 + W]

    out_c_v = valid(out_c_p)                      # (n, c16, H, W)
    x1_v = valid(x1_p)                            # (n, 1, H, W)

    dY, dX = Hh - H, Wh - W
    if dY or dX:
        # TODO(synk): fold this F.pad into the finalize kernel (sub-window
        # stores) instead of materializing padded copies in HBM.
        padw = ((0, 0), (0, 0), (dY // 2, dY - dY // 2), (dX // 2, dX - dX // 2))
        out_c_v = jnp.pad(out_c_v, padw)
        x1_v = jnp.pad(x1_v, padw)
        mask_h = jnp.pad(jnp.ones((1, 1, H, W), jnp.float32),
                         ((0, 0), (0, 0), padw[2], padw[3]))
    else:
        mask_h = jnp.ones((1, 1, H, W), jnp.float32)

    hwh = Hh * Wh
    out = _finalize_call(mn.reshape(1, 1), inv.reshape(1, 1),
                         out_c_v.reshape(n, c16, hwh),
                         x1_v.reshape(n, 1, hwh),
                         mask_h.reshape(1, 1, hwh),
                         h.reshape(n, c16, hwh))
    return out.reshape(n, c16, Hh, Wh)


# ----------------------------------------------------------------------------
# Reference (pure JAX) for a numerical sanity check
# ----------------------------------------------------------------------------
def sab_reference(x, y, h, params):
    H, W = x.shape[2], x.shape[3]
    y = _bilinear_align_corners(y.astype(jnp.float32), H, W)

    def conv1x1(inp, w, b):
        return jnp.einsum("oc,nchw->nohw", w, inp) + b.reshape(1, -1, 1, 1)

    x0 = conv1x1(x, params["w1"], params["b1"])
    y0 = conv1x1(y, params["w2"], params["b2"])
    x1 = jax.nn.sigmoid(conv1x1(x0, params["w3"], params["b3"]))
    cat = jnp.concatenate([x0, y0], axis=1)
    out_c = jax.lax.conv_general_dilated(
        cat, params["wc"], (1, 1), ((1, 1), (1, 1)),
        dimension_numbers=("NCHW", "OIHW", "NCHW")) + params["bc"].reshape(1, -1, 1, 1)
    out = out_c * x1
    out = (out - out.min()) / (out.max() - out.min())
    dY, dX = h.shape[2] - out.shape[2], h.shape[3] - out.shape[3]
    padw = ((0, 0), (0, 0), (dY // 2, dY - dY // 2), (dX // 2, dX - dX // 2))
    out1 = jnp.pad(out, padw) + h
    out2 = out1 + jnp.pad(out_c, padw)
    return jax.nn.relu(out2)


# ----------------------------------------------------------------------------
# Parameter init (deterministic, synthetic)
# ----------------------------------------------------------------------------
def init_params(key, inplanes, planes):
    c16 = inplanes // 16
    c2 = inplanes // 8
    ks = jax.random.split(key, 8)
    w = lambda k, s: 0.2 * jax.random.normal(k, s, jnp.float32)
    return {
        "w1": w(ks[0], (c16, inplanes)),     # conv1_1 (1x1)
        "b1": w(ks[1], (c16, 1)),
        "w2": w(ks[2], (c16, planes)),       # conv1_2 (1x1)
        "b2": w(ks[3], (c16, 1)),
        "w3": w(ks[4], (1, c16)),            # conv1x1_1
        "b3": w(ks[5], (1, 1)),
        "wc": w(ks[6], (c16, c2, 3, 3)),     # conv3x3 (OIHW)
        "bc": w(ks[7], (c16, 1)),
    }


if __name__ == "__main__":
    key = jax.random.PRNGKey(0)
    inplanes, planes = 32, 32
    N, H, W = 2, 16, 16
    kx, ky, kh, kp = jax.random.split(key, 4)
    x = jax.random.normal(kx, (N, inplanes, H, W), jnp.float32)
    y = jax.random.normal(ky, (N, planes, H, W), jnp.float32)
    h = jax.random.normal(kh, (N, inplanes // 16, H, W), jnp.float32)
    params = init_params(kp, inplanes, planes)

    out = jax.jit(sab_forward)(x, y, h, params)
    jax.block_until_ready(out)
    assert out.shape == h.shape

    ref = sab_reference(x, y, h, params)
    assert jnp.allclose(out, ref, rtol=1e-2, atol=1e-2), \
        f"max abs diff {jnp.max(jnp.abs(out - ref))}"

    print("KERNEL_OK")
</pallas_src>

<mosaic_0001>
module attributes {stable_mosaic.version = 11 : i64} {
  func.func @_sab_main_kernel(%arg0: i32, %arg1: memref<1x32x384xf32, #tpu.memory_space<vmem>>, %arg2: memref<1x32x384xf32, #tpu.memory_space<vmem>>, %arg3: memref<1x1x384xf32, #tpu.memory_space<vmem>>, %arg4: memref<2x32xf32, #tpu.memory_space<vmem>>, %arg5: memref<2x1xf32, #tpu.memory_space<vmem>>, %arg6: memref<2x32xf32, #tpu.memory_space<vmem>>, %arg7: memref<2x1xf32, #tpu.memory_space<vmem>>, %arg8: memref<1x2xf32, #tpu.memory_space<vmem>>, %arg9: memref<1x1xf32, #tpu.memory_space<vmem>>, %arg10: memref<9x2x4xf32, #tpu.memory_space<vmem>>, %arg11: memref<2x1xf32, #tpu.memory_space<vmem>>, %arg12: memref<1x2x384xf32, #tpu.memory_space<vmem>>, %arg13: memref<1x1x384xf32, #tpu.memory_space<vmem>>, %arg14: memref<1x1x1xf32, #tpu.memory_space<vmem>>, %arg15: memref<1x1x1xf32, #tpu.memory_space<vmem>>, %arg16: memref<4x384xf32, #tpu.memory_space<vmem>>) attributes {dimension_semantics = [#tpu.dimension_semantics<parallel>], iteration_bounds = array<i64: 2>, scalar_prefetch = 0 : i64, scratch_operands = 1 : i64, tpu.core_type = #tpu.core_type<tc>, window_params = [{transform_indices = @transform_0, window_bounds = array<i64: 1, 32, 384>}, {transform_indices = @transform_1, window_bounds = array<i64: 1, 32, 384>}, {pipeline_mode = #tpu.pipeline_mode<synchronous>, transform_indices = @transform_2, window_bounds = array<i64: 1, 1, 384>}, {pipeline_mode = #tpu.pipeline_mode<synchronous>, transform_indices = @transform_3, window_bounds = array<i64: 2, 32>}, {pipeline_mode = #tpu.pipeline_mode<synchronous>, transform_indices = @transform_4, window_bounds = array<i64: 2, 1>}, {pipeline_mode = #tpu.pipeline_mode<synchronous>, transform_indices = @transform_5, window_bounds = array<i64: 2, 32>}, {pipeline_mode = #tpu.pipeline_mode<synchronous>, transform_indices = @transform_6, window_bounds = array<i64: 2, 1>}, {pipeline_mode = #tpu.pipeline_mode<synchronous>, transform_indices = @transform_7, window_bounds = array<i64: 1, 2>}, {pipeline_mode = #tpu.pipeline_mode<synchronous>, transform_indices = @transform_8, window_bounds = array<i64: 1, 1>}, {pipeline_mode = #tpu.pipeline_mode<synchronous>, transform_indices = @transform_9, window_bounds = array<i64: 9, 2, 4>}, {pipeline_mode = #tpu.pipeline_mode<synchronous>, transform_indices = @transform_10, window_bounds = array<i64: 2, 1>}, {transform_indices = @transform_11, window_bounds = array<i64: 1, 2, 384>}, {transform_indices = @transform_12, window_bounds = array<i64: 1, 1, 384>}, {transform_indices = @transform_13, window_bounds = array<i64: 1, 1, 1>}, {transform_indices = @transform_14, window_bounds = array<i64: 1, 1, 1>}]} {
    %c0 = arith.constant 0 : index
    %c0_0 = arith.constant 0 : index
    %c0_1 = arith.constant 0 : index
    %0 = vector.load %arg3[%c0, %c0_0, %c0_1] : memref<1x1x384xf32, #tpu.memory_space<vmem>>, vector<1x1x384xf32>
    %1 = vector.shape_cast %0 : vector<1x1x384xf32> to vector<1x384xf32>
    %c0_2 = arith.constant 0 : index
    %c0_3 = arith.constant 0 : index
    %2 = vector.load %arg4[%c0_2, %c0_3] : memref<2x32xf32, #tpu.memory_space<vmem>>, vector<2x32xf32>
    %c0_4 = arith.constant 0 : index
    %c0_5 = arith.constant 0 : index
    %c0_6 = arith.constant 0 : index
    %3 = vector.load %arg1[%c0_4, %c0_5, %c0_6] : memref<1x32x384xf32, #tpu.memory_space<vmem>>, vector<1x32x384xf32>
    %4 = vector.shape_cast %3 : vector<1x32x384xf32> to vector<32x384xf32>
    %cst = arith.constant dense<0.000000e+00> : vector<2x384xf32>
    %5 = tpu.matmul %2, %4, %cst {dimension_numbers = #tpu.dot_dimension_numbers<[1], [0], [0], [1], [0, 0, 1, 1], [], []>} : vector<2x32xf32>, vector<32x384xf32>, vector<2x384xf32> -> vector<2x384xf32>
    %c0_7 = arith.constant 0 : index
    %c0_8 = arith.constant 0 : index
    %6 = vector.load %arg5[%c0_7, %c0_8] : memref<2x1xf32, #tpu.memory_space<vmem>>, vector<2x1xf32>
    %7 = vector.broadcast %6 : vector<2x1xf32> to vector<2x384xf32>
    %8 = arith.addf %5, %7 : vector<2x384xf32>
    %c0_9 = arith.constant 0 : index
    %c0_10 = arith.constant 0 : index
    %9 = vector.load %arg6[%c0_9, %c0_10] : memref<2x32xf32, #tpu.memory_space<vmem>>, vector<2x32xf32>
    %c0_11 = arith.constant 0 : index
    %c0_12 = arith.constant 0 : index
    %c0_13 = arith.constant 0 : index
    %10 = vector.load %arg2[%c0_11, %c0_12, %c0_13] : memref<1x32x384xf32, #tpu.memory_space<vmem>>, vector<1x32x384xf32>
    %11 = vector.shape_cast %10 : vector<1x32x384xf32> to vector<32x384xf32>
    %cst_14 = arith.constant dense<0.000000e+00> : vector<2x384xf32>
    %12 = tpu.matmul %9, %11, %cst_14 {dimension_numbers = #tpu.dot_dimension_numbers<[1], [0], [0], [1], [0, 0, 1, 1], [], []>} : vector<2x32xf32>, vector<32x384xf32>, vector<2x384xf32> -> vector<2x384xf32>
    %c0_15 = arith.constant 0 : index
    %c0_16 = arith.constant 0 : index
    %13 = vector.load %arg7[%c0_15, %c0_16] : memref<2x1xf32, #tpu.memory_space<vmem>>, vector<2x1xf32>
    %14 = vector.broadcast %13 : vector<2x1xf32> to vector<2x384xf32>
    %15 = arith.addf %12, %14 : vector<2x384xf32>
    %c0_17 = arith.constant 0 : index
    %c0_18 = arith.constant 0 : index
    %16 = vector.load %arg8[%c0_17, %c0_18] : memref<1x2xf32, #tpu.memory_space<vmem>>, vector<1x2xf32>
    %cst_19 = arith.constant dense<0.000000e+00> : vector<1x384xf32>
    %17 = tpu.matmul %16, %8, %cst_19 {dimension_numbers = #tpu.dot_dimension_numbers<[1], [0], [0], [1], [0, 0, 1, 1], [], []>} : vector<1x2xf32>, vector<2x384xf32>, vector<1x384xf32> -> vector<1x384xf32>
    %c0_20 = arith.constant 0 : index
    %c0_21 = arith.constant 0 : index
    %18 = vector.load %arg9[%c0_20, %c0_21] : memref<1x1xf32, #tpu.memory_space<vmem>>, vector<1x1xf32>
    %19 = vector.broadcast %18 : vector<1x1xf32> to vector<1x384xf32>
    %20 = arith.addf %17, %19 : vector<1x384xf32>
    %21 = arith.negf %20 : vector<1x384xf32>
    %22 = math.exp %21 : vector<1x384xf32>
    %cst_22 = arith.constant 1.000000e+00 : f32
    %23 = vector.broadcast %cst_22 : f32 to vector<1x384xf32>
    %24 = arith.addf %23, %22 : vector<1x384xf32>
    %25 = arith.divf %23, %24 : vector<1x384xf32>
    %c0_23 = arith.constant 0 : index
    %c0_24 = arith.constant 0 : index
    %c0_25 = arith.constant 0 : index
    %26 = vector.load %arg13[%c0_23, %c0_24, %c0_25] : memref<1x1x384xf32, #tpu.memory_space<vmem>>, vector<1x1x384xf32>
    %27 = vector.shape_cast %26 : vector<1x1x384xf32> to vector<1x384xf32>
    %28 = vector.shape_cast %25 : vector<1x384xf32> to vector<1x1x384xf32>
    tpu.vector_store %arg13[%c0_23, %c0_24, %c0_25], %28 {strides = array<i32>} : memref<1x1x384xf32, #tpu.memory_space<vmem>>, vector<1x1x384xf32>,
    %29 = vector.broadcast %1 : vector<1x384xf32> to vector<2x384xf32>
    %30 = arith.mulf %8, %29 : vector<2x384xf32>
    %c0_26 = arith.constant 0 : index
    %c0_27 = arith.constant 0 : index
    %31 = vector.load %arg16[%c0_26, %c0_27] : memref<4x384xf32, #tpu.memory_space<vmem>>, vector<2x384xf32>
    tpu.vector_store %arg16[%c0_26, %c0_27], %30 {strides = array<i32>} : memref<4x384xf32, #tpu.memory_space<vmem>>, vector<2x384xf32>,
    %32 = vector.broadcast %1 : vector<1x384xf32> to vector<2x384xf32>
    %33 = arith.mulf %15, %32 : vector<2x384xf32>
    %c2 = arith.constant 2 : index
    %c0_28 = arith.constant 0 : index
    %34 = vector.load %arg16[%c2, %c0_28] : memref<4x384xf32, #tpu.memory_space<vmem>>, vector<2x384xf32>
    tpu.vector_store %arg16[%c2, %c0_28], %33 {strides = array<i32>} : memref<4x384xf32, #tpu.memory_space<vmem>>, vector<2x384xf32>,
    %c0_29 = arith.constant 0 : index
    %c0_30 = arith.constant 0 : index
    %35 = vector.load %arg16[%c0_29, %c0_30] : memref<4x384xf32, #tpu.memory_space<vmem>>, vector<4x384xf32>
    %c19_i32 = arith.constant 19 : i32
    %36 = tpu.dynamic_rotate %35 by %c19_i32 dim 1 : vector<4x384xf32>, i32 -> vector<4x384xf32>
    %c0_31 = arith.constant 0 : index
    %c0_32 = arith.constant 0 : index
    %c0_33 = arith.constant 0 : index
    %37 = vector.load %arg10[%c0_31, %c0_32, %c0_33] : memref<9x2x4xf32, #tpu.memory_space<vmem>>, vector<1x2x4xf32>
    %38 = vector.shape_cast %37 : vector<1x2x4xf32> to vector<2x4xf32>
    %cst_34 = arith.constant dense<0.000000e+00> : vector<2x384xf32>
    %39 = tpu.matmul %38, %36, %cst_34 {dimension_numbers = #tpu.dot_dimension_numbers<[1], [0], [0], [1], [0, 0, 1, 1], [], []>} : vector<2x4xf32>, vector<4x384xf32>, vector<2x384xf32> -> vector<2x384xf32>
    %c18_i32 = arith.constant 18 : i32
    %40 = tpu.dynamic_rotate %35 by %c18_i32 dim 1 : vector<4x384xf32>, i32 -> vector<4x384xf32>
    %c1 = arith.constant 1 : index
    %c0_35 = arith.constant 0 : index
    %c0_36 = arith.constant 0 : index
    %41 = vector.load %arg10[%c1, %c0_35, %c0_36] : memref<9x2x4xf32, #tpu.memory_space<vmem>>, vector<1x2x4xf32>
    %42 = vector.shape_cast %41 : vector<1x2x4xf32> to vector<2x4xf32>
    %cst_37 = arith.constant dense<0.000000e+00> : vector<2x384xf32>
    %43 = tpu.matmul %42, %40, %cst_37 {dimension_numbers = #tpu.dot_dimension_numbers<[1], [0], [0], [1], [0, 0, 1, 1], [], []>} : vector<2x4xf32>, vector<4x384xf32>, vector<2x384xf32> -> vector<2x384xf32>
    %44 = arith.addf %39, %43 : vector<2x384xf32>
    %c17_i32 = arith.constant 17 : i32
    %45 = tpu.dynamic_rotate %35 by %c17_i32 dim 1 : vector<4x384xf32>, i32 -> vector<4x384xf32>
    %c2_38 = arith.constant 2 : index
    %c0_39 = arith.constant 0 : index
    %c0_40 = arith.constant 0 : index
    %46 = vector.load %arg10[%c2_38, %c0_39, %c0_40] : memref<9x2x4xf32, #tpu.memory_space<vmem>>, vector<1x2x4xf32>
    %47 = vector.shape_cast %46 : vector<1x2x4xf32> to vector<2x4xf32>
    %cst_41 = arith.constant dense<0.000000e+00> : vector<2x384xf32>
    %48 = tpu.matmul %47, %45, %cst_41 {dimension_numbers = #tpu.dot_dimension_numbers<[1], [0], [0], [1], [0, 0, 1, 1], [], []>} : vector<2x4xf32>, vector<4x384xf32>, vector<2x384xf32> -> vector<2x384xf32>
    %49 = arith.addf %44, %48 : vector<2x384xf32>
    %c1_i32 = arith.constant 1 : i32
    %50 = tpu.dynamic_rotate %35 by %c1_i32 dim 1 : vector<4x384xf32>, i32 -> vector<4x384xf32>
    %c3 = arith.constant 3 : index
    %c0_42 = arith.constant 0 : index
    %c0_43 = arith.constant 0 : index
    %51 = vector.load %arg10[%c3, %c0_42, %c0_43] : memref<9x2x4xf32, #tpu.memory_space<vmem>>, vector<1x2x4xf32>
    %52 = vector.shape_cast %51 : vector<1x2x4xf32> to vector<2x4xf32>
    %cst_44 = arith.constant dense<0.000000e+00> : vector<2x384xf32>
    %53 = tpu.matmul %52, %50, %cst_44 {dimension_numbers = #tpu.dot_dimension_numbers<[1], [0], [0], [1], [0, 0, 1, 1], [], []>} : vector<2x4xf32>, vector<4x384xf32>, vector<2x384xf32> -> vector<2x384xf32>
    %54 = arith.addf %49, %53 : vector<2x384xf32>
    %c4 = arith.constant 4 : index
    %c0_45 = arith.constant 0 : index
    %c0_46 = arith.constant 0 : index
    %55 = vector.load %arg10[%c4, %c0_45, %c0_46] : memref<9x2x4xf32, #tpu.memory_space<vmem>>, vector<1x2x4xf32>
    %56 = vector.shape_cast %55 : vector<1x2x4xf32> to vector<2x4xf32>
    %cst_47 = arith.constant dense<0.000000e+00> : vector<2x384xf32>
    %57 = tpu.matmul %56, %35, %cst_47 {dimension_numbers = #tpu.dot_dimension_numbers<[1], [0], [0], [1], [0, 0, 1, 1], [], []>} : vector<2x4xf32>, vector<4x384xf32>, vector<2x384xf32> -> vector<2x384xf32>
    %58 = arith.addf %54, %57 : vector<2x384xf32>
    %c383_i32 = arith.constant 383 : i32
    %59 = tpu.dynamic_rotate %35 by %c383_i32 dim 1 : vector<4x384xf32>, i32 -> vector<4x384xf32>
    %c5 = arith.constant 5 : index
    %c0_48 = arith.constant 0 : index
    %c0_49 = arith.constant 0 : index
    %60 = vector.load %arg10[%c5, %c0_48, %c0_49] : memref<9x2x4xf32, #tpu.memory_space<vmem>>, vector<1x2x4xf32>
    %61 = vector.shape_cast %60 : vector<1x2x4xf32> to vector<2x4xf32>
    %cst_50 = arith.constant dense<0.000000e+00> : vector<2x384xf32>
    %62 = tpu.matmul %61, %59, %cst_50 {dimension_numbers = #tpu.dot_dimension_numbers<[1], [0], [0], [1], [0, 0, 1, 1], [], []>} : vector<2x4xf32>, vector<4x384xf32>, vector<2x384xf32> -> vector<2x384xf32>
    %63 = arith.addf %58, %62 : vector<2x384xf32>
    %c367_i32 = arith.constant 367 : i32
    %64 = tpu.dynamic_rotate %35 by %c367_i32 dim 1 : vector<4x384xf32>, i32 -> vector<4x384xf32>
    %c6 = arith.constant 6 : index
    %c0_51 = arith.constant 0 : index
    %c0_52 = arith.constant 0 : index
    %65 = vector.load %arg10[%c6, %c0_51, %c0_52] : memref<9x2x4xf32, #tpu.memory_space<vmem>>, vector<1x2x4xf32>
    %66 = vector.shape_cast %65 : vector<1x2x4xf32> to vector<2x4xf32>
    %cst_53 = arith.constant dense<0.000000e+00> : vector<2x384xf32>
    %67 = tpu.matmul %66, %64, %cst_53 {dimension_numbers = #tpu.dot_dimension_numbers<[1], [0], [0], [1], [0, 0, 1, 1], [], []>} : vector<2x4xf32>, vector<4x384xf32>, vector<2x384xf32> -> vector<2x384xf32>
    %68 = arith.addf %63, %67 : vector<2x384xf32>
    %c366_i32 = arith.constant 366 : i32
    %69 = tpu.dynamic_rotate %35 by %c366_i32 dim 1 : vector<4x384xf32>, i32 -> vector<4x384xf32>
    %c7 = arith.constant 7 : index
    %c0_54 = arith.constant 0 : index
    %c0_55 = arith.constant 0 : index
    %70 = vector.load %arg10[%c7, %c0_54, %c0_55] : memref<9x2x4xf32, #tpu.memory_space<vmem>>, vector<1x2x4xf32>
    %71 = vector.shape_cast %70 : vector<1x2x4xf32> to vector<2x4xf32>
    %cst_56 = arith.constant dense<0.000000e+00> : vector<2x384xf32>
    %72 = tpu.matmul %71, %69, %cst_56 {dimension_numbers = #tpu.dot_dimension_numbers<[1], [0], [0], [1], [0, 0, 1, 1], [], []>} : vector<2x4xf32>, vector<4x384xf32>, vector<2x384xf32> -> vector<2x384xf32>
    %73 = arith.addf %68, %72 : vector<2x384xf32>
    %c365_i32 = arith.constant 365 : i32
    %74 = tpu.dynamic_rotate %35 by %c365_i32 dim 1 : vector<4x384xf32>, i32 -> vector<4x384xf32>
    %c8 = arith.constant 8 : index
    %c0_57 = arith.constant 0 : index
    %c0_58 = arith.constant 0 : index
    %75 = vector.load %arg10[%c8, %c0_57, %c0_58] : memref<9x2x4xf32, #tpu.memory_space<vmem>>, vector<1x2x4xf32>
    %76 = vector.shape_cast %75 : vector<1x2x4xf32> to vector<2x4xf32>
    %cst_59 = arith.constant dense<0.000000e+00> : vector<2x384xf32>
    %77 = tpu.matmul %76, %74, %cst_59 {dimension_numbers = #tpu.dot_dimension_numbers<[1], [0], [0], [1], [0, 0, 1, 1], [], []>} : vector<2x4xf32>, vector<4x384xf32>, vector<2x384xf32> -> vector<2x384xf32>
    %78 = arith.addf %73, %77 : vector<2x384xf32>
    %c0_60 = arith.constant 0 : index
    %c0_61 = arith.constant 0 : index
    %79 = vector.load %arg11[%c0_60, %c0_61] : memref<2x1xf32, #tpu.memory_space<vmem>>, vector<2x1xf32>
    %80 = vector.broadcast %79 : vector<2x1xf32> to vector<2x384xf32>
    %81 = arith.addf %78, %80 : vector<2x384xf32>
    %c0_62 = arith.constant 0 : index
    %c0_63 = arith.constant 0 : index
    %c0_64 = arith.constant 0 : index
    %82 = vector.load %arg12[%c0_62, %c0_63, %c0_64] : memref<1x2x384xf32, #tpu.memory_space<vmem>>, vector<1x2x384xf32>
    %83 = vector.shape_cast %82 : vector<1x2x384xf32> to vector<2x384xf32>
    %84 = vector.shape_cast %81 : vector<2x384xf32> to vector<1x2x384xf32>
    tpu.vector_store %arg12[%c0_62, %c0_63, %c0_64], %84 {strides = array<i32>} : memref<1x2x384xf32, #tpu.memory_space<vmem>>, vector<1x2x384xf32>,
    %85 = vector.broadcast %25 : vector<1x384xf32> to vector<2x384xf32>
    %86 = arith.mulf %81, %85 : vector<2x384xf32>
    %cst_65 = arith.constant 5.000000e-01 : f32
    %87 = vector.broadcast %cst_65 : f32 to vector<1x384xf32>
    %88 = arith.cmpf ogt, %1, %87 : vector<1x384xf32>
    %cst_66 = arith.constant 0x7F800000 : f32
    %89 = vector.shape_cast %88 : vector<1x384xi1> to vector<1x384xi1>
    %90 = vector.broadcast %89 : vector<1x384xi1> to vector<2x384xi1>
    %91 = vector.broadcast %cst_66 : f32 to vector<2x384xf32>
    %92 = arith.select %90, %86, %91 : vector<2x384xi1>, vector<2x384xf32>
    %93 = vector.shape_cast %92 : vector<2x384xf32> to vector<1x2x384xf32>
    %cst_67 = arith.constant dense<0x7F800000> : vector<1xf32>
    %94 = vector.multi_reduction <minimumf>, %93, %cst_67 [1, 2] : vector<1x2x384xf32> to vector<1xf32>
    %95 = vector.shape_cast %94 : vector<1xf32> to vector<1x1x1xf32>
    %96 = vector.extract %95[0, 0, 0] : f32 from vector<1x1x1xf32>
    %97 = vector.broadcast %96 : f32 to vector<1x1xf32>
    %c0_68 = arith.constant 0 : index
    %c0_69 = arith.constant 0 : index
    %c0_70 = arith.constant 0 : index
    %98 = vector.load %arg14[%c0_68, %c0_69, %c0_70] : memref<1x1x1xf32, #tpu.memory_space<vmem>>, vector<1x1x1xf32>
    %99 = vector.shape_cast %98 : vector<1x1x1xf32> to vector<1x1xf32>
    %100 = vector.shape_cast %97 : vector<1x1xf32> to vector<1x1x1xf32>
    tpu.vector_store %arg14[%c0_68, %c0_69, %c0_70], %100 {strides = array<i32>} : memref<1x1x1xf32, #tpu.memory_space<vmem>>, vector<1x1x1xf32>,
    %cst_71 = arith.constant 0xFF800000 : f32
    %101 = vector.shape_cast %88 : vector<1x384xi1> to vector<1x384xi1>
    %102 = vector.broadcast %101 : vector<1x384xi1> to vector<2x384xi1>
    %103 = vector.broadcast %cst_71 : f32 to vector<2x384xf32>
    %104 = arith.select %102, %86, %103 : vector<2x384xi1>, vector<2x384xf32>
    %105 = vector.shape_cast %104 : vector<2x384xf32> to vector<1x2x384xf32>
    %cst_72 = arith.constant dense<0xFF800000> : vector<1xf32>
    %106 = vector.multi_reduction <maximumf>, %105, %cst_72 [1, 2] : vector<1x2x384xf32> to vector<1xf32>
    %107 = vector.shape_cast %106 : vector<1xf32> to vector<1x1x1xf32>
    %108 = vector.extract %107[0, 0, 0] : f32 from vector<1x1x1xf32>
    %109 = vector.broadcast %108 : f32 to vector<1x1xf32>
    %c0_73 = arith.constant 0 : index
    %c0_74 = arith.constant 0 : index
    %c0_75 = arith.constant 0 : index
    %110 = vector.load %arg15[%c0_73, %c0_74, %c0_75] : memref<1x1x1xf32, #tpu.memory_space<vmem>>, vector<1x1x1xf32>
    %111 = vector.shape_cast %110 : vector<1x1x1xf32> to vector<1x1xf32>
    %112 = vector.shape_cast %109 : vector<1x1xf32> to vector<1x1x1xf32>
    tpu.vector_store %arg15[%c0_73, %c0_74, %c0_75], %112 {strides = array<i32>} : memref<1x1x1xf32, #tpu.memory_space<vmem>>, vector<1x1x1xf32>,
    return
  }
  func.func @transform_0(%arg0: i32) -> (i32, i32, i32) {
    %c0_i32 = arith.constant 0 : i32
    %c0_i32_0 = arith.constant 0 : i32
    %c0_i32_1 = arith.constant 0 : i32
    return %arg0, %c0_i32, %c0_i32_0 : i32, i32, i32
  }
  func.func @transform_1(%arg0: i32) -> (i32, i32, i32) {
    %c0_i32 = arith.constant 0 : i32
    %c0_i32_0 = arith.constant 0 : i32
    %c0_i32_1 = arith.constant 0 : i32
    return %arg0, %c0_i32, %c0_i32_0 : i32, i32, i32
  }
  func.func @transform_2(%arg0: i32) -> (i32, i32, i32) {
    %c0_i32 = arith.constant 0 : i32
    %c0_i32_0 = arith.constant 0 : i32
    %c0_i32_1 = arith.constant 0 : i32
    %c0_i32_2 = arith.constant 0 : i32
    return %c0_i32, %c0_i32_0, %c0_i32_1 : i32, i32, i32
  }
  func.func @transform_3(%arg0: i32) -> (i32, i32) {
    %c0_i32 = arith.constant 0 : i32
    %c0_i32_0 = arith.constant 0 : i32
    %c0_i32_1 = arith.constant 0 : i32
    return %c0_i32, %c0_i32_0 : i32, i32
  }
  func.func @transform_4(%arg0: i32) -> (i32, i32) {
    %c0_i32 = arith.constant 0 : i32
    %c0_i32_0 = arith.constant 0 : i32
    %c0_i32_1 = arith.constant 0 : i32
    return %c0_i32, %c0_i32_0 : i32, i32
  }
  func.func @transform_5(%arg0: i32) -> (i32, i32) {
    %c0_i32 = arith.constant 0 : i32
    %c0_i32_0 = arith.constant 0 : i32
    %c0_i32_1 = arith.constant 0 : i32
    return %c0_i32, %c0_i32_0 : i32, i32
  }
  func.func @transform_6(%arg0: i32) -> (i32, i32) {
    %c0_i32 = arith.constant 0 : i32
    %c0_i32_0 = arith.constant 0 : i32
    %c0_i32_1 = arith.constant 0 : i32
    return %c0_i32, %c0_i32_0 : i32, i32
  }
  func.func @transform_7(%arg0: i32) -> (i32, i32) {
    %c0_i32 = arith.constant 0 : i32
    %c0_i32_0 = arith.constant 0 : i32
    %c0_i32_1 = arith.constant 0 : i32
    return %c0_i32, %c0_i32_0 : i32, i32
  }
  func.func @transform_8(%arg0: i32) -> (i32, i32) {
    %c0_i32 = arith.constant 0 : i32
    %c0_i32_0 = arith.constant 0 : i32
    %c0_i32_1 = arith.constant 0 : i32
    return %c0_i32, %c0_i32_0 : i32, i32
  }
  func.func @transform_9(%arg0: i32) -> (i32, i32, i32) {
    %c0_i32 = arith.constant 0 : i32
    %c0_i32_0 = arith.constant 0 : i32
    %c0_i32_1 = arith.constant 0 : i32
    %c0_i32_2 = arith.constant 0 : i32
    return %c0_i32, %c0_i32_0, %c0_i32_1 : i32, i32, i32
  }
  func.func @transform_10(%arg0: i32) -> (i32, i32) {
    %c0_i32 = arith.constant 0 : i32
    %c0_i32_0 = arith.constant 0 : i32
    %c0_i32_1 = arith.constant 0 : i32
    return %c0_i32, %c0_i32_0 : i32, i32
  }
  func.func @transform_11(%arg0: i32) -> (i32, i32, i32) {
    %c0_i32 = arith.constant 0 : i32
    %c0_i32_0 = arith.constant 0 : i32
    %c0_i32_1 = arith.constant 0 : i32
    return %arg0, %c0_i32, %c0_i32_0 : i32, i32, i32
  }
  func.func @transform_12(%arg0: i32) -> (i32, i32, i32) {
    %c0_i32 = arith.constant 0 : i32
    %c0_i32_0 = arith.constant 0 : i32
    %c0_i32_1 = arith.constant 0 : i32
    return %arg0, %c0_i32, %c0_i32_0 : i32, i32, i32
  }
  func.func @transform_13(%arg0: i32) -> (i32, i32, i32) {
    %c0_i32 = arith.constant 0 : i32
    %c0_i32_0 = arith.constant 0 : i32
    %c0_i32_1 = arith.constant 0 : i32
    return %arg0, %c0_i32, %c0_i32_0 : i32, i32, i32
  }
  func.func @transform_14(%arg0: i32) -> (i32, i32, i32) {
    %c0_i32 = arith.constant 0 : i32
    %c0_i32_0 = arith.constant 0 : i32
    %c0_i32_1 = arith.constant 0 : i32
    return %arg0, %c0_i32, %c0_i32_0 : i32, i32, i32
  }
}

module attributes {stable_mosaic.version = 11 : i64} {
  func.func @_finalize_kernel(%arg0: i32, %arg1: memref<1x1xf32, #tpu.memory_space<smem>>, %arg2: memref<1x1xf32, #tpu.memory_space<smem>>, %arg3: memref<1x2x256xf32, #tpu.memory_space<vmem>>, %arg4: memref<1x1x256xf32, #tpu.memory_space<vmem>>, %arg5: memref<1x1x256xf32, #tpu.memory_space<vmem>>, %arg6: memref<1x2x256xf32, #tpu.memory_space<vmem>>, %arg7: memref<1x2x256xf32, #tpu.memory_space<vmem>>) attributes {dimension_semantics = [#tpu.dimension_semantics<parallel>], iteration_bounds = array<i64: 2>, scalar_prefetch = 0 : i64, scratch_operands = 0 : i64, tpu.core_type = #tpu.core_type<tc>, window_params = [{transform_indices = @transform_0, window_bounds = array<i64: 1, 1>}, {transform_indices = @transform_1, window_bounds = array<i64: 1, 1>}, {transform_indices = @transform_2, window_bounds = array<i64: 1, 2, 256>}, {transform_indices = @transform_3, window_bounds = array<i64: 1, 1, 256>}, {pipeline_mode = #tpu.pipeline_mode<synchronous>, transform_indices = @transform_4, window_bounds = array<i64: 1, 1, 256>}, {transform_indices = @transform_5, window_bounds = array<i64: 1, 2, 256>}, {transform_indices = @transform_6, window_bounds = array<i64: 1, 2, 256>}]} {
    %c0 = arith.constant 0 : index
    %c0_0 = arith.constant 0 : index
    %0 = memref.load %arg1[%c0, %c0_0] : memref<1x1xf32, #tpu.memory_space<smem>>
    %c0_1 = arith.constant 0 : index
    %c0_2 = arith.constant 0 : index
    %1 = memref.load %arg2[%c0_1, %c0_2] : memref<1x1xf32, #tpu.memory_space<smem>>
    %c0_3 = arith.constant 0 : index
    %c0_4 = arith.constant 0 : index
    %c0_5 = arith.constant 0 : index
    %2 = vector.load %arg3[%c0_3, %c0_4, %c0_5] : memref<1x2x256xf32, #tpu.memory_space<vmem>>, vector<1x2x256xf32>
    %3 = vector.shape_cast %2 : vector<1x2x256xf32> to vector<2x256xf32>
    %c0_6 = arith.constant 0 : index
    %c0_7 = arith.constant 0 : index
    %c0_8 = arith.constant 0 : index
    %4 = vector.load %arg4[%c0_6, %c0_7, %c0_8] : memref<1x1x256xf32, #tpu.memory_space<vmem>>, vector<1x1x256xf32>
    %5 = vector.shape_cast %4 : vector<1x1x256xf32> to vector<1x256xf32>
    %6 = vector.broadcast %5 : vector<1x256xf32> to vector<2x256xf32>
    %7 = arith.mulf %3, %6 : vector<2x256xf32>
    %8 = vector.broadcast %0 : f32 to vector<2x256xf32>
    %9 = arith.subf %7, %8 : vector<2x256xf32>
    %10 = vector.broadcast %1 : f32 to vector<2x256xf32>
    %11 = arith.mulf %9, %10 : vector<2x256xf32>
    %c0_9 = arith.constant 0 : index
    %c0_10 = arith.constant 0 : index
    %c0_11 = arith.constant 0 : index
    %12 = vector.load %arg5[%c0_9, %c0_10, %c0_11] : memref<1x1x256xf32, #tpu.memory_space<vmem>>, vector<1x1x256xf32>
    %13 = vector.shape_cast %12 : vector<1x1x256xf32> to vector<1x256xf32>
    %14 = vector.broadcast %13 : vector<1x256xf32> to vector<2x256xf32>
    %15 = arith.mulf %11, %14 : vector<2x256xf32>
    %c0_12 = arith.constant 0 : index
    %c0_13 = arith.constant 0 : index
    %c0_14 = arith.constant 0 : index
    %16 = vector.load %arg6[%c0_12, %c0_13, %c0_14] : memref<1x2x256xf32, #tpu.memory_space<vmem>>, vector<1x2x256xf32>
    %17 = vector.shape_cast %16 : vector<1x2x256xf32> to vector<2x256xf32>
    %18 = arith.addf %15, %17 : vector<2x256xf32>
    %19 = arith.addf %18, %3 : vector<2x256xf32>
    %cst = arith.constant 0.000000e+00 : f32
    %20 = vector.broadcast %cst : f32 to vector<2x256xf32>
    %21 = arith.maximumf %19, %20 : vector<2x256xf32>
    %c0_15 = arith.constant 0 : index
    %c0_16 = arith.constant 0 : index
    %c0_17 = arith.constant 0 : index
    %22 = vector.load %arg7[%c0_15, %c0_16, %c0_17] : memref<1x2x256xf32, #tpu.memory_space<vmem>>, vector<1x2x256xf32>
    %23 = vector.shape_cast %22 : vector<1x2x256xf32> to vector<2x256xf32>
    %24 = vector.shape_cast %21 : vector<2x256xf32> to vector<1x2x256xf32>
    tpu.vector_store %arg7[%c0_15, %c0_16, %c0_17], %24 {strides = array<i32>} : memref<1x2x256xf32, #tpu.memory_space<vmem>>, vector<1x2x256xf32>,
    return
  }
  func.func @transform_0(%arg0: i32) -> (i32, i32) {
    %c0_i32 = arith.constant 0 : i32
    %c0_i32_0 = arith.constant 0 : i32
    %c0_i32_1 = arith.constant 0 : i32
    return %c0_i32, %c0_i32_0 : i32, i32
  }
  func.func @transform_1(%arg0: i32) -> (i32, i32) {
    %c0_i32 = arith.constant 0 : i32
    %c0_i32_0 = arith.constant 0 : i32
    %c0_i32_1 = arith.constant 0 : i32
    return %c0_i32, %c0_i32_0 : i32, i32
  }
  func.func @transform_2(%arg0: i32) -> (i32, i32, i32) {
    %c0_i32 = arith.constant 0 : i32
    %c0_i32_0 = arith.constant 0 : i32
    %c0_i32_1 = arith.constant 0 : i32
    return %arg0, %c0_i32, %c0_i32_0 : i32, i32, i32
  }
  func.func @transform_3(%arg0: i32) -> (i32, i32, i32) {
    %c0_i32 = arith.constant 0 : i32
    %c0_i32_0 = arith.constant 0 : i32
    %c0_i32_1 = arith.constant 0 : i32
    return %arg0, %c0_i32, %c0_i32_0 : i32, i32, i32
  }
  func.func @transform_4(%arg0: i32) -> (i32, i32, i32) {
    %c0_i32 = arith.constant 0 : i32
    %c0_i32_0 = arith.constant 0 : i32
    %c0_i32_1 = arith.constant 0 : i32
    %c0_i32_2 = arith.constant 0 : i32
    return %c0_i32, %c0_i32_0, %c0_i32_1 : i32, i32, i32
  }
  func.func @transform_5(%arg0: i32) -> (i32, i32, i32) {
    %c0_i32 = arith.constant 0 : i32
    %c0_i32_0 = arith.constant 0 : i32
    %c0_i32_1 = arith.constant 0 : i32
    return %arg0, %c0_i32, %c0_i32_0 : i32, i32, i32
  }
  func.func @transform_6(%arg0: i32) -> (i32, i32, i32) {
    %c0_i32 = arith.constant 0 : i32
    %c0_i32_0 = arith.constant 0 : i32
    %c0_i32_1 = arith.constant 0 : i32
    return %arg0, %c0_i32, %c0_i32_0 : i32, i32, i32
  }
}

</mosaic_0001>

<llo_original>
// kernel: sab_forward.3
$region0: #{sab_forward.3}
  #allocation0 [shape = 'u32[]', space=smem, size = 0x4, offset = 0x4, fixed_abs, tag = 'smem constant byte address 0x4 - core index']
  #allocation1 [shape = 'u32[144,128]{1,0:T(1,128)}', space=vmem, size = 0x12000, scoped, tag = 'internal scratch']
  #allocation2 [shape = 'f32[1,1]{1,0:T(1,128)S(6)}', space=smem, size = 0x200, scoped, tag = 'scoped memory for sab_forward.3']
  #allocation3 [shape = 'f32[1,1]{1,0:T(1,128)S(6)}', space=smem, size = 0x200, scoped, tag = 'scoped memory for sab_forward.3']
  %s0 = inlined_call_operand.<no memory space> [shape: f32[1,1], index: 0, kind: input, shape index: {}]
  %s1 = inlined_call_operand.<no memory space> [shape: f32[1,1], index: 1, kind: input, shape index: {}]
  %s2 = inlined_call_operand.vmem [shape: f32[2,2,256], index: 2, kind: input, shape index: {}]
  %s3 = inlined_call_operand.vmem [shape: f32[2,1,256], index: 3, kind: input, shape index: {}]
  %s4 = inlined_call_operand.vmem [shape: f32[1,1,256], index: 4, kind: input, shape index: {}]
  %s5 = inlined_call_operand.vmem [shape: f32[2,2,256], index: 5, kind: input, shape index: {}]
  %s6 = inlined_call_operand.vmem [shape: f32[2,2,256], index: 6, kind: output, shape index: {}]
  %s7 = sld [smem:[#allocation0]]
  $region57: #{sab_forward.3} parent=0
    _
  %s9 = ssub.s32 1, %s7
  %s10 = scalar_select 0, %s9, %s7
  %11 = sst [smem:[#allocation2]] %s0
  %12 = sst [smem:[#allocation3]] %s1
  loop: start=0, step=1, limit=4
  $region2: #{sab_forward.3} parent=0 // loop_pre_header
    _
  $region3: #{sab_forward.3} parent=0 // loop_header
    %s14 = sphi 0, %s18
    %p15 = scmp.ge.s32.totalorder %s14, 4
    %s22 = sphi 0, %s22
    %s24 = sphi 0, %s22
    %s25 = sphi 0, %s24
    %s39 = sphi 0, %s25
    %s43 = sphi 0, %s43
    %s45 = sphi 0, %s43
    %s46 = sphi 0, %s45
    %s60 = sphi 0, %s46
    %s66 = sphi 0, %s68
    %s69 = sphi 0, %s66
    %s70 = sphi 0, %s69
    %s86 = sphi 0, %s70
    %s92 = sphi 0, %s94
    %s95 = sphi 0, %s92
    %s96 = sphi 0, %s95
    %s112 = sphi 0, %s96
    %s116 = sphi 0, %s116
    %s118 = sphi 0, %s116
    %s119 = sphi 0, %s118
    %s133 = sphi 0, %s119
    %s139 = sphi 0, %s141
    %s142 = sphi 0, %s139
    %s143 = sphi 0, %s142
    %s159 = sphi 0, %s143
    %s165 = sphi 0, %s167
    %s168 = sphi 0, %s165
    %s169 = sphi 0, %s168
    %s185 = sphi 0, %s169
  $region4: #{sab_forward.3} parent=0 // loop_header_branch
    %17 = sbr.rel (%p15) target = $region8
  $region5: #{sab_forward.3} parent=0 // loop_body
    %s19 = ssub.s32 %s14, 1
    %s20 = ssub.s32 %s14, 2
    %s21 = sadd.s32 %s14, 1
    %s23 = sadd.s32 %s22, 1
    %p26 = scmp.eq.s32.totalorder %s14, 1
    %p27 = scmp.ne.s32.totalorder %s22, %s24
    %p28 = scmp.eq.s32.totalorder %s14, 0
    %p29 = por %p27, %p28
    %p30 = scmp.ne.s32.totalorder %s22, %s24
    %p31 = scmp.eq.s32.totalorder %s19, 1
    %p32 = por %p30, %p31
    %p33 = scmp.ne.s32.totalorder %s24, %s25
    %p34 = scmp.eq.s32.totalorder %s19, 0
    %p35 = por %p33, %p34
    %p36 = scmp.ne.s32.totalorder %s24, %s25
    %p37 = scmp.eq.s32.totalorder %s20, 1
    %p38 = por %p36, %p37
    %p40 = scmp.ne.s32.totalorder %s25, %s39
    %p41 = scmp.eq.s32.totalorder %s20, 0
    %p42 = por %p40, %p41
    %s44 = sadd.s32 %s43, 1
    %p47 = scmp.eq.s32.totalorder %s14, 1
    %p48 = scmp.ne.s32.totalorder %s43, %s45
    %p49 = scmp.eq.s32.totalorder %s14, 0
    %p50 = por %p48, %p49
    %p51 = scmp.ne.s32.totalorder %s43, %s45
    %p52 = scmp.eq.s32.totalorder %s19, 1
    %p53 = por %p51, %p52
    %p54 = scmp.ne.s32.totalorder %s45, %s46
    %p55 = scmp.eq.s32.totalorder %s19, 0
    %p56 = por %p54, %p55
    %p57 = scmp.ne.s32.totalorder %s45, %s46
    %p58 = scmp.eq.s32.totalorder %s20, 1
    %p59 = por %p57, %p58
    %p61 = scmp.ne.s32.totalorder %s46, %s60
    %p62 = scmp.eq.s32.totalorder %s20, 0
    %p63 = por %p61, %p62
    %s64 = ssub.s32 %s14, %s21
    %p65 = scmp.eq.s32.totalorder %s64, 0
    %s67 = sadd.s32 %s66, 1
    %s68 = scalar_select %p65, %s66, %s67
    %p71 = pneg %p65
    %p72 = scmp.eq.s32.totalorder %s14, 1
    %p73 = por %p71, %p72
    %p74 = scmp.ne.s32.totalorder %s66, %s69
    %p75 = scmp.eq.s32.totalorder %s14, 0
    %p76 = por %p74, %p75
    %p77 = scmp.ne.s32.totalorder %s66, %s69
    %p78 = scmp.eq.s32.totalorder %s19, 1
    %p79 = por %p77, %p78
    %p80 = scmp.ne.s32.totalorder %s69, %s70
    %p81 = scmp.eq.s32.totalorder %s19, 0
    %p82 = por %p80, %p81
    %p83 = scmp.ne.s32.totalorder %s69, %s70
    %p84 = scmp.eq.s32.totalorder %s20, 1
    %p85 = por %p83, %p84
    %p87 = scmp.ne.s32.totalorder %s70, %s86
    %p88 = scmp.eq.s32.totalorder %s20, 0
    %p89 = por %p87, %p88
    %s90 = ssub.s32 %s14, %s21
    %p91 = scmp.eq.s32.totalorder %s90, 0
    %s93 = sadd.s32 %s92, 1
    %s94 = scalar_select %p91, %s92, %s93
    %p97 = pneg %p91
    %p98 = scmp.eq.s32.totalorder %s14, 1
    %p99 = por %p97, %p98
    %p100 = scmp.ne.s32.totalorder %s92, %s95
    %p101 = scmp.eq.s32.totalorder %s14, 0
    %p102 = por %p100, %p101
    %p103 = scmp.ne.s32.totalorder %s92, %s95
    %p104 = scmp.eq.s32.totalorder %s19, 1
    %p105 = por %p103, %p104
    %p106 = scmp.ne.s32.totalorder %s95, %s96
    %p107 = scmp.eq.s32.totalorder %s19, 0
    %p108 = por %p106, %p107
    %p109 = scmp.ne.s32.totalorder %s95, %s96
    %p110 = scmp.eq.s32.totalorder %s20, 1
    %p111 = por %p109, %p110
    %p113 = scmp.ne.s32.totalorder %s96, %s112
    %p114 = scmp.eq.s32.totalorder %s20, 0
    %p115 = por %p113, %p114
    %s117 = sadd.s32 %s116, 1
    %p120 = scmp.eq.s32.totalorder %s14, 1
    %p121 = scmp.ne.s32.totalorder %s116, %s118
    %p122 = scmp.eq.s32.totalorder %s14, 0
    %p123 = por %p121, %p122
    %p124 = scmp.ne.s32.totalorder %s116, %s118
    %p125 = scmp.eq.s32.totalorder %s19, 1
    %p126 = por %p124, %p125
    %p127 = scmp.ne.s32.totalorder %s118, %s119
    %p128 = scmp.eq.s32.totalorder %s19, 0
    %p129 = por %p127, %p128
    %p130 = scmp.ne.s32.totalorder %s118, %s119
    %p131 = scmp.eq.s32.totalorder %s20, 1
    %p132 = por %p130, %p131
    %p134 = scmp.ne.s32.totalorder %s119, %s133
    %p135 = scmp.eq.s32.totalorder %s20, 0
    %p136 = por %p134, %p135
    %s137 = ssub.s32 %s14, %s21
    %p138 = scmp.eq.s32.totalorder %s137, 0
    %s140 = sadd.s32 %s139, 1
    %s141 = scalar_select %p138, %s139, %s140
    %p144 = pneg %p138
    %p145 = scmp.eq.s32.totalorder %s14, 1
    %p146 = por %p144, %p145
    %p147 = scmp.ne.s32.totalorder %s139, %s142
    %p148 = scmp.eq.s32.totalorder %s14, 0
    %p149 = por %p147, %p148
    %p150 = scmp.ne.s32.totalorder %s139, %s142
    %p151 = scmp.eq.s32.totalorder %s19, 1
    %p152 = por %p150, %p151
    %p153 = scmp.ne.s32.totalorder %s142, %s143
    %p154 = scmp.eq.s32.totalorder %s19, 0
    %p155 = por %p153, %p154
    %p156 = scmp.ne.s32.totalorder %s142, %s143
    %p157 = scmp.eq.s32.totalorder %s20, 1
    %p158 = por %p156, %p157
    %p160 = scmp.ne.s32.totalorder %s143, %s159
    %p161 = scmp.eq.s32.totalorder %s20, 0
    %p162 = por %p160, %p161
    %s163 = ssub.s32 %s14, %s21
    %p164 = scmp.eq.s32.totalorder %s163, 0
    %s166 = sadd.s32 %s165, 1
    %s167 = scalar_select %p164, %s165, %s166
    %p170 = pneg %p164
    %p171 = scmp.eq.s32.totalorder %s14, 1
    %p172 = por %p170, %p171
    %p173 = scmp.ne.s32.totalorder %s165, %s168
    %p174 = scmp.eq.s32.totalorder %s14, 0
    %p175 = por %p173, %p174
    %p176 = scmp.ne.s32.totalorder %s165, %s168
    %p177 = scmp.eq.s32.totalorder %s19, 1
    %p178 = por %p176, %p177
    %p179 = scmp.ne.s32.totalorder %s168, %s169
    %p180 = scmp.eq.s32.totalorder %s19, 0
    %p181 = por %p179, %p180
    %p182 = scmp.ne.s32.totalorder %s168, %s169
    %p183 = scmp.eq.s32.totalorder %s20, 1
    %p184 = por %p182, %p183
    %p186 = scmp.ne.s32.totalorder %s169, %s185
    %p187 = scmp.eq.s32.totalorder %s20, 0
    %p188 = por %p186, %p187
    %p189 = scmp.le.s32.totalorder 1, %s14
    %p190 = scmp.lt.s32.totalorder %s14, 3
    %p191 = pnand %p189, %p190
    %p192 = pneg %p191
    // Predicated region
    $region9: #{sab_forward.3} parent=5 // pred_check
      _
    $region10: #{sab_forward.3} parent=5 // pred_check_branch
      %194 = sbr.rel (%p191) target = $region12
    $region11: #{sab_forward.3} parent=5 // pred_region
      %s195 = ssub.s32 %s14, 1
      // Predicated region
      $region13: #{sab_forward.3} parent=11 // pred_check
        %p196 = pneg %p35
      $region14: #{sab_forward.3} parent=11 // pred_check_branch
        %198 = sbr.rel (%p196) target = $region16
      $region15: #{sab_forward.3} parent=11 // pred_region
        _
      $region16: #{sab_forward.3} parent=11 // pred_fallthru
        _
      // Predicated region
      $region17: #{sab_forward.3} parent=11 // pred_check
        %p199 = pneg %p56
      $region18: #{sab_forward.3} parent=11 // pred_check_branch
        %201 = sbr.rel (%p199) target = $region20
      $region19: #{sab_forward.3} parent=11 // pred_region
        _
      $region20: #{sab_forward.3} parent=11 // pred_fallthru
        _
      // Predicated region
      $region21: #{sab_forward.3} parent=11 // pred_check
        %p202 = pneg %p129
      $region22: #{sab_forward.3} parent=11 // pred_check_branch
        %204 = sbr.rel (%p202) target = $region24
      $region23: #{sab_forward.3} parent=11 // pred_region
        _
      $region24: #{sab_forward.3} parent=11 // pred_fallthru
        _
    $region12: #{sab_forward.3} parent=5 // pred_fallthru
      _
    %p205 = scmp.lt.s32.totalorder %s14, 2
    // Predicated region
    $region25: #{sab_forward.3} parent=5 // pred_check
      %p206 = pneg %p205
    $region26: #{sab_forward.3} parent=5 // pred_check_branch
      %208 = sbr.rel (%p206) target = $region28
    $region27: #{sab_forward.3} parent=5 // pred_region
      // Predicated region
      $region29: #{sab_forward.3} parent=27 // pred_check
        %p209 = pneg %p76
      $region30: #{sab_forward.3} parent=27 // pred_check_branch
        %211 = sbr.rel (%p209) target = $region32
      $region31: #{sab_forward.3} parent=27 // pred_region
        %p212 = scmp.lt.s32.totalorder %s14, 1
        %s213 = scalar_select %p212, %s14, 1
        %s214 = smul.addr %s213, 2
        %s215 = smul.addr %s214, 2
        %s216 = scalar_lea.vmem %s2, %s215
      $region32: #{sab_forward.3} parent=27 // pred_fallthru
        _
      // Predicated region
      $region33: #{sab_forward.3} parent=27 // pred_check
        %p217 = pneg %p102
      $region34: #{sab_forward.3} parent=27 // pred_check_branch
        %219 = sbr.rel (%p217) target = $region36
      $region35: #{sab_forward.3} parent=27 // pred_region
        %p220 = scmp.lt.s32.totalorder %s14, 1
        %s221 = scalar_select %p220, %s14, 1
        %s222 = smul.addr %s221, 2
        %s223 = scalar_lea.vmem %s3, %s222
      $region36: #{sab_forward.3} parent=27 // pred_fallthru
        _
      // Predicated region
      $region37: #{sab_forward.3} parent=27 // pred_check
        %p224 = pneg %p149
      $region38: #{sab_forward.3} parent=27 // pred_check_branch
        %226 = sbr.rel (%p224) target = $region40
      $region39: #{sab_forward.3} parent=27 // pred_region
        %p227 = scmp.lt.s32.totalorder %s14, 1
        %s228 = scalar_select %p227, %s14, 1
        %s229 = smul.addr %s228, 2
        %s230 = smul.addr %s229, 2
        %s231 = scalar_lea.vmem %s5, %s230
      $region40: #{sab_forward.3} parent=27 // pred_fallthru
        _
    $region28: #{sab_forward.3} parent=5 // pred_fallthru
      _
    %p232 = scmp.le.s32.totalorder 1, %s14
    %p233 = scmp.lt.s32.totalorder %s14, 3
    %p234 = pnand %p232, %p233
    %p235 = pneg %p234
    // Predicated region
    $region41: #{sab_forward.3} parent=5 // pred_check
      _
    $region42: #{sab_forward.3} parent=5 // pred_check_branch
      %237 = sbr.rel (%p234) target = $region44
    $region43: #{sab_forward.3} parent=5 // pred_region
      %s238 = ssub.s32 %s14, 1
      %p239 = pneg %p35
      %p240 = pneg %p32
      %p241 = pneg %p56
      %p242 = pneg %p53
      %p243 = scmp.lt.s32.totalorder %s19, 1
      %s244 = scalar_select %p243, %s19, 1
      %s245 = smul.addr %s244, 2
      %s246 = smul.addr %s245, 2
      %s247 = scalar_lea.vmem %s2, %s246
      %p248 = pneg %p82
      %p249 = pneg %p79
      %p250 = scmp.lt.s32.totalorder %s19, 1
      %s251 = scalar_select %p250, %s19, 1
      %s252 = smul.addr %s251, 2
      %s253 = scalar_lea.vmem %s3, %s252
      %p254 = pneg %p108
      %p255 = pneg %p105
      %p256 = pneg %p129
      %p257 = pneg %p126
      %p258 = scmp.lt.s32.totalorder %s19, 1
      %s259 = scalar_select %p258, %s19, 1
      %s260 = smul.addr %s259, 2
      %s261 = smul.addr %s260, 2
      %s262 = scalar_lea.vmem %s5, %s261
      %p263 = pneg %p155
      %p264 = pneg %p152
      %p265 = pneg %p181
      %p266 = pneg %p178
      %p267 = scmp.lt.s32.totalorder %s19, 1
      %s268 = scalar_select %p267, %s19, 1
      %s269 = smul.addr %s268, 2
      %s270 = smul.addr %s269, 2
      %s271 = scalar_lea.vmem %s6, %s270
      %p272 = scmp.lt.s32.totalorder %s19, 1
      %s273 = scalar_select %p272, %s19, 1
      %s274 = smul.addr %s273, 2
      %s275 = smul.addr %s274, 2
      %s276 = scalar_lea.vmem %s2, %s275
      %p277 = scmp.lt.s32.totalorder %s19, 1
      %s278 = scalar_select %p277, %s19, 1
      %s279 = smul.addr %s278, 2
      %s280 = scalar_lea.vmem %s3, %s279
      %p281 = scmp.lt.s32.totalorder %s19, 1
      %s282 = scalar_select %p281, %s19, 1
      %s283 = smul.addr %s282, 2
      %s284 = smul.addr %s283, 2
      %s285 = scalar_lea.vmem %s5, %s284
      %p286 = scmp.lt.s32.totalorder %s19, 1
      %s287 = scalar_select %p286, %s19, 1
      %s288 = smul.addr %s287, 2
      %s289 = smul.addr %s288, 2
      %s290 = scalar_lea.vmem %s6, %s289
      %s291 = sld [smem:[#allocation2]]
      %s292 = sld [smem:[#allocation3]]
      %v293 = vld [vmem:[%s276] sm:$0xf]
      %v294 = vld [vmem:[%s280] sm:$0x3]
      %v296 = vlaneseq
      %v297 = vshrl.u32 %v296, 7
      %v298 = vsub.s32 0, %v297
      %v299 = vrot.slane %v294, %v298
      %v300 = vlaneseq
      %v301 = vshrl.u32 %v300, 7
      %v302 = vsub.s32 1, %v301
      %v303 = vrot.slane %v294, %v302
      %v304 = vcombine.low %v299, %v303
      %v306 = vunpack.c.l.s4 1983009808
      %v307 = vunpack.c.0.s8 %v306
      %v308 = vlaneseq
      %v309 = vshrl.u32 %v308, 7
      %v310 = vsub.s32 %v307, %v309
      %v311 = vrot.slane %v304, %v310
      %v313 = vmul.f32 %v293, %v311
      %v314 = vstv %s291
      %v315 = vsub.f32 %v313, %v314
      %v316 = vstv %s292
      %v317 = vmul.f32 %v315, %v316
      %v318 = vld [vmem:[%s4] sm:$0x3]
      %v320 = vlaneseq
      %v321 = vshrl.u32 %v320, 7
      %v322 = vsub.s32 0, %v321
      %v323 = vrot.slane %v318, %v322
      %v324 = vlaneseq
      %v325 = vshrl.u32 %v324, 7
      %v326 = vsub.s32 1, %v325
      %v327 = vrot.slane %v318, %v326
      %v328 = vcombine.low %v323, %v327
      %v330 = vunpack.c.l.s4 1983009808
      %v331 = vunpack.c.0.s8 %v330
      %v332 = vlaneseq
      %v333 = vshrl.u32 %v332, 7
      %v334 = vsub.s32 %v331, %v333
      %v335 = vrot.slane %v328, %v334
      %v337 = vmul.f32 %v317, %v335
      %v338 = vld [vmem:[%s285] sm:$0xf]
      %v339 = vadd.f32 %v337, %v338
      %v340 = vadd.f32 %v339, %v293
      %v341 = vmax.f32 %v340, 0.0
      %342 = vst [vmem:[%s290] sm:$0xf] %v341
      %p343 = scmp.lt.s32.totalorder %s19, 1
      %s344 = scalar_select %p343, %s19, 1
      %s345 = smul.addr %s344, 2
      %s346 = smul.addr %s345, 2
      %s347 = scalar_lea.vmem %s6, %s346
      // Predicated region
      $region45: #{sab_forward.3} parent=43 // pred_check
        %p348 = pneg %p178
      $region46: #{sab_forward.3} parent=43 // pred_check_branch
        %350 = sbr.rel (%p348) target = $region48
      $region47: #{sab_forward.3} parent=43 // pred_region
        _
      $region48: #{sab_forward.3} parent=43 // pred_fallthru
        _
    $region44: #{sab_forward.3} parent=5 // pred_fallthru
      _
    %p351 = scmp.le.s32.totalorder 2, %s14
    // Predicated region
    $region49: #{sab_forward.3} parent=5 // pred_check
      %p352 = pneg %p351
    $region50: #{sab_forward.3} parent=5 // pred_check_branch
      %354 = sbr.rel (%p352) target = $region52
    $region51: #{sab_forward.3} parent=5 // pred_region
      %s355 = ssub.s32 %s14, 2
      // Predicated region
      $region53: #{sab_forward.3} parent=51 // pred_check
        %p356 = pneg %p184
      $region54: #{sab_forward.3} parent=51 // pred_check_branch
        %358 = sbr.rel (%p356) target = $region56
      $region55: #{sab_forward.3} parent=51 // pred_region
        %p359 = scmp.lt.s32.totalorder %s20, 1
        %s360 = scalar_select %p359, %s20, 1
        %s361 = smul.addr %s360, 2
        %s362 = smul.addr %s361, 2
        %s363 = scalar_lea.vmem %s6, %s362
      $region56: #{sab_forward.3} parent=51 // pred_fallthru
        _
    $region52: #{sab_forward.3} parent=5 // pred_fallthru
      _
  $region6: #{sab_forward.3} parent=0 // loop_footer
    %s18 = sadd.s32 1, %s14
  $region7: #{sab_forward.3} parent=0 // loop_footer_branch
    %13 = sbr.rel target = $region3
  $region8: #{sab_forward.3} parent=0 // loop_exit
    _

// kernel: sab_forward.2
$region0: #{sab_forward.2}
  #allocation0 [shape = 'u32[]', space=smem, size = 0x4, offset = 0x4, fixed_abs, tag = 'smem constant byte address 0x4 - core index']
  #allocation1 [shape = 'u32[144,128]{1,0:T(1,128)}', space=vmem, size = 0x12000, scoped, tag = 'internal scratch']
  #allocation2 [shape = 'f32[4,384]{1,0:T(4,128)}', space=vmem, size = 0x1800, scoped, tag = 'scratch operand']
  #allocation3 [shape = 'f32[1,1]{1,0:T(1,128)S(1)}', space=vmem, size = 0x200, scoped, tag = 'scoped memory for sab_forward.2']
  %s0 = inlined_call_operand.vmem [shape: f32[2,32,384], index: 0, kind: input, shape index: {}]
  %s1 = inlined_call_operand.vmem [shape: f32[2,32,384], index: 1, kind: input, shape index: {}]
  %s2 = inlined_call_operand.vmem [shape: f32[1,1,384], index: 2, kind: input, shape index: {}]
  %s3 = inlined_call_operand.vmem [shape: f32[2,32], index: 3, kind: input, shape index: {}]
  %s4 = inlined_call_operand.vmem [shape: f32[2,1], index: 4, kind: input, shape index: {}]
  %s5 = inlined_call_operand.vmem [shape: f32[2,32], index: 5, kind: input, shape index: {}]
  %s6 = inlined_call_operand.vmem [shape: f32[2,1], index: 6, kind: input, shape index: {}]
  %s7 = inlined_call_operand.vmem [shape: f32[1,2], index: 7, kind: input, shape index: {}]
  %s8 = inlined_call_operand.<no memory space> [shape: f32[1,1], index: 8, kind: input, shape index: {}]
  %s9 = inlined_call_operand.vmem [shape: f32[9,2,4], index: 9, kind: input, shape index: {}]
  %s10 = inlined_call_operand.vmem [shape: f32[2,1], index: 10, kind: input, shape index: {}]
  %s11 = inlined_call_operand.vmem [shape: f32[2,2,384], index: 11, kind: output, shape index: {0}]
  %s12 = inlined_call_operand.vmem [shape: f32[2,1,384], index: 12, kind: output, shape index: {1}]
  %s13 = inlined_call_operand.vmem [shape: f32[2,1,1], index: 13, kind: output, shape index: {2}]
  %s14 = inlined_call_operand.vmem [shape: f32[2,1,1], index: 14, kind: output, shape index: {3}]
  %15 = xla_tuple %s11, %s12, %s13, %s14
  %s16 = sld [smem:[#allocation0]]
  $region101: #{sab_forward.2} parent=0
    _
  %s18 = ssub.s32 1, %s16
  %s19 = scalar_select 0, %s18, %s16
  %v20 = vstv %s8
  %21 = vst [vmem:[#allocation3] sm:$0x1] %v20
  loop: start=0, step=1, limit=4
  $region2: #{sab_forward.2} parent=0 // loop_pre_header
    _
  $region3: #{sab_forward.2} parent=0 // loop_header
    %s23 = sphi 0, %s27
    %p24 = scmp.ge.s32.totalorder %s23, 4
    %s33 = sphi 0, %s35
    %s36 = sphi 0, %s33
    %s37 = sphi 0, %s36
    %s53 = sphi 0, %s37
    %s59 = sphi 0, %s61
    %s62 = sphi 0, %s59
    %s63 = sphi 0, %s62
    %s79 = sphi 0, %s63
    %s83 = sphi 0, %s83
    %s85 = sphi 0, %s83
    %s86 = sphi 0, %s85
    %s100 = sphi 0, %s86
    %s104 = sphi 0, %s104
    %s106 = sphi 0, %s104
    %s107 = sphi 0, %s106
    %s121 = sphi 0, %s107
    %s125 = sphi 0, %s125
    %s127 = sphi 0, %s125
    %s128 = sphi 0, %s127
    %s142 = sphi 0, %s128
    %s146 = sphi 0, %s146
    %s148 = sphi 0, %s146
    %s149 = sphi 0, %s148
    %s163 = sphi 0, %s149
    %s167 = sphi 0, %s167
    %s169 = sphi 0, %s167
    %s170 = sphi 0, %s169
    %s184 = sphi 0, %s170
    %s188 = sphi 0, %s188
    %s190 = sphi 0, %s188
    %s191 = sphi 0, %s190
    %s205 = sphi 0, %s191
    %s209 = sphi 0, %s209
    %s211 = sphi 0, %s209
    %s212 = sphi 0, %s211
    %s226 = sphi 0, %s212
    %s230 = sphi 0, %s230
    %s232 = sphi 0, %s230
    %s233 = sphi 0, %s232
    %s247 = sphi 0, %s233
    %s251 = sphi 0, %s251
    %s253 = sphi 0, %s251
    %s254 = sphi 0, %s253
    %s268 = sphi 0, %s254
    %s274 = sphi 0, %s276
    %s277 = sphi 0, %s274
    %s278 = sphi 0, %s277
    %s294 = sphi 0, %s278
    %s300 = sphi 0, %s302
    %s303 = sphi 0, %s300
    %s304 = sphi 0, %s303
    %s320 = sphi 0, %s304
    %s326 = sphi 0, %s328
    %s329 = sphi 0, %s326
    %s330 = sphi 0, %s329
    %s346 = sphi 0, %s330
    %s352 = sphi 0, %s354
    %s355 = sphi 0, %s352
    %s356 = sphi 0, %s355
    %s372 = sphi 0, %s356
  $region4: #{sab_forward.2} parent=0 // loop_header_branch
    %26 = sbr.rel (%p24) target = $region8
  $region5: #{sab_forward.2} parent=0 // loop_body
    %s28 = ssub.s32 %s23, 1
    %s29 = ssub.s32 %s23, 2
    %s30 = sadd.s32 %s23, 1
    %s31 = ssub.s32 %s23, %s30
    %p32 = scmp.eq.s32.totalorder %s31, 0
    %s34 = sadd.s32 %s33, 1
    %s35 = scalar_select %p32, %s33, %s34
    %p38 = pneg %p32
    %p39 = scmp.eq.s32.totalorder %s23, 1
    %p40 = por %p38, %p39
    %p41 = scmp.ne.s32.totalorder %s33, %s36
    %p42 = scmp.eq.s32.totalorder %s23, 0
    %p43 = por %p41, %p42
    %p44 = scmp.ne.s32.totalorder %s33, %s36
    %p45 = scmp.eq.s32.totalorder %s28, 1
    %p46 = por %p44, %p45
    %p47 = scmp.ne.s32.totalorder %s36, %s37
    %p48 = scmp.eq.s32.totalorder %s28, 0
    %p49 = por %p47, %p48
    %p50 = scmp.ne.s32.totalorder %s36, %s37
    %p51 = scmp.eq.s32.totalorder %s29, 1
    %p52 = por %p50, %p51
    %p54 = scmp.ne.s32.totalorder %s37, %s53
    %p55 = scmp.eq.s32.totalorder %s29, 0
    %p56 = por %p54, %p55
    %s57 = ssub.s32 %s23, %s30
    %p58 = scmp.eq.s32.totalorder %s57, 0
    %s60 = sadd.s32 %s59, 1
    %s61 = scalar_select %p58, %s59, %s60
    %p64 = pneg %p58
    %p65 = scmp.eq.s32.totalorder %s23, 1
    %p66 = por %p64, %p65
    %p67 = scmp.ne.s32.totalorder %s59, %s62
    %p68 = scmp.eq.s32.totalorder %s23, 0
    %p69 = por %p67, %p68
    %p70 = scmp.ne.s32.totalorder %s59, %s62
    %p71 = scmp.eq.s32.totalorder %s28, 1
    %p72 = por %p70, %p71
    %p73 = scmp.ne.s32.totalorder %s62, %s63
    %p74 = scmp.eq.s32.totalorder %s28, 0
    %p75 = por %p73, %p74
    %p76 = scmp.ne.s32.totalorder %s62, %s63
    %p77 = scmp.eq.s32.totalorder %s29, 1
    %p78 = por %p76, %p77
    %p80 = scmp.ne.s32.totalorder %s63, %s79
    %p81 = scmp.eq.s32.totalorder %s29, 0
    %p82 = por %p80, %p81
    %s84 = sadd.s32 %s83, 1
    %p87 = scmp.eq.s32.totalorder %s23, 1
    %p88 = scmp.ne.s32.totalorder %s83, %s85
    %p89 = scmp.eq.s32.totalorder %s23, 0
    %p90 = por %p88, %p89
    %p91 = scmp.ne.s32.totalorder %s83, %s85
    %p92 = scmp.eq.s32.totalorder %s28, 1
    %p93 = por %p91, %p92
    %p94 = scmp.ne.s32.totalorder %s85, %s86
    %p95 = scmp.eq.s32.totalorder %s28, 0
    %p96 = por %p94, %p95
    %p97 = scmp.ne.s32.totalorder %s85, %s86
    %p98 = scmp.eq.s32.totalorder %s29, 1
    %p99 = por %p97, %p98
    %p101 = scmp.ne.s32.totalorder %s86, %s100
    %p102 = scmp.eq.s32.totalorder %s29, 0
    %p103 = por %p101, %p102
    %s105 = sadd.s32 %s104, 1
    %p108 = scmp.eq.s32.totalorder %s23, 1
    %p109 = scmp.ne.s32.totalorder %s104, %s106
    %p110 = scmp.eq.s32.totalorder %s23, 0
    %p111 = por %p109, %p110
    %p112 = scmp.ne.s32.totalorder %s104, %s106
    %p113 = scmp.eq.s32.totalorder %s28, 1
    %p114 = por %p112, %p113
    %p115 = scmp.ne.s32.totalorder %s106, %s107
    %p116 = scmp.eq.s32.totalorder %s28, 0
    %p117 = por %p115, %p116
    %p118 = scmp.ne.s32.totalorder %s106, %s107
    %p119 = scmp.eq.s32.totalorder %s29, 1
    %p120 = por %p118, %p119
    %p122 = scmp.ne.s32.totalorder %s107, %s121
    %p123 = scmp.eq.s32.totalorder %s29, 0
    %p124 = por %p122, %p123
    %s126 = sadd.s32 %s125, 1
    %p129 = scmp.eq.s32.totalorder %s23, 1
    %p130 = scmp.ne.s32.totalorder %s125, %s127
    %p131 = scmp.eq.s32.totalorder %s23, 0
    %p132 = por %p130, %p131
    %p133 = scmp.ne.s32.totalorder %s125, %s127
    %p134 = scmp.eq.s32.totalorder %s28, 1
    %p135 = por %p133, %p134
    %p136 = scmp.ne.s32.totalorder %s127, %s128
    %p137 = scmp.eq.s32.totalorder %s28, 0
    %p138 = por %p136, %p137
    %p139 = scmp.ne.s32.totalorder %s127, %s128
    %p140 = scmp.eq.s32.totalorder %s29, 1
    %p141 = por %p139, %p140
    %p143 = scmp.ne.s32.totalorder %s128, %s142
    %p144 = scmp.eq.s32.totalorder %s29, 0
    %p145 = por %p143, %p144
    %s147 = sadd.s32 %s146, 1
    %p150 = scmp.eq.s32.totalorder %s23, 1
    %p151 = scmp.ne.s32.totalorder %s146, %s148
    %p152 = scmp.eq.s32.totalorder %s23, 0
    %p153 = por %p151, %p152
    %p154 = scmp.ne.s32.totalorder %s146, %s148
    %p155 = scmp.eq.s32.totalorder %s28, 1
    %p156 = por %p154, %p155
    %p157 = scmp.ne.s32.totalorder %s148, %s149
    %p158 = scmp.eq.s32.totalorder %s28, 0
    %p159 = por %p157, %p158
    %p160 = scmp.ne.s32.totalorder %s148, %s149
    %p161 = scmp.eq.s32.totalorder %s29, 1
    %p162 = por %p160, %p161
    %p164 = scmp.ne.s32.totalorder %s149, %s163
    %p165 = scmp.eq.s32.totalorder %s29, 0
    %p166 = por %p164, %p165
    %s168 = sadd.s32 %s167, 1
    %p171 = scmp.eq.s32.totalorder %s23, 1
    %p172 = scmp.ne.s32.totalorder %s167, %s169
    %p173 = scmp.eq.s32.totalorder %s23, 0
    %p174 = por %p172, %p173
    %p175 = scmp.ne.s32.totalorder %s167, %s169
    %p176 = scmp.eq.s32.totalorder %s28, 1
    %p177 = por %p175, %p176
    %p178 = scmp.ne.s32.totalorder %s169, %s170
    %p179 = scmp.eq.s32.totalorder %s28, 0
    %p180 = por %p178, %p179
    %p181 = scmp.ne.s32.totalorder %s169, %s170
    %p182 = scmp.eq.s32.totalorder %s29, 1
    %p183 = por %p181, %p182
    %p185 = scmp.ne.s32.totalorder %s170, %s184
    %p186 = scmp.eq.s32.totalorder %s29, 0
    %p187 = por %p185, %p186
    %s189 = sadd.s32 %s188, 1
    %p192 = scmp.eq.s32.totalorder %s23, 1
    %p193 = scmp.ne.s32.totalorder %s188, %s190
    %p194 = scmp.eq.s32.totalorder %s23, 0
    %p195 = por %p193, %p194
    %p196 = scmp.ne.s32.totalorder %s188, %s190
    %p197 = scmp.eq.s32.totalorder %s28, 1
    %p198 = por %p196, %p197
    %p199 = scmp.ne.s32.totalorder %s190, %s191
    %p200 = scmp.eq.s32.totalorder %s28, 0
    %p201 = por %p199, %p200
    %p202 = scmp.ne.s32.totalorder %s190, %s191
    %p203 = scmp.eq.s32.totalorder %s29, 1
    %p204 = por %p202, %p203
    %p206 = scmp.ne.s32.totalorder %s191, %s205
    %p207 = scmp.eq.s32.totalorder %s29, 0
    %p208 = por %p206, %p207
    %s210 = sadd.s32 %s209, 1
    %p213 = scmp.eq.s32.totalorder %s23, 1
    %p214 = scmp.ne.s32.totalorder %s209, %s211
    %p215 = scmp.eq.s32.totalorder %s23, 0
    %p216 = por %p214, %p215
    %p217 = scmp.ne.s32.totalorder %s209, %s211
    %p218 = scmp.eq.s32.totalorder %s28, 1
    %p219 = por %p217, %p218
    %p220 = scmp.ne.s32.totalorder %s211, %s212
    %p221 = scmp.eq.s32.totalorder %s28, 0
    %p222 = por %p220, %p221
    %p223 = scmp.ne.s32.totalorder %s211, %s212
    %p224 = scmp.eq.s32.totalorder %s29, 1
    %p225 = por %p223, %p224
    %p227 = scmp.ne.s32.totalorder %s212, %s226
    %p228 = scmp.eq.s32.totalorder %s29, 0
    %p229 = por %p227, %p228
    %s231 = sadd.s32 %s230, 1
    %p234 = scmp.eq.s32.totalorder %s23, 1
    %p235 = scmp.ne.s32.totalorder %s230, %s232
    %p236 = scmp.eq.s32.totalorder %s23, 0
    %p237 = por %p235, %p236
    %p238 = scmp.ne.s32.totalorder %s230, %s232
    %p239 = scmp.eq.s32.totalorder %s28, 1
    %p240 = por %p238, %p239
    %p241 = scmp.ne.s32.totalorder %s232, %s233
    %p242 = scmp.eq.s32.totalorder %s28, 0
    %p243 = por %p241, %p242
    %p244 = scmp.ne.s32.totalorder %s232, %s233
    %p245 = scmp.eq.s32.totalorder %s29, 1
    %p246 = por %p244, %p245
    %p248 = scmp.ne.s32.totalorder %s233, %s247
    %p249 = scmp.eq.s32.totalorder %s29, 0
    %p250 = por %p248, %p249
    %s252 = sadd.s32 %s251, 1
    %p255 = scmp.eq.s32.totalorder %s23, 1
    %p256 = scmp.ne.s32.totalorder %s251, %s253
    %p257 = scmp.eq.s32.totalorder %s23, 0
    %p258 = por %p256, %p257
    %p259 = scmp.ne.s32.totalorder %s251, %s253
    %p260 = scmp.eq.s32.totalorder %s28, 1
    %p261 = por %p259, %p260
    %p262 = scmp.ne.s32.totalorder %s253, %s254
    %p263 = scmp.eq.s32.totalorder %s28, 0
    %p264 = por %p262, %p263
    %p265 = scmp.ne.s32.totalorder %s253, %s254
    %p266 = scmp.eq.s32.totalorder %s29, 1
    %p267 = por %p265, %p266
    %p269 = scmp.ne.s32.totalorder %s254, %s268
    %p270 = scmp.eq.s32.totalorder %s29, 0
    %p271 = por %p269, %p270
    %s272 = ssub.s32 %s23, %s30
    %p273 = scmp.eq.s32.totalorder %s272, 0
    %s275 = sadd.s32 %s274, 1
    %s276 = scalar_select %p273, %s274, %s275
    %p279 = pneg %p273
    %p280 = scmp.eq.s32.totalorder %s23, 1
    %p281 = por %p279, %p280
    %p282 = scmp.ne.s32.totalorder %s274, %s277
    %p283 = scmp.eq.s32.totalorder %s23, 0
    %p284 = por %p282, %p283
    %p285 = scmp.ne.s32.totalorder %s274, %s277
    %p286 = scmp.eq.s32.totalorder %s28, 1
    %p287 = por %p285, %p286
    %p288 = scmp.ne.s32.totalorder %s277, %s278
    %p289 = scmp.eq.s32.totalorder %s28, 0
    %p290 = por %p288, %p289
    %p291 = scmp.ne.s32.totalorder %s277, %s278
    %p292 = scmp.eq.s32.totalorder %s29, 1
    %p293 = por %p291, %p292
    %p295 = scmp.ne.s32.totalorder %s278, %s294
    %p296 = scmp.eq.s32.totalorder %s29, 0
    %p297 = por %p295, %p296
    %s298 = ssub.s32 %s23, %s30
    %p299 = scmp.eq.s32.totalorder %s298, 0
    %s301 = sadd.s32 %s300, 1
    %s302 = scalar_select %p299, %s300, %s301
    %p305 = pneg %p299
    %p306 = scmp.eq.s32.totalorder %s23, 1
    %p307 = por %p305, %p306
    %p308 = scmp.ne.s32.totalorder %s300, %s303
    %p309 = scmp.eq.s32.totalorder %s23, 0
    %p310 = por %p308, %p309
    %p311 = scmp.ne.s32.totalorder %s300, %s303
    %p312 = scmp.eq.s32.totalorder %s28, 1
    %p313 = por %p311, %p312
    %p314 = scmp.ne.s32.totalorder %s303, %s304
    %p315 = scmp.eq.s32.totalorder %s28, 0
    %p316 = por %p314, %p315
    %p317 = scmp.ne.s32.totalorder %s303, %s304
    %p318 = scmp.eq.s32.totalorder %s29, 1
    %p319 = por %p317, %p318
    %p321 = scmp.ne.s32.totalorder %s304, %s320
    %p322 = scmp.eq.s32.totalorder %s29, 0
    %p323 = por %p321, %p322
    %s324 = ssub.s32 %s23, %s30
    %p325 = scmp.eq.s32.totalorder %s324, 0
    %s327 = sadd.s32 %s326, 1
    %s328 = scalar_select %p325, %s326, %s327
    %p331 = pneg %p325
    %p332 = scmp.eq.s32.totalorder %s23, 1
    %p333 = por %p331, %p332
    %p334 = scmp.ne.s32.totalorder %s326, %s329
    %p335 = scmp.eq.s32.totalorder %s23, 0
    %p336 = por %p334, %p335
    %p337 = scmp.ne.s32.totalorder %s326, %s329
    %p338 = scmp.eq.s32.totalorder %s28, 1
    %p339 = por %p337, %p338
    %p340 = scmp.ne.s32.totalorder %s329, %s330
    %p341 = scmp.eq.s32.totalorder %s28, 0
    %p342 = por %p340, %p341
    %p343 = scmp.ne.s32.totalorder %s329, %s330
    %p344 = scmp.eq.s32.totalorder %s29, 1
    %p345 = por %p343, %p344
    %p347 = scmp.ne.s32.totalorder %s330, %s346
    %p348 = scmp.eq.s32.totalorder %s29, 0
    %p349 = por %p347, %p348
    %s350 = ssub.s32 %s23, %s30
    %p351 = scmp.eq.s32.totalorder %s350, 0
    %s353 = sadd.s32 %s352, 1
    %s354 = scalar_select %p351, %s352, %s353
    %p357 = pneg %p351
    %p358 = scmp.eq.s32.totalorder %s23, 1
    %p359 = por %p357, %p358
    %p360 = scmp.ne.s32.totalorder %s352, %s355
    %p361 = scmp.eq.s32.totalorder %s23, 0
    %p362 = por %p360, %p361
    %p363 = scmp.ne.s32.totalorder %s352, %s355
    %p364 = scmp.eq.s32.totalorder %s28, 1
    %p365 = por %p363, %p364
    %p366 = scmp.ne.s32.totalorder %s355, %s356
    %p367 = scmp.eq.s32.totalorder %s28, 0
    %p368 = por %p366, %p367
    %p369 = scmp.ne.s32.totalorder %s355, %s356
    %p370 = scmp.eq.s32.totalorder %s29, 1
    %p371 = por %p369, %p370
    %p373 = scmp.ne.s32.totalorder %s356, %s372
    %p374 = scmp.eq.s32.totalorder %s29, 0
    %p375 = por %p373, %p374
    %p376 = scmp.le.s32.totalorder 1, %s23
    %p377 = scmp.lt.s32.totalorder %s23, 3
    %p378 = pnand %p376, %p377
    %p379 = pneg %p378
    // Predicated region
    $region9: #{sab_forward.2} parent=5 // pred_check
      _
    $region10: #{sab_forward.2} parent=5 // pred_check_branch
      %381 = sbr.rel (%p378) target = $region12
    $region11: #{sab_forward.2} parent=5 // pred_region
      %s382 = ssub.s32 %s23, 1
      // Predicated region
      $region13: #{sab_forward.2} parent=11 // pred_check
        %p383 = pneg %p96
      $region14: #{sab_forward.2} parent=11 // pred_check_branch
        %385 = sbr.rel (%p383) target = $region16
      $region15: #{sab_forward.2} parent=11 // pred_region
        _
      $region16: #{sab_forward.2} parent=11 // pred_fallthru
        _
      // Predicated region
      $region17: #{sab_forward.2} parent=11 // pred_check
        %p386 = pneg %p117
      $region18: #{sab_forward.2} parent=11 // pred_check_branch
        %388 = sbr.rel (%p386) target = $region20
      $region19: #{sab_forward.2} parent=11 // pred_region
        _
      $region20: #{sab_forward.2} parent=11 // pred_fallthru
        _
      // Predicated region
      $region21: #{sab_forward.2} parent=11 // pred_check
        %p389 = pneg %p138
      $region22: #{sab_forward.2} parent=11 // pred_check_branch
        %391 = sbr.rel (%p389) target = $region24
      $region23: #{sab_forward.2} parent=11 // pred_region
        _
      $region24: #{sab_forward.2} parent=11 // pred_fallthru
        _
      // Predicated region
      $region25: #{sab_forward.2} parent=11 // pred_check
        %p392 = pneg %p159
      $region26: #{sab_forward.2} parent=11 // pred_check_branch
        %394 = sbr.rel (%p392) target = $region28
      $region27: #{sab_forward.2} parent=11 // pred_region
        _
      $region28: #{sab_forward.2} parent=11 // pred_fallthru
        _
      // Predicated region
      $region29: #{sab_forward.2} parent=11 // pred_check
        %p395 = pneg %p180
      $region30: #{sab_forward.2} parent=11 // pred_check_branch
        %397 = sbr.rel (%p395) target = $region32
      $region31: #{sab_forward.2} parent=11 // pred_region
        _
      $region32: #{sab_forward.2} parent=11 // pred_fallthru
        _
      // Predicated region
      $region33: #{sab_forward.2} parent=11 // pred_check
        %p398 = pneg %p201
      $region34: #{sab_forward.2} parent=11 // pred_check_branch
        %400 = sbr.rel (%p398) target = $region36
      $region35: #{sab_forward.2} parent=11 // pred_region
        _
      $region36: #{sab_forward.2} parent=11 // pred_fallthru
        _
      // Predicated region
      $region37: #{sab_forward.2} parent=11 // pred_check
        %p401 = pneg %p222
      $region38: #{sab_forward.2} parent=11 // pred_check_branch
        %403 = sbr.rel (%p401) target = $region40
      $region39: #{sab_forward.2} parent=11 // pred_region
        _
      $region40: #{sab_forward.2} parent=11 // pred_fallthru
        _
      // Predicated region
      $region41: #{sab_forward.2} parent=11 // pred_check
        %p404 = pneg %p243
      $region42: #{sab_forward.2} parent=11 // pred_check_branch
        %406 = sbr.rel (%p404) target = $region44
      $region43: #{sab_forward.2} parent=11 // pred_region
        _
      $region44: #{sab_forward.2} parent=11 // pred_fallthru
        _
      // Predicated region
      $region45: #{sab_forward.2} parent=11 // pred_check
        %p407 = pneg %p264
      $region46: #{sab_forward.2} parent=11 // pred_check_branch
        %409 = sbr.rel (%p407) target = $region48
      $region47: #{sab_forward.2} parent=11 // pred_region
        _
      $region48: #{sab_forward.2} parent=11 // pred_fallthru
        _
    $region12: #{sab_forward.2} parent=5 // pred_fallthru
      _
    %p410 = scmp.lt.s32.totalorder %s23, 2
    // Predicated region
    $region49: #{sab_forward.2} parent=5 // pred_check
      %p411 = pneg %p410
    $region50: #{sab_forward.2} parent=5 // pred_check_branch
      %413 = sbr.rel (%p411) target = $region52
    $region51: #{sab_forward.2} parent=5 // pred_region
      // Predicated region
      $region53: #{sab_forward.2} parent=51 // pred_check
        %p414 = pneg %p43
      $region54: #{sab_forward.2} parent=51 // pred_check_branch
        %416 = sbr.rel (%p414) target = $region56
      $region55: #{sab_forward.2} parent=51 // pred_region
        %p417 = scmp.lt.s32.totalorder %s23, 1
        %s418 = scalar_select %p417, %s23, 1
        %s419 = smul.addr %s418, 12
        %s420 = smul.addr %s419, 8
        %s421 = scalar_lea.vmem %s0, %s420
      $region56: #{sab_forward.2} parent=51 // pred_fallthru
        _
      // Predicated region
      $region57: #{sab_forward.2} parent=51 // pred_check
        %p422 = pneg %p69
      $region58: #{sab_forward.2} parent=51 // pred_check_branch
        %424 = sbr.rel (%p422) target = $region60
      $region59: #{sab_forward.2} parent=51 // pred_region
        %p425 = scmp.lt.s32.totalorder %s23, 1
        %s426 = scalar_select %p425, %s23, 1
        %s427 = smul.addr %s426, 12
        %s428 = smul.addr %s427, 8
        %s429 = scalar_lea.vmem %s1, %s428
      $region60: #{sab_forward.2} parent=51 // pred_fallthru
        _
    $region52: #{sab_forward.2} parent=5 // pred_fallthru
      _
    %p430 = scmp.le.s32.totalorder 1, %s23
    %p431 = scmp.lt.s32.totalorder %s23, 3
    %p432 = pnand %p430, %p431
    %p433 = pneg %p432
    // Predicated region
    $region61: #{sab_forward.2} parent=5 // pred_check
      _
    $region62: #{sab_forward.2} parent=5 // pred_check_branch
      %435 = sbr.rel (%p432) target = $region64
    $region63: #{sab_forward.2} parent=5 // pred_region
      %s436 = ssub.s32 %s23, 1
      %p437 = scmp.lt.s32.totalorder %s28, 1
      %s438 = scalar_select %p437, %s28, 1
      %s439 = smul.addr %s438, 12
      %s440 = smul.addr %s439, 8
      %s441 = scalar_lea.vmem %s0, %s440
      %p442 = pneg %p49
      %p443 = pneg %p46
      %p444 = scmp.lt.s32.totalorder %s28, 1
      %s445 = scalar_select %p444, %s28, 1
      %s446 = smul.addr %s445, 12
      %s447 = smul.addr %s446, 8
      %s448 = scalar_lea.vmem %s1, %s447
      %p449 = pneg %p75
      %p450 = pneg %p72
      %p451 = pneg %p96
      %p452 = pneg %p93
      %p453 = pneg %p117
      %p454 = pneg %p114
      %p455 = pneg %p138
      %p456 = pneg %p135
      %p457 = pneg %p159
      %p458 = pneg %p156
      %p459 = pneg %p180
      %p460 = pneg %p177
      %p461 = pneg %p201
      %p462 = pneg %p198
      %p463 = pneg %p222
      %p464 = pneg %p219
      %p465 = pneg %p243
      %p466 = pneg %p240
      %p467 = pneg %p264
      %p468 = pneg %p261
      %p469 = pneg %p290
      %p470 = pneg %p287
      %p471 = scmp.lt.s32.totalorder %s28, 1
      %s472 = scalar_select %p471, %s28, 1
      %s473 = smul.addr %s472, 3
      %s474 = smul.addr %s473, 2
      %s475 = scalar_lea.vmem %s11, %s474
      %p476 = pneg %p316
      %p477 = pneg %p313
      %p478 = scmp.lt.s32.totalorder %s28, 1
      %s479 = scalar_select %p478, %s28, 1
      %s480 = smul.addr %s479, 3
      %s481 = scalar_lea.vmem %s12, %s480
      %p482 = pneg %p342
      %p483 = pneg %p339
      %p484 = scmp.lt.s32.totalorder %s28, 1
      %s485 = scalar_select %p484, %s28, 1
      %s486 = scalar_lea.vmem %s13, %s485
      %p487 = pneg %p368
      %p488 = pneg %p365
      %p489 = scmp.lt.s32.totalorder %s28, 1
      %s490 = scalar_select %p489, %s28, 1
      %s491 = scalar_lea.vmem %s14, %s490
      %p492 = scmp.lt.s32.totalorder %s28, 1
      %s493 = scalar_select %p492, %s28, 1
      %s494 = smul.addr %s493, 12
      %s495 = smul.addr %s494, 8
      %s496 = scalar_lea.vmem %s0, %s495
      %p497 = scmp.lt.s32.totalorder %s28, 1
      %s498 = scalar_select %p497, %s28, 1
      %s499 = smul.addr %s498, 12
      %s500 = smul.addr %s499, 8
      %s501 = scalar_lea.vmem %s1, %s500
      %p502 = scmp.lt.s32.totalorder %s28, 1
      %s503 = scalar_select %p502, %s28, 1
      %s504 = smul.addr %s503, 3
      %s505 = smul.addr %s504, 2
      %s506 = scalar_lea.vmem %s11, %s505
      %p507 = scmp.lt.s32.totalorder %s28, 1
      %s508 = scalar_select %p507, %s28, 1
      %s509 = smul.addr %s508, 3
      %s510 = scalar_lea.vmem %s12, %s509
      %p511 = scmp.lt.s32.totalorder %s28, 1
      %s512 = scalar_select %p511, %s28, 1
      %s513 = scalar_lea.vmem %s13, %s512
      %p514 = scmp.lt.s32.totalorder %s28, 1
      %s515 = scalar_select %p514, %s28, 1
      %s516 = scalar_lea.vmem %s14, %s515
      %v517 = vld [vmem:[%s2] sm:$0x7]
      %v518 = vld [vmem:[%s3] sm:$0x3]
      %v519 = vld [vmem:[%s496] sm:$0xff]
      %v520 = vld [vmem:[%s496 + $0x8] sm:$0xff]
      %v521 = vld [vmem:[%s496 + $0x10] sm:$0xff]
      %v522 = vld [vmem:[%s496 + $0x18] sm:$0xff]
      %v523 = vld [vmem:[%s496 + $0x20] sm:$0xff]
      %v524 = vld [vmem:[%s496 + $0x28] sm:$0xff]
      %v525 = vld [vmem:[%s496 + $0x30] sm:$0xff]
      %v526 = vld [vmem:[%s496 + $0x38] sm:$0xff]
      %v527 = vld [vmem:[%s496 + $0x40] sm:$0xff]
      %v528 = vld [vmem:[%s496 + $0x48] sm:$0xff]
      %v529 = vld [vmem:[%s496 + $0x50] sm:$0xff]
      %v530 = vld [vmem:[%s496 + $0x58] sm:$0xff]
      %v531 = vld [vmem:[%s4] sm:$0x3]
      %533 = vset.pattern.permute.xlu0 0
      %534 = vperm.xlu0 %533, %v531
      %v535 = vpop.permute.xlu0 %534
      %vm537 = vcmask 261120
      %v539 = vsel %vm537, %v518, 0
      %541 = vmatprep.subr.mxu0 %v520
      %542 = vmatpush1.msra.mxu0 %v519
      %543 = vmatprep.subr.mxu0 %v523
      %544 = vmatpush1.msra.mxu0 %v522
      %545 = vmatprep.subr.mxu0 %v526
      %546 = vmatpush1.msra.mxu0 %v525
      %547 = vmatprep.subr.mxu0 %v529
      %548 = vmatpush1.msra.mxu0 %v528
      %549 = vmatprep.subr.mxu0 0.0
      %550 = vmatpush1.msra.mxu0 0.0
      %551 = vmatprep.subr.mxu0 0.0
      %552 = vmatpush1.msra.mxu0 0.0
      %553 = vmatprep.subr.mxu0 0.0
      %554 = vmatpush1.msra.mxu0 0.0
      %555 = vmatprep.subr.mxu0 0.0
      %556 = vmatpush1.msra.mxu0 0.0
      %557 = vmatprep.subr.mxu0 0.0
      %558 = vmatpush1.msra.mxu0 0.0
      %559 = vmatprep.subr.mxu0 0.0
      %560 = vmatpush1.msra.mxu0 0.0
      %561 = vmatprep.subr.mxu0 0.0
      %562 = vmatpush1.msra.mxu0 0.0
      %563 = vmatprep.subr.mxu0 0.0
      %564 = vmatpush1.msra.mxu0 0.0
      %565 = vmatprep.subr.mxu0 0.0
      %566 = vmatpush1.msra.mxu0 0.0
      %567 = vmatprep.subr.mxu0 0.0
      %568 = vmatpush1.msra.mxu0 0.0
      %569 = vmatprep.subr.mxu0 0.0
      %570 = vmatpush1.msra.mxu0 0.0
      %571 = vmatprep.subr.mxu0 0.0
      %572 = vmatpush1.msra.mxu0 0.0
      %573 = vmatprep.subr.mxu0 0.0
      %574 = vmatpush1.msra.mxu0 0.0
      %575 = vmatprep.subr.mxu0 0.0
      %576 = vmatpush1.msra.mxu0 0.0
      %577 = vmatprep.subr.mxu0 0.0
      %578 = vmatpush1.msra.mxu0 0.0
      %579 = vmatprep.subr.mxu0 0.0
      %580 = vmatpush1.msra.mxu0 0.0
      %581 = vmatprep.subr.mxu0 0.0
      %582 = vmatpush1.msra.mxu0 0.0
      %583 = vmatprep.subr.mxu0 0.0
      %584 = vmatpush1.msra.mxu0 0.0
      %585 = vmatprep.subr.mxu0 0.0
      %586 = vmatpush1.msra.mxu0 0.0
      %587 = vmatprep.subr.mxu0 0.0
      %588 = vmatpush1.msra.mxu0 0.0
      %589 = vmatprep.subr.mxu0 0.0
      %590 = vmatpush1.msra.mxu0 0.0
      %591 = vmatprep.subr.mxu0 0.0
      %592 = vmatpush1.msra.mxu0 0.0
      %593 = vmatprep.subr.mxu0 0.0
      %594 = vmatpush1.msra.mxu0 0.0
      %595 = vmatprep.subr.mxu0 0.0
      %596 = vmatpush1.msra.mxu0 0.0
      %597 = vmatprep.subr.mxu0 0.0
      %598 = vmatpush1.msra.mxu0 0.0
      %599 = vmatprep.subr.mxu0 0.0
      %600 = vmatpush1.msra.mxu0 0.0
      %601 = vmatprep.subr.mxu0 0.0
      %602 = vmatpush1.msra.mxu0 0.0
      %603 = vmatprep.subr.mxu0 0.0
      %604 = vmatpush1.msra.mxu0 0.0
      %605 = vmatprep.mubr.f32.mxu0 0.0
      %606 = vmatmul.mubr.f32.gmra.mrb[0].mxu0 %v539
      %v607 = vpop.f32.mrb[0].mxu0
      %v608 = vadd.f32 %v535, %v607
      %v609 = vpop.f32.mrb[0].mxu0
      %v610 = vadd.f32 %v535, %v609
      %611 = vdwg.mxu0
      %612 = vmatprep.subr.mxu0 0.0
      %613 = vmatpush1.msra.mxu0 %v521
      %614 = vmatprep.subr.mxu0 0.0
      %615 = vmatpush1.msra.mxu0 %v524
      %616 = vmatprep.subr.mxu0 0.0
      %617 = vmatpush1.msra.mxu0 %v527
      %618 = vmatprep.subr.mxu0 0.0
      %619 = vmatpush1.msra.mxu0 %v530
      %620 = vmatprep.subr.mxu0 0.0
      %621 = vmatpush1.msra.mxu0 0.0
      %622 = vmatprep.subr.mxu0 0.0
      %623 = vmatpush1.msra.mxu0 0.0
      %624 = vmatprep.subr.mxu0 0.0
      %625 = vmatpush1.msra.mxu0 0.0
      %626 = vmatprep.subr.mxu0 0.0
      %627 = vmatpush1.msra.mxu0 0.0
      %628 = vmatprep.subr.mxu0 0.0
      %629 = vmatpush1.msra.mxu0 0.0
      %630 = vmatprep.subr.mxu0 0.0
      %631 = vmatpush1.msra.mxu0 0.0
      %632 = vmatprep.subr.mxu0 0.0
      %633 = vmatpush1.msra.mxu0 0.0
      %634 = vmatprep.subr.mxu0 0.0
      %635 = vmatpush1.msra.mxu0 0.0
      %636 = vmatprep.subr.mxu0 0.0
      %637 = vmatpush1.msra.mxu0 0.0
      %638 = vmatprep.subr.mxu0 0.0
      %639 = vmatpush1.msra.mxu0 0.0
      %640 = vmatprep.subr.mxu0 0.0
      %641 = vmatpush1.msra.mxu0 0.0
      %642 = vmatprep.subr.mxu0 0.0
      %643 = vmatpush1.msra.mxu0 0.0
      %644 = vmatprep.subr.mxu0 0.0
      %645 = vmatpush1.msra.mxu0 0.0
      %646 = vmatprep.subr.mxu0 0.0
      %647 = vmatpush1.msra.mxu0 0.0
      %648 = vmatprep.subr.mxu0 0.0
      %649 = vmatpush1.msra.mxu0 0.0
      %650 = vmatprep.subr.mxu0 0.0
      %651 = vmatpush1.msra.mxu0 0.0
      %652 = vmatprep.subr.mxu0 0.0
      %653 = vmatpush1.msra.mxu0 0.0
      %654 = vmatprep.subr.mxu0 0.0
      %655 = vmatpush1.msra.mxu0 0.0
      %656 = vmatprep.subr.mxu0 0.0
      %657 = vmatpush1.msra.mxu0 0.0
      %658 = vmatprep.subr.mxu0 0.0
      %659 = vmatpush1.msra.mxu0 0.0
      %660 = vmatprep.subr.mxu0 0.0
      %661 = vmatpush1.msra.mxu0 0.0
      %662 = vmatprep.subr.mxu0 0.0
      %663 = vmatpush1.msra.mxu0 0.0
      %664 = vmatprep.subr.mxu0 0.0
      %665 = vmatpush1.msra.mxu0 0.0
      %666 = vmatprep.subr.mxu0 0.0
      %667 = vmatpush1.msra.mxu0 0.0
      %668 = vmatprep.subr.mxu0 0.0
      %669 = vmatpush1.msra.mxu0 0.0
      %670 = vmatprep.subr.mxu0 0.0
      %671 = vmatpush1.msra.mxu0 0.0
      %672 = vmatprep.subr.mxu0 0.0
      %673 = vmatpush1.msra.mxu0 0.0
      %674 = vmatprep.subr.mxu0 0.0
      %675 = vmatpush1.msra.mxu0 0.0
      %676 = vmatprep.mubr.f32.mxu0 0.0
      %677 = vmatmul.mubr.f32.gmra.mrb[0].mxu0 %v539
      %v678 = vpop.f32.mrb[0].mxu0
      %v679 = vadd.f32 %v535, %v678
      %v680 = vpop.f32.mrb[0].mxu0
      %681 = vdwg.mxu0
      %v682 = vld [vmem:[%s5] sm:$0x3]
      %v683 = vld [vmem:[%s501] sm:$0xff]
      %v684 = vld [vmem:[%s501 + $0x8] sm:$0xff]
      %v685 = vld [vmem:[%s501 + $0x10] sm:$0xff]
      %v686 = vld [vmem:[%s501 + $0x18] sm:$0xff]
      %v687 = vld [vmem:[%s501 + $0x20] sm:$0xff]
      %v688 = vld [vmem:[%s501 + $0x28] sm:$0xff]
      %v689 = vld [vmem:[%s501 + $0x30] sm:$0xff]
      %v690 = vld [vmem:[%s501 + $0x38] sm:$0xff]
      %v691 = vld [vmem:[%s501 + $0x40] sm:$0xff]
      %v692 = vld [vmem:[%s501 + $0x48] sm:$0xff]
      %v693 = vld [vmem:[%s501 + $0x50] sm:$0xff]
      %v694 = vld [vmem:[%s501 + $0x58] sm:$0xff]
      %v695 = vld [vmem:[%s6] sm:$0x3]
      %697 = vset.pattern.permute.xlu0 0
      %698 = vperm.xlu0 %697, %v695
      %v699 = vpop.permute.xlu0 %698
      %v702 = vsel %vm537, %v682, 0
      %704 = vmatprep.subr.mxu0 %v684
      %705 = vmatpush1.msra.mxu0 %v683
      %706 = vmatprep.subr.mxu0 %v687
      %707 = vmatpush1.msra.mxu0 %v686
      %708 = vmatprep.subr.mxu0 %v690
      %709 = vmatpush1.msra.mxu0 %v689
      %710 = vmatprep.subr.mxu0 %v693
      %711 = vmatpush1.msra.mxu0 %v692
      %712 = vmatprep.subr.mxu0 0.0
      %713 = vmatpush1.msra.mxu0 0.0
      %714 = vmatprep.subr.mxu0 0.0
      %715 = vmatpush1.msra.mxu0 0.0
      %716 = vmatprep.subr.mxu0 0.0
      %717 = vmatpush1.msra.mxu0 0.0
      %718 = vmatprep.subr.mxu0 0.0
      %719 = vmatpush1.msra.mxu0 0.0
      %720 = vmatprep.subr.mxu0 0.0
      %721 = vmatpush1.msra.mxu0 0.0
      %722 = vmatprep.subr.mxu0 0.0
      %723 = vmatpush1.msra.mxu0 0.0
      %724 = vmatprep.subr.mxu0 0.0
      %725 = vmatpush1.msra.mxu0 0.0
      %726 = vmatprep.subr.mxu0 0.0
      %727 = vmatpush1.msra.mxu0 0.0
      %728 = vmatprep.subr.mxu0 0.0
      %729 = vmatpush1.msra.mxu0 0.0
      %730 = vmatprep.subr.mxu0 0.0
      %731 = vmatpush1.msra.mxu0 0.0
      %732 = vmatprep.subr.mxu0 0.0
      %733 = vmatpush1.msra.mxu0 0.0
      %734 = vmatprep.subr.mxu0 0.0
      %735 = vmatpush1.msra.mxu0 0.0
      %736 = vmatprep.subr.mxu0 0.0
      %737 = vmatpush1.msra.mxu0 0.0
      %738 = vmatprep.subr.mxu0 0.0
      %739 = vmatpush1.msra.mxu0 0.0
      %740 = vmatprep.subr.mxu0 0.0
      %741 = vmatpush1.msra.mxu0 0.0
      %742 = vmatprep.subr.mxu0 0.0
      %743 = vmatpush1.msra.mxu0 0.0
      %744 = vmatprep.subr.mxu0 0.0
      %745 = vmatpush1.msra.mxu0 0.0
      %746 = vmatprep.subr.mxu0 0.0
      %747 = vmatpush1.msra.mxu0 0.0
      %748 = vmatprep.subr.mxu0 0.0
      %749 = vmatpush1.msra.mxu0 0.0
      %750 = vmatprep.subr.mxu0 0.0
      %751 = vmatpush1.msra.mxu0 0.0
      %752 = vmatprep.subr.mxu0 0.0
      %753 = vmatpush1.msra.mxu0 0.0
      %754 = vmatprep.subr.mxu0 0.0
      %755 = vmatpush1.msra.mxu0 0.0
      %756 = vmatprep.subr.mxu0 0.0
      %757 = vmatpush1.msra.mxu0 0.0
      %758 = vmatprep.subr.mxu0 0.0
      %759 = vmatpush1.msra.mxu0 0.0
      %760 = vmatprep.subr.mxu0 0.0
      %761 = vmatpush1.msra.mxu0 0.0
      %762 = vmatprep.subr.mxu0 0.0
      %763 = vmatpush1.msra.mxu0 0.0
      %764 = vmatprep.subr.mxu0 0.0
      %765 = vmatpush1.msra.mxu0 0.0
      %766 = vmatprep.subr.mxu0 0.0
      %767 = vmatpush1.msra.mxu0 0.0
      %768 = vmatprep.mubr.f32.mxu0 0.0
      %769 = vmatmul.mubr.f32.gmra.mrb[0].mxu0 %v702
      %v770 = vpop.f32.mrb[0].mxu0
      %v771 = vadd.f32 %v699, %v770
      %v772 = vpop.f32.mrb[0].mxu0
      %v773 = vadd.f32 %v699, %v772
      %774 = vdwg.mxu0
      %775 = vmatprep.subr.mxu0 0.0
      %776 = vmatpush1.msra.mxu0 %v685
      %777 = vmatprep.subr.mxu0 0.0
      %778 = vmatpush1.msra.mxu0 %v688
      %779 = vmatprep.subr.mxu0 0.0
      %780 = vmatpush1.msra.mxu0 %v691
      %781 = vmatprep.subr.mxu0 0.0
      %782 = vmatpush1.msra.mxu0 %v694
      %783 = vmatprep.subr.mxu0 0.0
      %784 = vmatpush1.msra.mxu0 0.0
      %785 = vmatprep.subr.mxu0 0.0
      %786 = vmatpush1.msra.mxu0 0.0
      %787 = vmatprep.subr.mxu0 0.0
      %788 = vmatpush1.msra.mxu0 0.0
      %789 = vmatprep.subr.mxu0 0.0
      %790 = vmatpush1.msra.mxu0 0.0
      %791 = vmatprep.subr.mxu0 0.0
      %792 = vmatpush1.msra.mxu0 0.0
      %793 = vmatprep.subr.mxu0 0.0
      %794 = vmatpush1.msra.mxu0 0.0
      %795 = vmatprep.subr.mxu0 0.0
      %796 = vmatpush1.msra.mxu0 0.0
      %797 = vmatprep.subr.mxu0 0.0
      %798 = vmatpush1.msra.mxu0 0.0
      %799 = vmatprep.subr.mxu0 0.0
      %800 = vmatpush1.msra.mxu0 0.0
      %801 = vmatprep.subr.mxu0 0.0
      %802 = vmatpush1.msra.mxu0 0.0
      %803 = vmatprep.subr.mxu0 0.0
      %804 = vmatpush1.msra.mxu0 0.0
      %805 = vmatprep.subr.mxu0 0.0
      %806 = vmatpush1.msra.mxu0 0.0
      %807 = vmatprep.subr.mxu0 0.0
      %808 = vmatpush1.msra.mxu0 0.0
      %809 = vmatprep.subr.mxu0 0.0
      %810 = vmatpush1.msra.mxu0 0.0
      %811 = vmatprep.subr.mxu0 0.0
      %812 = vmatpush1.msra.mxu0 0.0
      %813 = vmatprep.subr.mxu0 0.0
      %814 = vmatpush1.msra.mxu0 0.0
      %815 = vmatprep.subr.mxu0 0.0
      %816 = vmatpush1.msra.mxu0 0.0
      %817 = vmatprep.subr.mxu0 0.0
      %818 = vmatpush1.msra.mxu0 0.0
      %819 = vmatprep.subr.mxu0 0.0
      %820 = vmatpush1.msra.mxu0 0.0
      %821 = vmatprep.subr.mxu0 0.0
      %822 = vmatpush1.msra.mxu0 0.0
      %823 = vmatprep.subr.mxu0 0.0
      %824 = vmatpush1.msra.mxu0 0.0
      %825 = vmatprep.subr.mxu0 0.0
      %826 = vmatpush1.msra.mxu0 0.0
      %827 = vmatprep.subr.mxu0 0.0
      %828 = vmatpush1.msra.mxu0 0.0
      %829 = vmatprep.subr.mxu0 0.0
      %830 = vmatpush1.msra.mxu0 0.0
      %831 = vmatprep.subr.mxu0 0.0
      %832 = vmatpush1.msra.mxu0 0.0
      %833 = vmatprep.subr.mxu0 0.0
      %834 = vmatpush1.msra.mxu0 0.0
      %835 = vmatprep.subr.mxu0 0.0
      %836 = vmatpush1.msra.mxu0 0.0
      %837 = vmatprep.subr.mxu0 0.0
      %838 = vmatpush1.msra.mxu0 0.0
      %839 = vmatprep.mubr.f32.mxu0 0.0
      %840 = vmatmul.mubr.f32.gmra.mrb[0].mxu0 %v702
      %v841 = vpop.f32.mrb[0].mxu0
      %v842 = vadd.f32 %v699, %v841
      %v843 = vpop.f32.mrb[0].mxu0
      %844 = vdwg.mxu0
      %v845 = vld [vmem:[%s7] sm:$0x1]
      %v846 = vld [vmem:[#allocation3] sm:$0x1]
      %848 = vset.pattern.permute.xlu0 0
      %849 = vperm.xlu0 %848, %v846
      %v850 = vpop.permute.xlu0 %849
      %v852 = vlaneseq
      %v853 = vshrl.u32 %v852, 7
      %v854 = vsub.s32 0, %v853
      %v855 = vrot.slane %v850, %v854
      %vm856 = vcmask 15360
      %v858 = vsel %vm856, %v845, 0
      %vm860 = vcmask 1041408
      %v862 = vsel %vm860, %v608, 0
      %v865 = vsel %vm860, %v610, 0
      %v868 = vsel %vm860, %v679, 0
      %870 = vmatprep.subr.mxu0 %v865
      %871 = vmatpush1.msra.mxu0 %v862
      %872 = vmatprep.subr.mxu0 0.0
      %873 = vmatpush1.msra.mxu0 0.0
      %874 = vmatprep.subr.mxu0 0.0
      %875 = vmatpush1.msra.mxu0 0.0
      %876 = vmatprep.subr.mxu0 0.0
      %877 = vmatpush1.msra.mxu0 0.0
      %878 = vmatprep.subr.mxu0 0.0
      %879 = vmatpush1.msra.mxu0 0.0
      %880 = vmatprep.subr.mxu0 0.0
      %881 = vmatpush1.msra.mxu0 0.0
      %882 = vmatprep.subr.mxu0 0.0
      %883 = vmatpush1.msra.mxu0 0.0
      %884 = vmatprep.subr.mxu0 0.0
      %885 = vmatpush1.msra.mxu0 0.0
      %886 = vmatprep.subr.mxu0 0.0
      %887 = vmatpush1.msra.mxu0 0.0
      %888 = vmatprep.subr.mxu0 0.0
      %889 = vmatpush1.msra.mxu0 0.0
      %890 = vmatprep.subr.mxu0 0.0
      %891 = vmatpush1.msra.mxu0 0.0
      %892 = vmatprep.subr.mxu0 0.0
      %893 = vmatpush1.msra.mxu0 0.0
      %894 = vmatprep.subr.mxu0 0.0
      %895 = vmatpush1.msra.mxu0 0.0
      %896 = vmatprep.subr.mxu0 0.0
      %897 = vmatpush1.msra.mxu0 0.0
      %898 = vmatprep.subr.mxu0 0.0
      %899 = vmatpush1.msra.mxu0 0.0
      %900 = vmatprep.subr.mxu0 0.0
      %901 = vmatpush1.msra.mxu0 0.0
      %902 = vmatprep.subr.mxu0 0.0
      %903 = vmatpush1.msra.mxu0 0.0
      %904 = vmatprep.subr.mxu0 0.0
      %905 = vmatpush1.msra.mxu0 0.0
      %906 = vmatprep.subr.mxu0 0.0
      %907 = vmatpush1.msra.mxu0 0.0
      %908 = vmatprep.subr.mxu0 0.0
      %909 = vmatpush1.msra.mxu0 0.0
      %910 = vmatprep.subr.mxu0 0.0
      %911 = vmatpush1.msra.mxu0 0.0
      %912 = vmatprep.subr.mxu0 0.0
      %913 = vmatpush1.msra.mxu0 0.0
      %914 = vmatprep.subr.mxu0 0.0
      %915 = vmatpush1.msra.mxu0 0.0
      %916 = vmatprep.subr.mxu0 0.0
      %917 = vmatpush1.msra.mxu0 0.0
      %918 = vmatprep.subr.mxu0 0.0
      %919 = vmatpush1.msra.mxu0 0.0
      %920 = vmatprep.subr.mxu0 0.0
      %921 = vmatpush1.msra.mxu0 0.0
      %922 = vmatprep.subr.mxu0 0.0
      %923 = vmatpush1.msra.mxu0 0.0
      %924 = vmatprep.subr.mxu0 0.0
      %925 = vmatpush1.msra.mxu0 0.0
      %926 = vmatprep.subr.mxu0 0.0
      %927 = vmatpush1.msra.mxu0 0.0
      %928 = vmatprep.subr.mxu0 0.0
      %929 = vmatpush1.msra.mxu0 0.0
      %930 = vmatprep.subr.mxu0 0.0
      %931 = vmatpush1.msra.mxu0 0.0
      %932 = vmatprep.subr.mxu0 0.0
      %933 = vmatpush1.msra.mxu0 0.0
      %934 = vmatprep.mubr.f32.mxu0 0.0
      %935 = vmatmul.mubr.f32.gmra.mrb[0].mxu0 %v858
      %v936 = vpop.f32.mrb[0].mxu0
      %v937 = vadd.f32 %v855, %v936
      %v938 = vpop.f32.mrb[0].mxu0
      %v939 = vadd.f32 %v855, %v938
      %940 = vdwg.mxu0
      %941 = vmatprep.subr.mxu0 0.0
      %942 = vmatpush1.msra.mxu0 %v868
      %943 = vmatprep.subr.mxu0 0.0
      %944 = vmatpush1.msra.mxu0 0.0
      %945 = vmatprep.subr.mxu0 0.0
      %946 = vmatpush1.msra.mxu0 0.0
      %947 = vmatprep.subr.mxu0 0.0
      %948 = vmatpush1.msra.mxu0 0.0
      %949 = vmatprep.subr.mxu0 0.0
      %950 = vmatpush1.msra.mxu0 0.0
      %951 = vmatprep.subr.mxu0 0.0
      %952 = vmatpush1.msra.mxu0 0.0
      %953 = vmatprep.subr.mxu0 0.0
      %954 = vmatpush1.msra.mxu0 0.0
      %955 = vmatprep.subr.mxu0 0.0
      %956 = vmatpush1.msra.mxu0 0.0
      %957 = vmatprep.subr.mxu0 0.0
      %958 = vmatpush1.msra.mxu0 0.0
      %959 = vmatprep.subr.mxu0 0.0
      %960 = vmatpush1.msra.mxu0 0.0
      %961 = vmatprep.subr.mxu0 0.0
      %962 = vmatpush1.msra.mxu0 0.0
      %963 = vmatprep.subr.mxu0 0.0
      %964 = vmatpush1.msra.mxu0 0.0
      %965 = vmatprep.subr.mxu0 0.0
      %966 = vmatpush1.msra.mxu0 0.0
      %967 = vmatprep.subr.mxu0 0.0
      %968 = vmatpush1.msra.mxu0 0.0
      %969 = vmatprep.subr.mxu0 0.0
      %970 = vmatpush1.msra.mxu0 0.0
      %971 = vmatprep.subr.mxu0 0.0
      %972 = vmatpush1.msra.mxu0 0.0
      %973 = vmatprep.subr.mxu0 0.0
      %974 = vmatpush1.msra.mxu0 0.0
      %975 = vmatprep.subr.mxu0 0.0
      %976 = vmatpush1.msra.mxu0 0.0
      %977 = vmatprep.subr.mxu0 0.0
      %978 = vmatpush1.msra.mxu0 0.0
      %979 = vmatprep.subr.mxu0 0.0
      %980 = vmatpush1.msra.mxu0 0.0
      %981 = vmatprep.subr.mxu0 0.0
      %982 = vmatpush1.msra.mxu0 0.0
      %983 = vmatprep.subr.mxu0 0.0
      %984 = vmatpush1.msra.mxu0 0.0
      %985 = vmatprep.subr.mxu0 0.0
      %986 = vmatpush1.msra.mxu0 0.0
      %987 = vmatprep.subr.mxu0 0.0
      %988 = vmatpush1.msra.mxu0 0.0
      %989 = vmatprep.subr.mxu0 0.0
      %990 = vmatpush1.msra.mxu0 0.0
      %991 = vmatprep.subr.mxu0 0.0
      %992 = vmatpush1.msra.mxu0 0.0
      %993 = vmatprep.subr.mxu0 0.0
      %994 = vmatpush1.msra.mxu0 0.0
      %995 = vmatprep.subr.mxu0 0.0
      %996 = vmatpush1.msra.mxu0 0.0
      %997 = vmatprep.subr.mxu0 0.0
      %998 = vmatpush1.msra.mxu0 0.0
      %999 = vmatprep.subr.mxu0 0.0
      %1000 = vmatpush1.msra.mxu0 0.0
      %1001 = vmatprep.subr.mxu0 0.0
      %1002 = vmatpush1.msra.mxu0 0.0
      %1003 = vmatprep.subr.mxu0 0.0
      %1004 = vmatpush1.msra.mxu0 0.0
      %1005 = vmatprep.mubr.f32.mxu0 0.0
      %1006 = vmatmul.mubr.f32.gmra.mrb[0].mxu0 %v858
      %v1007 = vpop.f32.mrb[0].mxu0
      %v1008 = vadd.f32 %v855, %v1007
      %v1009 = vpop.f32.mrb[0].mxu0
      %1010 = vdwg.mxu0
      %v1011 = vxor.u32 %v937, 2147483648
      %v1012 = vxor.u32 %v939, 2147483648
      %v1013 = vxor.u32 %v1008, 2147483648
      %v1014 = vmul.f32 %v1011, 1.442695
      %v1015 = vpow.pop %v1014
      %v1016 = vmul.f32 %v1012, 1.442695
      %v1017 = vpow.pop %v1016
      %v1018 = vmul.f32 %v1013, 1.442695
      %v1019 = vpow.pop %v1018
      %v1020 = vadd.f32 %v1015, 1.0
      %v1021 = vadd.f32 %v1017, 1.0
      %v1022 = vadd.f32 %v1019, 1.0
      %v1023 = vrcp.pop %v1020
      %v1024 = vmul.f32 1.0, %v1023
      %v1025 = vrcp.pop %v1021
      %v1026 = vmul.f32 1.0, %v1025
      %v1027 = vrcp.pop %v1022
      %v1028 = vmul.f32 1.0, %v1027
      %v1032 = vcombine.low %v1024, %v1026
      %v1034 = vunpack.c.l.s4 1966171168
      %v1035 = vunpack.c.0.s8 %v1034
      %v1036 = vlaneseq
      %v1037 = vshrl.u32 %v1036, 7
      %v1038 = vsub.s32 %v1035, %v1037
      %v1039 = vrot.slane %v1032, %v1038
      %v1041 = vunpack.c.l.s4 1966171168
      %v1042 = vunpack.c.0.s8 %v1041
      %v1043 = vlaneseq
      %v1044 = vshrl.u32 %v1043, 7
      %v1045 = vsub.s32 %v1042, %v1044
      %v1046 = vrot.slane %v1028, %v1045
      %v1047 = vcombine.low %v1039, %v1046
      %v1049 = vunpack.c.l.s4 1966171168
      %v1050 = vunpack.c.0.s8 %v1049
      %v1051 = vlaneseq
      %v1052 = vshrl.u32 %v1051, 7
      %v1053 = vsub.s32 %v1050, %v1052
      %v1054 = vrot.slane %v1047, %v1053
      %v1056 = vlaneseq
      %vm1057 = vcmp.ge.s32.totalorder %v1056, 0
      %vm1058 = vcmp.lt.s32.totalorder %v1056, 384
      %vm1059 = vmand %vm1057, %vm1058
      %1060 = vst.msk [vmem:[%s510] sm:$0x7] %vm1059, %v1054
      %v1062 = vlaneseq
      %v1063 = vshrl.u32 %v1062, 7
      %v1064 = vsub.s32 0, %v1063
      %v1065 = vrot.slane %v517, %v1064
      %v1066 = vlaneseq
      %v1067 = vshrl.u32 %v1066, 7
      %v1068 = vsub.s32 1, %v1067
      %v1069 = vrot.slane %v517, %v1068
      %v1070 = vlaneseq
      %v1071 = vshrl.u32 %v1070, 7
      %v1072 = vsub.s32 2, %v1071
      %v1073 = vrot.slane %v517, %v1072
      %v1077 = vmul.f32 %v608, %v1065
      %v1078 = vmul.f32 %v610, %v1069
      %v1079 = vmul.f32 %v679, %v1073
      %v1082 = vcombine.low %v1077, %v1078
      %1084 = vst [vmem:[#allocation2] sm:$0x33] %v1082
      %1085 = vst [vmem:[#allocation2 + $0x8] sm:$0x3] %v1079
      %v1086 = vmul.f32 %v771, %v1065
      %v1087 = vmul.f32 %v773, %v1069
      %v1088 = vmul.f32 %v842, %v1073
      %v1092 = vcombine.low %v1086, %v1087
      %v1093 = vrot.slane %v1092, 6
      %v1094 = vrot.slane %v1088, 6
      %1097 = vst [vmem:[#allocation2] sm:$0xcc] %v1093
      %1098 = vst [vmem:[#allocation2 + $0x8] sm:$0xc] %v1094
      %v1099 = vld [vmem:[#allocation2] sm:$0xff]
      %v1100 = vld [vmem:[#allocation2 + $0x8] sm:$0xf]
      %v1103 = vcombine.high %v1099, %v1099
      %1105 = vrot.lane.b32.xlu0 %v1099, 19
      %v1106 = vpop.permute.xlu0 %1105
      %1107 = vrot.lane.b32.xlu0 %v1103, 19
      %v1108 = vpop.permute.xlu0 %1107
      %1109 = vrot.lane.b32.xlu0 %v1100, 19
      %v1110 = vpop.permute.xlu0 %1109
      %v1111 = vlaneseq
      %v1112 = vand.u32 %v1111, 127
      %vm1113 = vcmp.lt.s32.totalorder %v1112, 19
      %v1114 = vsel %vm1113, %v1108, %v1110
      %v1115 = vsel %vm1113, %v1106, %v1108
      %v1116 = vsel %vm1113, %v1110, %v1106
      %v1117 = vld [vmem:[%s9] sm:$0x3]
      %1118 = vrot.lane.b32.xlu0 %v1099, 18
      %v1119 = vpop.permute.xlu0 %1118
      %1120 = vrot.lane.b32.xlu0 %v1103, 18
      %v1121 = vpop.permute.xlu0 %1120
      %1122 = vrot.lane.b32.xlu0 %v1100, 18
      %v1123 = vpop.permute.xlu0 %1122
      %vm1124 = vcmp.lt.s32.totalorder %v1112, 18
      %v1125 = vsel %vm1124, %v1121, %v1123
      %v1126 = vsel %vm1124, %v1119, %v1121
      %v1127 = vsel %vm1124, %v1123, %v1119
      %s1128 = scalar_lea.vmem %s9, 2
      %v1129 = vld [vmem:[%s1128] sm:$0x3]
      %vm1130 = vcmask 31744
      %v1132 = vsel %vm1130, %v1129, 0
      %vm1134 = vcmask 1043456
      %v1136 = vsel %vm1134, %v1127, 0
      %v1139 = vsel %vm1134, %v1126, 0
      %v1142 = vsel %vm1134, %v1125, 0
      %1144 = vmatprep.subr.mxu0 %v1139
      %1145 = vmatpush1.msra.mxu0 %v1136
      %1146 = vmatprep.subr.mxu0 0.0
      %1147 = vmatpush1.msra.mxu0 0.0
      %1148 = vmatprep.subr.mxu0 0.0
      %1149 = vmatpush1.msra.mxu0 0.0
      %1150 = vmatprep.subr.mxu0 0.0
      %1151 = vmatpush1.msra.mxu0 0.0
      %1152 = vmatprep.subr.mxu0 0.0
      %1153 = vmatpush1.msra.mxu0 0.0
      %1154 = vmatprep.subr.mxu0 0.0
      %1155 = vmatpush1.msra.mxu0 0.0
      %1156 = vmatprep.subr.mxu0 0.0
      %1157 = vmatpush1.msra.mxu0 0.0
      %1158 = vmatprep.subr.mxu0 0.0
      %1159 = vmatpush1.msra.mxu0 0.0
      %1160 = vmatprep.subr.mxu0 0.0
      %1161 = vmatpush1.msra.mxu0 0.0
      %1162 = vmatprep.subr.mxu0 0.0
      %1163 = vmatpush1.msra.mxu0 0.0
      %1164 = vmatprep.subr.mxu0 0.0
      %1165 = vmatpush1.msra.mxu0 0.0
      %1166 = vmatprep.subr.mxu0 0.0
      %1167 = vmatpush1.msra.mxu0 0.0
      %1168 = vmatprep.subr.mxu0 0.0
      %1169 = vmatpush1.msra.mxu0 0.0
      %1170 = vmatprep.subr.mxu0 0.0
      %1171 = vmatpush1.msra.mxu0 0.0
      %1172 = vmatprep.subr.mxu0 0.0
      %1173 = vmatpush1.msra.mxu0 0.0
      %1174 = vmatprep.subr.mxu0 0.0
      %1175 = vmatpush1.msra.mxu0 0.0
      %1176 = vmatprep.subr.mxu0 0.0
      %1177 = vmatpush1.msra.mxu0 0.0
      %1178 = vmatprep.subr.mxu0 0.0
      %1179 = vmatpush1.msra.mxu0 0.0
      %1180 = vmatprep.subr.mxu0 0.0
      %1181 = vmatpush1.msra.mxu0 0.0
      %1182 = vmatprep.subr.mxu0 0.0
      %1183 = vmatpush1.msra.mxu0 0.0
      %1184 = vmatprep.subr.mxu0 0.0
      %1185 = vmatpush1.msra.mxu0 0.0
      %1186 = vmatprep.subr.mxu0 0.0
      %1187 = vmatpush1.msra.mxu0 0.0
      %1188 = vmatprep.subr.mxu0 0.0
      %1189 = vmatpush1.msra.mxu0 0.0
      %1190 = vmatprep.subr.mxu0 0.0
      %1191 = vmatpush1.msra.mxu0 0.0
      %1192 = vmatprep.subr.mxu0 0.0
      %1193 = vmatpush1.msra.mxu0 0.0
      %1194 = vmatprep.subr.mxu0 0.0
      %1195 = vmatpush1.msra.mxu0 0.0
      %1196 = vmatprep.subr.mxu0 0.0
      %1197 = vmatpush1.msra.mxu0 0.0
      %1198 = vmatprep.subr.mxu0 0.0
      %1199 = vmatpush1.msra.mxu0 0.0
      %1200 = vmatprep.subr.mxu0 0.0
      %1201 = vmatpush1.msra.mxu0 0.0
      %1202 = vmatprep.subr.mxu0 0.0
      %1203 = vmatpush1.msra.mxu0 0.0
      %1204 = vmatprep.subr.mxu0 0.0
      %1205 = vmatpush1.msra.mxu0 0.0
      %1206 = vmatprep.subr.mxu0 0.0
      %1207 = vmatpush1.msra.mxu0 0.0
      %1208 = vmatprep.mubr.f32.mxu0 0.0
      %1209 = vmatmul.mubr.f32.gmra.mrb[0].mxu0 %v1132
      %v1210 = vpop.f32.mrb[0].mxu0
      %v1211 = vadd.f32 0.0, %v1210
      %v1212 = vpop.f32.mrb[0].mxu0
      %v1213 = vadd.f32 0.0, %v1212
      %1214 = vdwg.mxu0
      %1215 = vmatprep.subr.mxu0 0.0
      %1216 = vmatpush1.msra.mxu0 %v1142
      %1217 = vmatprep.subr.mxu0 0.0
      %1218 = vmatpush1.msra.mxu0 0.0
      %1219 = vmatprep.subr.mxu0 0.0
      %1220 = vmatpush1.msra.mxu0 0.0
      %1221 = vmatprep.subr.mxu0 0.0
      %1222 = vmatpush1.msra.mxu0 0.0
      %1223 = vmatprep.subr.mxu0 0.0
      %1224 = vmatpush1.msra.mxu0 0.0
      %1225 = vmatprep.subr.mxu0 0.0
      %1226 = vmatpush1.msra.mxu0 0.0
      %1227 = vmatprep.subr.mxu0 0.0
      %1228 = vmatpush1.msra.mxu0 0.0
      %1229 = vmatprep.subr.mxu0 0.0
      %1230 = vmatpush1.msra.mxu0 0.0
      %1231 = vmatprep.subr.mxu0 0.0
      %1232 = vmatpush1.msra.mxu0 0.0
      %1233 = vmatprep.subr.mxu0 0.0
      %1234 = vmatpush1.msra.mxu0 0.0
      %1235 = vmatprep.subr.mxu0 0.0
      %1236 = vmatpush1.msra.mxu0 0.0
      %1237 = vmatprep.subr.mxu0 0.0
      %1238 = vmatpush1.msra.mxu0 0.0
      %1239 = vmatprep.subr.mxu0 0.0
      %1240 = vmatpush1.msra.mxu0 0.0
      %1241 = vmatprep.subr.mxu0 0.0
      %1242 = vmatpush1.msra.mxu0 0.0
      %1243 = vmatprep.subr.mxu0 0.0
      %1244 = vmatpush1.msra.mxu0 0.0
      %1245 = vmatprep.subr.mxu0 0.0
      %1246 = vmatpush1.msra.mxu0 0.0
      %1247 = vmatprep.subr.mxu0 0.0
      %1248 = vmatpush1.msra.mxu0 0.0
      %1249 = vmatprep.subr.mxu0 0.0
      %1250 = vmatpush1.msra.mxu0 0.0
      %1251 = vmatprep.subr.mxu0 0.0
      %1252 = vmatpush1.msra.mxu0 0.0
      %1253 = vmatprep.subr.mxu0 0.0
      %1254 = vmatpush1.msra.mxu0 0.0
      %1255 = vmatprep.subr.mxu0 0.0
      %1256 = vmatpush1.msra.mxu0 0.0
      %1257 = vmatprep.subr.mxu0 0.0
      %1258 = vmatpush1.msra.mxu0 0.0
      %1259 = vmatprep.subr.mxu0 0.0
      %1260 = vmatpush1.msra.mxu0 0.0
      %1261 = vmatprep.subr.mxu0 0.0
      %1262 = vmatpush1.msra.mxu0 0.0
      %1263 = vmatprep.subr.mxu0 0.0
      %1264 = vmatpush1.msra.mxu0 0.0
      %1265 = vmatprep.subr.mxu0 0.0
      %1266 = vmatpush1.msra.mxu0 0.0
      %1267 = vmatprep.subr.mxu0 0.0
      %1268 = vmatpush1.msra.mxu0 0.0
      %1269 = vmatprep.subr.mxu0 0.0
      %1270 = vmatpush1.msra.mxu0 0.0
      %1271 = vmatprep.subr.mxu0 0.0
      %1272 = vmatpush1.msra.mxu0 0.0
      %1273 = vmatprep.subr.mxu0 0.0
      %1274 = vmatpush1.msra.mxu0 0.0
      %1275 = vmatprep.subr.mxu0 0.0
      %1276 = vmatpush1.msra.mxu0 0.0
      %1277 = vmatprep.subr.mxu0 0.0
      %1278 = vmatpush1.msra.mxu0 0.0
      %1279 = vmatprep.mubr.f32.mxu0 0.0
      %1280 = vmatmul.mubr.f32.gmra.mrb[0].mxu0 %v1132
      %v1281 = vpop.f32.mrb[0].mxu0
      %v1282 = vadd.f32 0.0, %v1281
      %v1283 = vpop.f32.mrb[0].mxu0
      %1284 = vdwg.mxu0
      %v1286 = vsel %vm1130, %v1117, 0
      %v1289 = vsel %vm1134, %v1116, 0
      %v1292 = vsel %vm1134, %v1115, 0
      %v1295 = vsel %vm1134, %v1114, 0
      %1297 = vmatprep.subr.mxu0 %v1292
      %1298 = vmatpush1.msra.mxu0 %v1289
      %1299 = vmatprep.subr.mxu0 0.0
      %1300 = vmatpush1.msra.mxu0 0.0
      %1301 = vmatprep.subr.mxu0 0.0
      %1302 = vmatpush1.msra.mxu0 0.0
      %1303 = vmatprep.subr.mxu0 0.0
      %1304 = vmatpush1.msra.mxu0 0.0
      %1305 = vmatprep.subr.mxu0 0.0
      %1306 = vmatpush1.msra.mxu0 0.0
      %1307 = vmatprep.subr.mxu0 0.0
      %1308 = vmatpush1.msra.mxu0 0.0
      %1309 = vmatprep.subr.mxu0 0.0
      %1310 = vmatpush1.msra.mxu0 0.0
      %1311 = vmatprep.subr.mxu0 0.0
      %1312 = vmatpush1.msra.mxu0 0.0
      %1313 = vmatprep.subr.mxu0 0.0
      %1314 = vmatpush1.msra.mxu0 0.0
      %1315 = vmatprep.subr.mxu0 0.0
      %1316 = vmatpush1.msra.mxu0 0.0
      %1317 = vmatprep.subr.mxu0 0.0
      %1318 = vmatpush1.msra.mxu0 0.0
      %1319 = vmatprep.subr.mxu0 0.0
      %1320 = vmatpush1.msra.mxu0 0.0
      %1321 = vmatprep.subr.mxu0 0.0
      %1322 = vmatpush1.msra.mxu0 0.0
      %1323 = vmatprep.subr.mxu0 0.0
      %1324 = vmatpush1.msra.mxu0 0.0
      %1325 = vmatprep.subr.mxu0 0.0
      %1326 = vmatpush1.msra.mxu0 0.0
      %1327 = vmatprep.subr.mxu0 0.0
      %1328 = vmatpush1.msra.mxu0 0.0
      %1329 = vmatprep.subr.mxu0 0.0
      %1330 = vmatpush1.msra.mxu0 0.0
      %1331 = vmatprep.subr.mxu0 0.0
      %1332 = vmatpush1.msra.mxu0 0.0
      %1333 = vmatprep.subr.mxu0 0.0
      %1334 = vmatpush1.msra.mxu0 0.0
      %1335 = vmatprep.subr.mxu0 0.0
      %1336 = vmatpush1.msra.mxu0 0.0
      %1337 = vmatprep.subr.mxu0 0.0
      %1338 = vmatpush1.msra.mxu0 0.0
      %1339 = vmatprep.subr.mxu0 0.0
      %1340 = vmatpush1.msra.mxu0 0.0
      %1341 = vmatprep.subr.mxu0 0.0
      %1342 = vmatpush1.msra.mxu0 0.0
      %1343 = vmatprep.subr.mxu0 0.0
      %1344 = vmatpush1.msra.mxu0 0.0
      %1345 = vmatprep.subr.mxu0 0.0
      %1346 = vmatpush1.msra.mxu0 0.0
      %1347 = vmatprep.subr.mxu0 0.0
      %1348 = vmatpush1.msra.mxu0 0.0
      %1349 = vmatprep.subr.mxu0 0.0
      %1350 = vmatpush1.msra.mxu0 0.0
      %1351 = vmatprep.subr.mxu0 0.0
      %1352 = vmatpush1.msra.mxu0 0.0
      %1353 = vmatprep.subr.mxu0 0.0
      %1354 = vmatpush1.msra.mxu0 0.0
      %1355 = vmatprep.subr.mxu0 0.0
      %1356 = vmatpush1.msra.mxu0 0.0
      %1357 = vmatprep.subr.mxu0 0.0
      %1358 = vmatpush1.msra.mxu0 0.0
      %1359 = vmatprep.subr.mxu0 0.0
      %1360 = vmatpush1.msra.mxu0 0.0
      %1361 = vmatprep.mubr.f32.mxu0 0.0
      %1362 = vmatmul.mubr.f32.gmra.mrb[0].mxu0 %v1286
      %v1363 = vpop.f32.mrb[0].mxu0
      %v1364 = vadd.f32 %v1211, %v1363
      %v1365 = vpop.f32.mrb[0].mxu0
      %v1366 = vadd.f32 %v1213, %v1365
      %1367 = vdwg.mxu0
      %1368 = vmatprep.subr.mxu0 0.0
      %1369 = vmatpush1.msra.mxu0 %v1295
      %1370 = vmatprep.subr.mxu0 0.0
      %1371 = vmatpush1.msra.mxu0 0.0
      %1372 = vmatprep.subr.mxu0 0.0
      %1373 = vmatpush1.msra.mxu0 0.0
      %1374 = vmatprep.subr.mxu0 0.0
      %1375 = vmatpush1.msra.mxu0 0.0
      %1376 = vmatprep.subr.mxu0 0.0
      %1377 = vmatpush1.msra.mxu0 0.0
      %1378 = vmatprep.subr.mxu0 0.0
      %1379 = vmatpush1.msra.mxu0 0.0
      %1380 = vmatprep.subr.mxu0 0.0
      %1381 = vmatpush1.msra.mxu0 0.0
      %1382 = vmatprep.subr.mxu0 0.0
      %1383 = vmatpush1.msra.mxu0 0.0
      %1384 = vmatprep.subr.mxu0 0.0
      %1385 = vmatpush1.msra.mxu0 0.0
      %1386 = vmatprep.subr.mxu0 0.0
      %1387 = vmatpush1.msra.mxu0 0.0
      %1388 = vmatprep.subr.mxu0 0.0
      %1389 = vmatpush1.msra.mxu0 0.0
      %1390 = vmatprep.subr.mxu0 0.0
      %1391 = vmatpush1.msra.mxu0 0.0
      %1392 = vmatprep.subr.mxu0 0.0
      %1393 = vmatpush1.msra.mxu0 0.0
      %1394 = vmatprep.subr.mxu0 0.0
      %1395 = vmatpush1.msra.mxu0 0.0
      %1396 = vmatprep.subr.mxu0 0.0
      %1397 = vmatpush1.msra.mxu0 0.0
      %1398 = vmatprep.subr.mxu0 0.0
      %1399 = vmatpush1.msra.mxu0 0.0
      %1400 = vmatprep.subr.mxu0 0.0
      %1401 = vmatpush1.msra.mxu0 0.0
      %1402 = vmatprep.subr.mxu0 0.0
      %1403 = vmatpush1.msra.mxu0 0.0
      %1404 = vmatprep.subr.mxu0 0.0
      %1405 = vmatpush1.msra.mxu0 0.0
      %1406 = vmatprep.subr.mxu0 0.0
      %1407 = vmatpush1.msra.mxu0 0.0
      %1408 = vmatprep.subr.mxu0 0.0
      %1409 = vmatpush1.msra.mxu0 0.0
      %1410 = vmatprep.subr.mxu0 0.0
      %1411 = vmatpush1.msra.mxu0 0.0
      %1412 = vmatprep.subr.mxu0 0.0
      %1413 = vmatpush1.msra.mxu0 0.0
      %1414 = vmatprep.subr.mxu0 0.0
      %1415 = vmatpush1.msra.mxu0 0.0
      %1416 = vmatprep.subr.mxu0 0.0
      %1417 = vmatpush1.msra.mxu0 0.0
      %1418 = vmatprep.subr.mxu0 0.0
      %1419 = vmatpush1.msra.mxu0 0.0
      %1420 = vmatprep.subr.mxu0 0.0
      %1421 = vmatpush1.msra.mxu0 0.0
      %1422 = vmatprep.subr.mxu0 0.0
      %1423 = vmatpush1.msra.mxu0 0.0
      %1424 = vmatprep.subr.mxu0 0.0
      %1425 = vmatpush1.msra.mxu0 0.0
      %1426 = vmatprep.subr.mxu0 0.0
      %1427 = vmatpush1.msra.mxu0 0.0
      %1428 = vmatprep.subr.mxu0 0.0
      %1429 = vmatpush1.msra.mxu0 0.0
      %1430 = vmatprep.subr.mxu0 0.0
      %1431 = vmatpush1.msra.mxu0 0.0
      %1432 = vmatprep.mubr.f32.mxu0 0.0
      %1433 = vmatmul.mubr.f32.gmra.mrb[0].mxu0 %v1286
      %v1434 = vpop.f32.mrb[0].mxu0
      %v1435 = vadd.f32 %v1282, %v1434
      %v1436 = vpop.f32.mrb[0].mxu0
      %1437 = vdwg.mxu0
      %1438 = vrot.lane.b32.xlu0 %v1099, 17
      %v1439 = vpop.permute.xlu0 %1438
      %1440 = vrot.lane.b32.xlu0 %v1103, 17
      %v1441 = vpop.permute.xlu0 %1440
      %1442 = vrot.lane.b32.xlu0 %v1100, 17
      %v1443 = vpop.permute.xlu0 %1442
      %vm1444 = vcmp.lt.s32.totalorder %v1112, 17
      %v1445 = vsel %vm1444, %v1441, %v1443
      %v1446 = vsel %vm1444, %v1439, %v1441
      %v1447 = vsel %vm1444, %v1443, %v1439
      %s1448 = scalar_lea.vmem %s9, 4
      %v1449 = vld [vmem:[%s1448] sm:$0x3]
      %v1451 = vsel %vm1130, %v1449, 0
      %v1454 = vsel %vm1134, %v1447, 0
      %v1457 = vsel %vm1134, %v1446, 0
      %v1460 = vsel %vm1134, %v1445, 0
      %1462 = vmatprep.subr.mxu0 %v1457
      %1463 = vmatpush1.msra.mxu0 %v1454
      %1464 = vmatprep.subr.mxu0 0.0
      %1465 = vmatpush1.msra.mxu0 0.0
      %1466 = vmatprep.subr.mxu0 0.0
      %1467 = vmatpush1.msra.mxu0 0.0
      %1468 = vmatprep.subr.mxu0 0.0
      %1469 = vmatpush1.msra.mxu0 0.0
      %1470 = vmatprep.subr.mxu0 0.0
      %1471 = vmatpush1.msra.mxu0 0.0
      %1472 = vmatprep.subr.mxu0 0.0
      %1473 = vmatpush1.msra.mxu0 0.0
      %1474 = vmatprep.subr.mxu0 0.0
      %1475 = vmatpush1.msra.mxu0 0.0
      %1476 = vmatprep.subr.mxu0 0.0
      %1477 = vmatpush1.msra.mxu0 0.0
      %1478 = vmatprep.subr.mxu0 0.0
      %1479 = vmatpush1.msra.mxu0 0.0
      %1480 = vmatprep.subr.mxu0 0.0
      %1481 = vmatpush1.msra.mxu0 0.0
      %1482 = vmatprep.subr.mxu0 0.0
      %1483 = vmatpush1.msra.mxu0 0.0
      %1484 = vmatprep.subr.mxu0 0.0
      %1485 = vmatpush1.msra.mxu0 0.0
      %1486 = vmatprep.subr.mxu0 0.0
      %1487 = vmatpush1.msra.mxu0 0.0
      %1488 = vmatprep.subr.mxu0 0.0
      %1489 = vmatpush1.msra.mxu0 0.0
      %1490 = vmatprep.subr.mxu0 0.0
      %1491 = vmatpush1.msra.mxu0 0.0
      %1492 = vmatprep.subr.mxu0 0.0
      %1493 = vmatpush1.msra.mxu0 0.0
      %1494 = vmatprep.subr.mxu0 0.0
      %1495 = vmatpush1.msra.mxu0 0.0
      %1496 = vmatprep.subr.mxu0 0.0
      %1497 = vmatpush1.msra.mxu0 0.0
      %1498 = vmatprep.subr.mxu0 0.0
      %1499 = vmatpush1.msra.mxu0 0.0
      %1500 = vmatprep.subr.mxu0 0.0
      %1501 = vmatpush1.msra.mxu0 0.0
      %1502 = vmatprep.subr.mxu0 0.0
      %1503 = vmatpush1.msra.mxu0 0.0
      %1504 = vmatprep.subr.mxu0 0.0
      %1505 = vmatpush1.msra.mxu0 0.0
      %1506 = vmatprep.subr.mxu0 0.0
      %1507 = vmatpush1.msra.mxu0 0.0
      %1508 = vmatprep.subr.mxu0 0.0
      %1509 = vmatpush1.msra.mxu0 0.0
      %1510 = vmatprep.subr.mxu0 0.0
      %1511 = vmatpush1.msra.mxu0 0.0
      %1512 = vmatprep.subr.mxu0 0.0
      %1513 = vmatpush1.msra.mxu0 0.0
      %1514 = vmatprep.subr.mxu0 0.0
      %1515 = vmatpush1.msra.mxu0 0.0
      %1516 = vmatprep.subr.mxu0 0.0
      %1517 = vmatpush1.msra.mxu0 0.0
      %1518 = vmatprep.subr.mxu0 0.0
      %1519 = vmatpush1.msra.mxu0 0.0
      %1520 = vmatprep.subr.mxu0 0.0
      %1521 = vmatpush1.msra.mxu0 0.0
      %1522 = vmatprep.subr.mxu0 0.0
      %1523 = vmatpush1.msra.mxu0 0.0
      %1524 = vmatprep.subr.mxu0 0.0
      %1525 = vmatpush1.msra.mxu0 0.0
      %1526 = vmatprep.mubr.f32.mxu0 0.0
      %1527 = vmatmul.mubr.f32.gmra.mrb[0].mxu0 %v1451
      %v1528 = vpop.f32.mrb[0].mxu0
      %v1529 = vadd.f32 0.0, %v1528
      %v1530 = vpop.f32.mrb[0].mxu0
      %v1531 = vadd.f32 0.0, %v1530
      %1532 = vdwg.mxu0
      %1533 = vmatprep.subr.mxu0 0.0
      %1534 = vmatpush1.msra.mxu0 %v1460
      %1535 = vmatprep.subr.mxu0 0.0
      %1536 = vmatpush1.msra.mxu0 0.0
      %1537 = vmatprep.subr.mxu0 0.0
      %1538 = vmatpush1.msra.mxu0 0.0
      %1539 = vmatprep.subr.mxu0 0.0
      %1540 = vmatpush1.msra.mxu0 0.0
      %1541 = vmatprep.subr.mxu0 0.0
      %1542 = vmatpush1.msra.mxu0 0.0
      %1543 = vmatprep.subr.mxu0 0.0
      %1544 = vmatpush1.msra.mxu0 0.0
      %1545 = vmatprep.subr.mxu0 0.0
      %1546 = vmatpush1.msra.mxu0 0.0
      %1547 = vmatprep.subr.mxu0 0.0
      %1548 = vmatpush1.msra.mxu0 0.0
      %1549 = vmatprep.subr.mxu0 0.0
      %1550 = vmatpush1.msra.mxu0 0.0
      %1551 = vmatprep.subr.mxu0 0.0
      %1552 = vmatpush1.msra.mxu0 0.0
      %1553 = vmatprep.subr.mxu0 0.0
      %1554 = vmatpush1.msra.mxu0 0.0
      %1555 = vmatprep.subr.mxu0 0.0
      %1556 = vmatpush1.msra.mxu0 0.0
      %1557 = vmatprep.subr.mxu0 0.0
      %1558 = vmatpush1.msra.mxu0 0.0
      %1559 = vmatprep.subr.mxu0 0.0
      %1560 = vmatpush1.msra.mxu0 0.0
      %1561 = vmatprep.subr.mxu0 0.0
      %1562 = vmatpush1.msra.mxu0 0.0
      %1563 = vmatprep.subr.mxu0 0.0
      %1564 = vmatpush1.msra.mxu0 0.0
      %1565 = vmatprep.subr.mxu0 0.0
      %1566 = vmatpush1.msra.mxu0 0.0
      %1567 = vmatprep.subr.mxu0 0.0
      %1568 = vmatpush1.msra.mxu0 0.0
      %1569 = vmatprep.subr.mxu0 0.0
      %1570 = vmatpush1.msra.mxu0 0.0
      %1571 = vmatprep.subr.mxu0 0.0
      %1572 = vmatpush1.msra.mxu0 0.0
      %1573 = vmatprep.subr.mxu0 0.0
      %1574 = vmatpush1.msra.mxu0 0.0
      %1575 = vmatprep.subr.mxu0 0.0
      %1576 = vmatpush1.msra.mxu0 0.0
      %1577 = vmatprep.subr.mxu0 0.0
      %1578 = vmatpush1.msra.mxu0 0.0
      %1579 = vmatprep.subr.mxu0 0.0
      %1580 = vmatpush1.msra.mxu0 0.0
      %1581 = vmatprep.subr.mxu0 0.0
      %1582 = vmatpush1.msra.mxu0 0.0
      %1583 = vmatprep.subr.mxu0 0.0
      %1584 = vmatpush1.msra.mxu0 0.0
      %1585 = vmatprep.subr.mxu0 0.0
      %1586 = vmatpush1.msra.mxu0 0.0
      %1587 = vmatprep.subr.mxu0 0.0
      %1588 = vmatpush1.msra.mxu0 0.0
      %1589 = vmatprep.subr.mxu0 0.0
      %1590 = vmatpush1.msra.mxu0 0.0
      %1591 = vmatprep.subr.mxu0 0.0
      %1592 = vmatpush1.msra.mxu0 0.0
      %1593 = vmatprep.subr.mxu0 0.0
      %1594 = vmatpush1.msra.mxu0 0.0
      %1595 = vmatprep.subr.mxu0 0.0
      %1596 = vmatpush1.msra.mxu0 0.0
      %1597 = vmatprep.mubr.f32.mxu0 0.0
      %1598 = vmatmul.mubr.f32.gmra.mrb[0].mxu0 %v1451
      %v1599 = vpop.f32.mrb[0].mxu0
      %v1600 = vadd.f32 0.0, %v1599
      %v1601 = vpop.f32.mrb[0].mxu0
      %1602 = vdwg.mxu0
      %v1603 = vadd.f32 %v1364, %v1529
      %v1604 = vadd.f32 %v1366, %v1531
      %v1605 = vadd.f32 %v1435, %v1600
      %1606 = vrot.lane.b32.xlu0 %v1099, 1
      %v1607 = vpop.permute.xlu0 %1606
      %1608 = vrot.lane.b32.xlu0 %v1103, 1
      %v1609 = vpop.permute.xlu0 %1608
      %1610 = vrot.lane.b32.xlu0 %v1100, 1
      %v1611 = vpop.permute.xlu0 %1610
      %vm1612 = vcmp.lt.s32.totalorder %v1112, 1
      %v1613 = vsel %vm1612, %v1609, %v1611
      %v1614 = vsel %vm1612, %v1607, %v1609
      %v1615 = vsel %vm1612, %v1611, %v1607
      %s1616 = scalar_lea.vmem %s9, 6
      %v1617 = vld [vmem:[%s1616] sm:$0x3]
      %v1619 = vsel %vm1130, %v1617, 0
      %v1622 = vsel %vm1134, %v1615, 0
      %v1625 = vsel %vm1134, %v1614, 0
      %v1628 = vsel %vm1134, %v1613, 0
      %1630 = vmatprep.subr.mxu0 %v1625
      %1631 = vmatpush1.msra.mxu0 %v1622
      %1632 = vmatprep.subr.mxu0 0.0
      %1633 = vmatpush1.msra.mxu0 0.0
      %1634 = vmatprep.subr.mxu0 0.0
      %1635 = vmatpush1.msra.mxu0 0.0
      %1636 = vmatprep.subr.mxu0 0.0
      %1637 = vmatpush1.msra.mxu0 0.0
      %1638 = vmatprep.subr.mxu0 0.0
      %1639 = vmatpush1.msra.mxu0 0.0
      %1640 = vmatprep.subr.mxu0 0.0
      %1641 = vmatpush1.msra.mxu0 0.0
      %1642 = vmatprep.subr.mxu0 0.0
      %1643 = vmatpush1.msra.mxu0 0.0
      %1644 = vmatprep.subr.mxu0 0.0
      %1645 = vmatpush1.msra.mxu0 0.0
      %1646 = vmatprep.subr.mxu0 0.0
      %1647 = vmatpush1.msra.mxu0 0.0
      %1648 = vmatprep.subr.mxu0 0.0
      %1649 = vmatpush1.msra.mxu0 0.0
      %1650 = vmatprep.subr.mxu0 0.0
      %1651 = vmatpush1.msra.mxu0 0.0
      %1652 = vmatprep.subr.mxu0 0.0
      %1653 = vmatpush1.msra.mxu0 0.0
      %1654 = vmatprep.subr.mxu0 0.0
      %1655 = vmatpush1.msra.mxu0 0.0
      %1656 = vmatprep.subr.mxu0 0.0
      %1657 = vmatpush1.msra.mxu0 0.0
      %1658 = vmatprep.subr.mxu0 0.0
      %1659 = vmatpush1.msra.mxu0 0.0
      %1660 = vmatprep.subr.mxu0 0.0
      %1661 = vmatpush1.msra.mxu0 0.0
      %1662 = vmatprep.subr.mxu0 0.0
      %1663 = vmatpush1.msra.mxu0 0.0
      %1664 = vmatprep.subr.mxu0 0.0
      %1665 = vmatpush1.msra.mxu0 0.0
      %1666 = vmatprep.subr.mxu0 0.0
      %1667 = vmatpush1.msra.mxu0 0.0
      %1668 = vmatprep.subr.mxu0 0.0
      %1669 = vmatpush1.msra.mxu0 0.0
      %1670 = vmatprep.subr.mxu0 0.0
      %1671 = vmatpush1.msra.mxu0 0.0
      %1672 = vmatprep.subr.mxu0 0.0
      %1673 = vmatpush1.msra.mxu0 0.0
      %1674 = vmatprep.subr.mxu0 0.0
      %1675 = vmatpush1.msra.mxu0 0.0
      %1676 = vmatprep.subr.mxu0 0.0
      %1677 = vmatpush1.msra.mxu0 0.0
      %1678 = vmatprep.subr.mxu0 0.0
      %1679 = vmatpush1.msra.mxu0 0.0
      %1680 = vmatprep.subr.mxu0 0.0
      %1681 = vmatpush1.msra.mxu0 0.0
      %1682 = vmatprep.subr.mxu0 0.0
      %1683 = vmatpush1.msra.mxu0 0.0
      %1684 = vmatprep.subr.mxu0 0.0
      %1685 = vmatpush1.msra.mxu0 0.0
      %1686 = vmatprep.subr.mxu0 0.0
      %1687 = vmatpush1.msra.mxu0 0.0
      %1688 = vmatprep.subr.mxu0 0.0
      %1689 = vmatpush1.msra.mxu0 0.0
      %1690 = vmatprep.subr.mxu0 0.0
      %1691 = vmatpush1.msra.mxu0 0.0
      %1692 = vmatprep.subr.mxu0 0.0
      %1693 = vmatpush1.msra.mxu0 0.0
      %1694 = vmatprep.mubr.f32.mxu0 0.0
      %1695 = vmatmul.mubr.f32.gmra.mrb[0].mxu0 %v1619
      %v1696 = vpop.f32.mrb[0].mxu0
      %v1697 = vadd.f32 0.0, %v1696
      %v1698 = vpop.f32.mrb[0].mxu0
      %v1699 = vadd.f32 0.0, %v1698
      %1700 = vdwg.mxu0
      %1701 = vmatprep.subr.mxu0 0.0
      %1702 = vmatpush1.msra.mxu0 %v1628
      %1703 = vmatprep.subr.mxu0 0.0
      %1704 = vmatpush1.msra.mxu0 0.0
      %1705 = vmatprep.subr.mxu0 0.0
      %1706 = vmatpush1.msra.mxu0 0.0
      %1707 = vmatprep.subr.mxu0 0.0
      %1708 = vmatpush1.msra.mxu0 0.0
      %1709 = vmatprep.subr.mxu0 0.0
      %1710 = vmatpush1.msra.mxu0 0.0
      %1711 = vmatprep.subr.mxu0 0.0
      %1712 = vmatpush1.msra.mxu0 0.0
      %1713 = vmatprep.subr.mxu0 0.0
      %1714 = vmatpush1.msra.mxu0 0.0
      %1715 = vmatprep.subr.mxu0 0.0
      %1716 = vmatpush1.msra.mxu0 0.0
      %1717 = vmatprep.subr.mxu0 0.0
      %1718 = vmatpush1.msra.mxu0 0.0
      %1719 = vmatprep.subr.mxu0 0.0
      %1720 = vmatpush1.msra.mxu0 0.0
      %1721 = vmatprep.subr.mxu0 0.0
      %1722 = vmatpush1.msra.mxu0 0.0
      %1723 = vmatprep.subr.mxu0 0.0
      %1724 = vmatpush1.msra.mxu0 0.0
      %1725 = vmatprep.subr.mxu0 0.0
      %1726 = vmatpush1.msra.mxu0 0.0
      %1727 = vmatprep.subr.mxu0 0.0
      %1728 = vmatpush1.msra.mxu0 0.0
      %1729 = vmatprep.subr.mxu0 0.0
      %1730 = vmatpush1.msra.mxu0 0.0
      %1731 = vmatprep.subr.mxu0 0.0
      %1732 = vmatpush1.msra.mxu0 0.0
      %1733 = vmatprep.subr.mxu0 0.0
      %1734 = vmatpush1.msra.mxu0 0.0
      %1735 = vmatprep.subr.mxu0 0.0
      %1736 = vmatpush1.msra.mxu0 0.0
      %1737 = vmatprep.subr.mxu0 0.0
      %1738 = vmatpush1.msra.mxu0 0.0
      %1739 = vmatprep.subr.mxu0 0.0
      %1740 = vmatpush1.msra.mxu0 0.0
      %1741 = vmatprep.subr.mxu0 0.0
      %1742 = vmatpush1.msra.mxu0 0.0
      %1743 = vmatprep.subr.mxu0 0.0
      %1744 = vmatpush1.msra.mxu0 0.0
      %1745 = vmatprep.subr.mxu0 0.0
      %1746 = vmatpush1.msra.mxu0 0.0
      %1747 = vmatprep.subr.mxu0 0.0
      %1748 = vmatpush1.msra.mxu0 0.0
      %1749 = vmatprep.subr.mxu0 0.0
      %1750 = vmatpush1.msra.mxu0 0.0
      %1751 = vmatprep.subr.mxu0 0.0
      %1752 = vmatpush1.msra.mxu0 0.0
      %1753 = vmatprep.subr.mxu0 0.0
      %1754 = vmatpush1.msra.mxu0 0.0
      %1755 = vmatprep.subr.mxu0 0.0
      %1756 = vmatpush1.msra.mxu0 0.0
      %1757 = vmatprep.subr.mxu0 0.0
      %1758 = vmatpush1.msra.mxu0 0.0
      %1759 = vmatprep.subr.mxu0 0.0
      %1760 = vmatpush1.msra.mxu0 0.0
      %1761 = vmatprep.subr.mxu0 0.0
      %1762 = vmatpush1.msra.mxu0 0.0
      %1763 = vmatprep.subr.mxu0 0.0
      %1764 = vmatpush1.msra.mxu0 0.0
      %1765 = vmatprep.mubr.f32.mxu0 0.0
      %1766 = vmatmul.mubr.f32.gmra.mrb[0].mxu0 %v1619
      %v1767 = vpop.f32.mrb[0].mxu0
      %v1768 = vadd.f32 0.0, %v1767
      %v1769 = vpop.f32.mrb[0].mxu0
      %1770 = vdwg.mxu0
      %v1771 = vadd.f32 %v1603, %v1697
      %v1772 = vadd.f32 %v1604, %v1699
      %v1773 = vadd.f32 %v1605, %v1768
      %s1774 = scalar_lea.vmem %s9, 8
      %v1775 = vld [vmem:[%s1774] sm:$0x3]
      %v1777 = vsel %vm1130, %v1775, 0
      %v1779 = vsel %vm1134, %v1099, 0
      %v1781 = vsel %vm1134, %v1103, 0
      %v1783 = vsel %vm1134, %v1100, 0
      %1785 = vmatprep.subr.mxu0 %v1781
      %1786 = vmatpush1.msra.mxu0 %v1779
      %1787 = vmatprep.subr.mxu0 0.0
      %1788 = vmatpush1.msra.mxu0 0.0
      %1789 = vmatprep.subr.mxu0 0.0
      %1790 = vmatpush1.msra.mxu0 0.0
      %1791 = vmatprep.subr.mxu0 0.0
      %1792 = vmatpush1.msra.mxu0 0.0
      %1793 = vmatprep.subr.mxu0 0.0
      %1794 = vmatpush1.msra.mxu0 0.0
      %1795 = vmatprep.subr.mxu0 0.0
      %1796 = vmatpush1.msra.mxu0 0.0
      %1797 = vmatprep.subr.mxu0 0.0
      %1798 = vmatpush1.msra.mxu0 0.0
      %1799 = vmatprep.subr.mxu0 0.0
      %1800 = vmatpush1.msra.mxu0 0.0
      %1801 = vmatprep.subr.mxu0 0.0
      %1802 = vmatpush1.msra.mxu0 0.0
      %1803 = vmatprep.subr.mxu0 0.0
      %1804 = vmatpush1.msra.mxu0 0.0
      %1805 = vmatprep.subr.mxu0 0.0
      %1806 = vmatpush1.msra.mxu0 0.0
      %1807 = vmatprep.subr.mxu0 0.0
      %1808 = vmatpush1.msra.mxu0 0.0
      %1809 = vmatprep.subr.mxu0 0.0
      %1810 = vmatpush1.msra.mxu0 0.0
      %1811 = vmatprep.subr.mxu0 0.0
      %1812 = vmatpush1.msra.mxu0 0.0
      %1813 = vmatprep.subr.mxu0 0.0
      %1814 = vmatpush1.msra.mxu0 0.0
      %1815 = vmatprep.subr.mxu0 0.0
      %1816 = vmatpush1.msra.mxu0 0.0
      %1817 = vmatprep.subr.mxu0 0.0
      %1818 = vmatpush1.msra.mxu0 0.0
      %1819 = vmatprep.subr.mxu0 0.0
      %1820 = vmatpush1.msra.mxu0 0.0
      %1821 = vmatprep.subr.mxu0 0.0
      %1822 = vmatpush1.msra.mxu0 0.0
      %1823 = vmatprep.subr.mxu0 0.0
      %1824 = vmatpush1.msra.mxu0 0.0
      %1825 = vmatprep.subr.mxu0 0.0
      %1826 = vmatpush1.msra.mxu0 0.0
      %1827 = vmatprep.subr.mxu0 0.0
      %1828 = vmatpush1.msra.mxu0 0.0
      %1829 = vmatprep.subr.mxu0 0.0
      %1830 = vmatpush1.msra.mxu0 0.0
      %1831 = vmatprep.subr.mxu0 0.0
      %1832 = vmatpush1.msra.mxu0 0.0
      %1833 = vmatprep.subr.mxu0 0.0
      %1834 = vmatpush1.msra.mxu0 0.0
      %1835 = vmatprep.subr.mxu0 0.0
      %1836 = vmatpush1.msra.mxu0 0.0
      %1837 = vmatprep.subr.mxu0 0.0
      %1838 = vmatpush1.msra.mxu0 0.0
      %1839 = vmatprep.subr.mxu0 0.0
      %1840 = vmatpush1.msra.mxu0 0.0
      %1841 = vmatprep.subr.mxu0 0.0
      %1842 = vmatpush1.msra.mxu0 0.0
      %1843 = vmatprep.subr.mxu0 0.0
      %1844 = vmatpush1.msra.mxu0 0.0
      %1845 = vmatprep.subr.mxu0 0.0
      %1846 = vmatpush1.msra.mxu0 0.0
      %1847 = vmatprep.subr.mxu0 0.0
      %1848 = vmatpush1.msra.mxu0 0.0
      %1849 = vmatprep.mubr.f32.mxu0 0.0
      %1850 = vmatmul.mubr.f32.gmra.mrb[0].mxu0 %v1777
      %v1851 = vpop.f32.mrb[0].mxu0
      %v1852 = vadd.f32 0.0, %v1851
      %v1853 = vpop.f32.mrb[0].mxu0
      %v1854 = vadd.f32 0.0, %v1853
      %1855 = vdwg.mxu0
      %1856 = vmatprep.subr.mxu0 0.0
      %1857 = vmatpush1.msra.mxu0 %v1783
      %1858 = vmatprep.subr.mxu0 0.0
      %1859 = vmatpush1.msra.mxu0 0.0
      %1860 = vmatprep.subr.mxu0 0.0
      %1861 = vmatpush1.msra.mxu0 0.0
      %1862 = vmatprep.subr.mxu0 0.0
      %1863 = vmatpush1.msra.mxu0 0.0
      %1864 = vmatprep.subr.mxu0 0.0
      %1865 = vmatpush1.msra.mxu0 0.0
      %1866 = vmatprep.subr.mxu0 0.0
      %1867 = vmatpush1.msra.mxu0 0.0
      %1868 = vmatprep.subr.mxu0 0.0
      %1869 = vmatpush1.msra.mxu0 0.0
      %1870 = vmatprep.subr.mxu0 0.0
      %1871 = vmatpush1.msra.mxu0 0.0
      %1872 = vmatprep.subr.mxu0 0.0
      %1873 = vmatpush1.msra.mxu0 0.0
      %1874 = vmatprep.subr.mxu0 0.0
      %1875 = vmatpush1.msra.mxu0 0.0
      %1876 = vmatprep.subr.mxu0 0.0
      %1877 = vmatpush1.msra.mxu0 0.0
      %1878 = vmatprep.subr.mxu0 0.0
      %1879 = vmatpush1.msra.mxu0 0.0
      %1880 = vmatprep.subr.mxu0 0.0
      %1881 = vmatpush1.msra.mxu0 0.0
      %1882 = vmatprep.subr.mxu0 0.0
      %1883 = vmatpush1.msra.mxu0 0.0
      %1884 = vmatprep.subr.mxu0 0.0
      %1885 = vmatpush1.msra.mxu0 0.0
      %1886 = vmatprep.subr.mxu0 0.0
      %1887 = vmatpush1.msra.mxu0 0.0
      %1888 = vmatprep.subr.mxu0 0.0
      %1889 = vmatpush1.msra.mxu0 0.0
      %1890 = vmatprep.subr.mxu0 0.0
      %1891 = vmatpush1.msra.mxu0 0.0
      %1892 = vmatprep.subr.mxu0 0.0
      %1893 = vmatpush1.msra.mxu0 0.0
      %1894 = vmatprep.subr.mxu0 0.0
      %1895 = vmatpush1.msra.mxu0 0.0
      %1896 = vmatprep.subr.mxu0 0.0
      %1897 = vmatpush1.msra.mxu0 0.0
      %1898 = vmatprep.subr.mxu0 0.0
      %1899 = vmatpush1.msra.mxu0 0.0
      %1900 = vmatprep.subr.mxu0 0.0
      %1901 = vmatpush1.msra.mxu0 0.0
      %1902 = vmatprep.subr.mxu0 0.0
      %1903 = vmatpush1.msra.mxu0 0.0
      %1904 = vmatprep.subr.mxu0 0.0
      %1905 = vmatpush1.msra.mxu0 0.0
      %1906 = vmatprep.subr.mxu0 0.0
      %1907 = vmatpush1.msra.mxu0 0.0
      %1908 = vmatprep.subr.mxu0 0.0
      %1909 = vmatpush1.msra.mxu0 0.0
      %1910 = vmatprep.subr.mxu0 0.0
      %1911 = vmatpush1.msra.mxu0 0.0
      %1912 = vmatprep.subr.mxu0 0.0
      %1913 = vmatpush1.msra.mxu0 0.0
      %1914 = vmatprep.subr.mxu0 0.0
      %1915 = vmatpush1.msra.mxu0 0.0
      %1916 = vmatprep.subr.mxu0 0.0
      %1917 = vmatpush1.msra.mxu0 0.0
      %1918 = vmatprep.subr.mxu0 0.0
      %1919 = vmatpush1.msra.mxu0 0.0
      %1920 = vmatprep.mubr.f32.mxu0 0.0
      %1921 = vmatmul.mubr.f32.gmra.mrb[0].mxu0 %v1777
      %v1922 = vpop.f32.mrb[0].mxu0
      %v1923 = vadd.f32 0.0, %v1922
      %v1924 = vpop.f32.mrb[0].mxu0
      %1925 = vdwg.mxu0
      %v1926 = vadd.f32 %v1771, %v1852
      %v1927 = vadd.f32 %v1772, %v1854
      %v1928 = vadd.f32 %v1773, %v1923
      %1929 = vrot.lane.b32.xlu0 %v1099, 127
      %v1930 = vpop.permute.xlu0 %1929
      %1931 = vrot.lane.b32.xlu0 %v1103, 127
      %v1932 = vpop.permute.xlu0 %1931
      %1933 = vrot.lane.b32.xlu0 %v1100, 127
      %v1934 = vpop.permute.xlu0 %1933
      %vm1935 = vcmp.lt.s32.totalorder %v1112, 127
      %v1936 = vsel %vm1935, %v1932, %v1934
      %v1937 = vsel %vm1935, %v1930, %v1932
      %v1938 = vsel %vm1935, %v1934, %v1930
      %s1939 = scalar_lea.vmem %s9, 10
      %v1940 = vld [vmem:[%s1939] sm:$0x3]
      %v1942 = vsel %vm1130, %v1940, 0
      %v1945 = vsel %vm1134, %v1937, 0
      %v1948 = vsel %vm1134, %v1936, 0
      %v1951 = vsel %vm1134, %v1938, 0
      %1953 = vmatprep.subr.mxu0 %v1948
      %1954 = vmatpush1.msra.mxu0 %v1945
      %1955 = vmatprep.subr.mxu0 0.0
      %1956 = vmatpush1.msra.mxu0 0.0
      %1957 = vmatprep.subr.mxu0 0.0
      %1958 = vmatpush1.msra.mxu0 0.0
      %1959 = vmatprep.subr.mxu0 0.0
      %1960 = vmatpush1.msra.mxu0 0.0
      %1961 = vmatprep.subr.mxu0 0.0
      %1962 = vmatpush1.msra.mxu0 0.0
      %1963 = vmatprep.subr.mxu0 0.0
      %1964 = vmatpush1.msra.mxu0 0.0
      %1965 = vmatprep.subr.mxu0 0.0
      %1966 = vmatpush1.msra.mxu0 0.0
      %1967 = vmatprep.subr.mxu0 0.0
      %1968 = vmatpush1.msra.mxu0 0.0
      %1969 = vmatprep.subr.mxu0 0.0
      %1970 = vmatpush1.msra.mxu0 0.0
      %1971 = vmatprep.subr.mxu0 0.0
      %1972 = vmatpush1.msra.mxu0 0.0
      %1973 = vmatprep.subr.mxu0 0.0
      %1974 = vmatpush1.msra.mxu0 0.0
      %1975 = vmatprep.subr.mxu0 0.0
      %1976 = vmatpush1.msra.mxu0 0.0
      %1977 = vmatprep.subr.mxu0 0.0
      %1978 = vmatpush1.msra.mxu0 0.0
      %1979 = vmatprep.subr.mxu0 0.0
      %1980 = vmatpush1.msra.mxu0 0.0
      %1981 = vmatprep.subr.mxu0 0.0
      %1982 = vmatpush1.msra.mxu0 0.0
      %1983 = vmatprep.subr.mxu0 0.0
      %1984 = vmatpush1.msra.mxu0 0.0
      %1985 = vmatprep.subr.mxu0 0.0
      %1986 = vmatpush1.msra.mxu0 0.0
      %1987 = vmatprep.subr.mxu0 0.0
      %1988 = vmatpush1.msra.mxu0 0.0
      %1989 = vmatprep.subr.mxu0 0.0
      %1990 = vmatpush1.msra.mxu0 0.0
      %1991 = vmatprep.subr.mxu0 0.0
      %1992 = vmatpush1.msra.mxu0 0.0
      %1993 = vmatprep.subr.mxu0 0.0
      %1994 = vmatpush1.msra.mxu0 0.0
      %1995 = vmatprep.subr.mxu0 0.0
      %1996 = vmatpush1.msra.mxu0 0.0
      %1997 = vmatprep.subr.mxu0 0.0
      %1998 = vmatpush1.msra.mxu0 0.0
      %1999 = vmatprep.subr.mxu0 0.0
      %2000 = vmatpush1.msra.mxu0 0.0
      %2001 = vmatprep.subr.mxu0 0.0
      %2002 = vmatpush1.msra.mxu0 0.0
      %2003 = vmatprep.subr.mxu0 0.0
      %2004 = vmatpush1.msra.mxu0 0.0
      %2005 = vmatprep.subr.mxu0 0.0
      %2006 = vmatpush1.msra.mxu0 0.0
      %2007 = vmatprep.subr.mxu0 0.0
      %2008 = vmatpush1.msra.mxu0 0.0
      %2009 = vmatprep.subr.mxu0 0.0
      %2010 = vmatpush1.msra.mxu0 0.0
      %2011 = vmatprep.subr.mxu0 0.0
      %2012 = vmatpush1.msra.mxu0 0.0
      %2013 = vmatprep.subr.mxu0 0.0
      %2014 = vmatpush1.msra.mxu0 0.0
      %2015 = vmatprep.subr.mxu0 0.0
      %2016 = vmatpush1.msra.mxu0 0.0
      %2017 = vmatprep.mubr.f32.mxu0 0.0
      %2018 = vmatmul.mubr.f32.gmra.mrb[0].mxu0 %v1942
      %v2019 = vpop.f32.mrb[0].mxu0
      %v2020 = vadd.f32 0.0, %v2019
      %v2021 = vpop.f32.mrb[0].mxu0
      %v2022 = vadd.f32 0.0, %v2021
      %2023 = vdwg.mxu0
      %2024 = vmatprep.subr.mxu0 0.0
      %2025 = vmatpush1.msra.mxu0 %v1951
      %2026 = vmatprep.subr.mxu0 0.0
      %2027 = vmatpush1.msra.mxu0 0.0
      %2028 = vmatprep.subr.mxu0 0.0
      %2029 = vmatpush1.msra.mxu0 0.0
      %2030 = vmatprep.subr.mxu0 0.0
      %2031 = vmatpush1.msra.mxu0 0.0
      %2032 = vmatprep.subr.mxu0 0.0
      %2033 = vmatpush1.msra.mxu0 0.0
      %2034 = vmatprep.subr.mxu0 0.0
      %2035 = vmatpush1.msra.mxu0 0.0
      %2036 = vmatprep.subr.mxu0 0.0
      %2037 = vmatpush1.msra.mxu0 0.0
      %2038 = vmatprep.subr.mxu0 0.0
      %2039 = vmatpush1.msra.mxu0 0.0
      %2040 = vmatprep.subr.mxu0 0.0
      %2041 = vmatpush1.msra.mxu0 0.0
      %2042 = vmatprep.subr.mxu0 0.0
      %2043 = vmatpush1.msra.mxu0 0.0
      %2044 = vmatprep.subr.mxu0 0.0
      %2045 = vmatpush1.msra.mxu0 0.0
      %2046 = vmatprep.subr.mxu0 0.0
      %2047 = vmatpush1.msra.mxu0 0.0
      %2048 = vmatprep.subr.mxu0 0.0
      %2049 = vmatpush1.msra.mxu0 0.0
      %2050 = vmatprep.subr.mxu0 0.0
      %2051 = vmatpush1.msra.mxu0 0.0
      %2052 = vmatprep.subr.mxu0 0.0
      %2053 = vmatpush1.msra.mxu0 0.0
      %2054 = vmatprep.subr.mxu0 0.0
      %2055 = vmatpush1.msra.mxu0 0.0
      %2056 = vmatprep.subr.mxu0 0.0
      %2057 = vmatpush1.msra.mxu0 0.0
      %2058 = vmatprep.subr.mxu0 0.0
      %2059 = vmatpush1.msra.mxu0 0.0
      %2060 = vmatprep.subr.mxu0 0.0
      %2061 = vmatpush1.msra.mxu0 0.0
      %2062 = vmatprep.subr.mxu0 0.0
      %2063 = vmatpush1.msra.mxu0 0.0
      %2064 = vmatprep.subr.mxu0 0.0
      %2065 = vmatpush1.msra.mxu0 0.0
      %2066 = vmatprep.subr.mxu0 0.0
      %2067 = vmatpush1.msra.mxu0 0.0
      %2068 = vmatprep.subr.mxu0 0.0
      %2069 = vmatpush1.msra.mxu0 0.0
      %2070 = vmatprep.subr.mxu0 0.0
      %2071 = vmatpush1.msra.mxu0 0.0
      %2072 = vmatprep.subr.mxu0 0.0
      %2073 = vmatpush1.msra.mxu0 0.0
      %2074 = vmatprep.subr.mxu0 0.0
      %2075 = vmatpush1.msra.mxu0 0.0
      %2076 = vmatprep.subr.mxu0 0.0
      %2077 = vmatpush1.msra.mxu0 0.0
      %2078 = vmatprep.subr.mxu0 0.0
      %2079 = vmatpush1.msra.mxu0 0.0
      %2080 = vmatprep.subr.mxu0 0.0
      %2081 = vmatpush1.msra.mxu0 0.0
      %2082 = vmatprep.subr.mxu0 0.0
      %2083 = vmatpush1.msra.mxu0 0.0
      %2084 = vmatprep.subr.mxu0 0.0
      %2085 = vmatpush1.msra.mxu0 0.0
      %2086 = vmatprep.subr.mxu0 0.0
      %2087 = vmatpush1.msra.mxu0 0.0
      %2088 = vmatprep.mubr.f32.mxu0 0.0
      %2089 = vmatmul.mubr.f32.gmra.mrb[0].mxu0 %v1942
      %v2090 = vpop.f32.mrb[0].mxu0
      %v2091 = vadd.f32 0.0, %v2090
      %v2092 = vpop.f32.mrb[0].mxu0
      %2093 = vdwg.mxu0
      %v2094 = vadd.f32 %v1926, %v2020
      %v2095 = vadd.f32 %v1927, %v2022
      %v2096 = vadd.f32 %v1928, %v2091
      %2097 = vrot.lane.b32.xlu0 %v1099, 111
      %v2098 = vpop.permute.xlu0 %2097
      %2099 = vrot.lane.b32.xlu0 %v1103, 111
      %v2100 = vpop.permute.xlu0 %2099
      %2101 = vrot.lane.b32.xlu0 %v1100, 111
      %v2102 = vpop.permute.xlu0 %2101
      %vm2103 = vcmp.lt.s32.totalorder %v1112, 111
      %v2104 = vsel %vm2103, %v2100, %v2102
      %v2105 = vsel %vm2103, %v2098, %v2100
      %v2106 = vsel %vm2103, %v2102, %v2098
      %s2107 = scalar_lea.vmem %s9, 12
      %v2108 = vld [vmem:[%s2107] sm:$0x3]
      %v2110 = vsel %vm1130, %v2108, 0
      %v2113 = vsel %vm1134, %v2105, 0
      %v2116 = vsel %vm1134, %v2104, 0
      %v2119 = vsel %vm1134, %v2106, 0
      %2121 = vmatprep.subr.mxu0 %v2116
      %2122 = vmatpush1.msra.mxu0 %v2113
      %2123 = vmatprep.subr.mxu0 0.0
      %2124 = vmatpush1.msra.mxu0 0.0
      %2125 = vmatprep.subr.mxu0 0.0
      %2126 = vmatpush1.msra.mxu0 0.0
      %2127 = vmatprep.subr.mxu0 0.0
      %2128 = vmatpush1.msra.mxu0 0.0
      %2129 = vmatprep.subr.mxu0 0.0
      %2130 = vmatpush1.msra.mxu0 0.0
      %2131 = vmatprep.subr.mxu0 0.0
      %2132 = vmatpush1.msra.mxu0 0.0
      %2133 = vmatprep.subr.mxu0 0.0
      %2134 = vmatpush1.msra.mxu0 0.0
      %2135 = vmatprep.subr.mxu0 0.0
      %2136 = vmatpush1.msra.mxu0 0.0
      %2137 = vmatprep.subr.mxu0 0.0
      %2138 = vmatpush1.msra.mxu0 0.0
      %2139 = vmatprep.subr.mxu0 0.0
      %2140 = vmatpush1.msra.mxu0 0.0
      %2141 = vmatprep.subr.mxu0 0.0
      %2142 = vmatpush1.msra.mxu0 0.0
      %2143 = vmatprep.subr.mxu0 0.0
      %2144 = vmatpush1.msra.mxu0 0.0
      %2145 = vmatprep.subr.mxu0 0.0
      %2146 = vmatpush1.msra.mxu0 0.0
      %2147 = vmatprep.subr.mxu0 0.0
      %2148 = vmatpush1.msra.mxu0 0.0
      %2149 = vmatprep.subr.mxu0 0.0
      %2150 = vmatpush1.msra.mxu0 0.0
      %2151 = vmatprep.subr.mxu0 0.0
      %2152 = vmatpush1.msra.mxu0 0.0
      %2153 = vmatprep.subr.mxu0 0.0
      %2154 = vmatpush1.msra.mxu0 0.0
      %2155 = vmatprep.subr.mxu0 0.0
      %2156 = vmatpush1.msra.mxu0 0.0
      %2157 = vmatprep.subr.mxu0 0.0
      %2158 = vmatpush1.msra.mxu0 0.0
      %2159 = vmatprep.subr.mxu0 0.0
      %2160 = vmatpush1.msra.mxu0 0.0
      %2161 = vmatprep.subr.mxu0 0.0
      %2162 = vmatpush1.msra.mxu0 0.0
      %2163 = vmatprep.subr.mxu0 0.0
      %2164 = vmatpush1.msra.mxu0 0.0
      %2165 = vmatprep.subr.mxu0 0.0
      %2166 = vmatpush1.msra.mxu0 0.0
      %2167 = vmatprep.subr.mxu0 0.0
      %2168 = vmatpush1.msra.mxu0 0.0
      %2169 = vmatprep.subr.mxu0 0.0
      %2170 = vmatpush1.msra.mxu0 0.0
      %2171 = vmatprep.subr.mxu0 0.0
      %2172 = vmatpush1.msra.mxu0 0.0
      %2173 = vmatprep.subr.mxu0 0.0
      %2174 = vmatpush1.msra.mxu0 0.0
      %2175 = vmatprep.subr.mxu0 0.0
      %2176 = vmatpush1.msra.mxu0 0.0
      %2177 = vmatprep.subr.mxu0 0.0
      %2178 = vmatpush1.msra.mxu0 0.0
      %2179 = vmatprep.subr.mxu0 0.0
      %2180 = vmatpush1.msra.mxu0 0.0
      %2181 = vmatprep.subr.mxu0 0.0
      %2182 = vmatpush1.msra.mxu0 0.0
      %2183 = vmatprep.subr.mxu0 0.0
      %2184 = vmatpush1.msra.mxu0 0.0
      %2185 = vmatprep.mubr.f32.mxu0 0.0
      %2186 = vmatmul.mubr.f32.gmra.mrb[0].mxu0 %v2110
      %v2187 = vpop.f32.mrb[0].mxu0
      %v2188 = vadd.f32 0.0, %v2187
      %v2189 = vpop.f32.mrb[0].mxu0
      %v2190 = vadd.f32 0.0, %v2189
      %2191 = vdwg.mxu0
      %2192 = vmatprep.subr.mxu0 0.0
      %2193 = vmatpush1.msra.mxu0 %v2119
      %2194 = vmatprep.subr.mxu0 0.0
      %2195 = vmatpush1.msra.mxu0 0.0
      %2196 = vmatprep.subr.mxu0 0.0
      %2197 = vmatpush1.msra.mxu0 0.0
      %2198 = vmatprep.subr.mxu0 0.0
      %2199 = vmatpush1.msra.mxu0 0.0
      %2200 = vmatprep.subr.mxu0 0.0
      %2201 = vmatpush1.msra.mxu0 0.0
      %2202 = vmatprep.subr.mxu0 0.0
      %2203 = vmatpush1.msra.mxu0 0.0
      %2204 = vmatprep.subr.mxu0 0.0
      %2205 = vmatpush1.msra.mxu0 0.0
      %2206 = vmatprep.subr.mxu0 0.0
      %2207 = vmatpush1.msra.mxu0 0.0
      %2208 = vmatprep.subr.mxu0 0.0
      %2209 = vmatpush1.msra.mxu0 0.0
      %2210 = vmatprep.subr.mxu0 0.0
      %2211 = vmatpush1.msra.mxu0 0.0
      %2212 = vmatprep.subr.mxu0 0.0
      %2213 = vmatpush1.msra.mxu0 0.0
      %2214 = vmatprep.subr.mxu0 0.0
      %2215 = vmatpush1.msra.mxu0 0.0
      %2216 = vmatprep.subr.mxu0 0.0
      %2217 = vmatpush1.msra.mxu0 0.0
      %2218 = vmatprep.subr.mxu0 0.0
      %2219 = vmatpush1.msra.mxu0 0.0
      %2220 = vmatprep.subr.mxu0 0.0
      %2221 = vmatpush1.msra.mxu0 0.0
      %2222 = vmatprep.subr.mxu0 0.0
      %2223 = vmatpush1.msra.mxu0 0.0
      %2224 = vmatprep.subr.mxu0 0.0
      %2225 = vmatpush1.msra.mxu0 0.0
      %2226 = vmatprep.subr.mxu0 0.0
      %2227 = vmatpush1.msra.mxu0 0.0
      %2228 = vmatprep.subr.mxu0 0.0
      %2229 = vmatpush1.msra.mxu0 0.0
      %2230 = vmatprep.subr.mxu0 0.0
      %2231 = vmatpush1.msra.mxu0 0.0
      %2232 = vmatprep.subr.mxu0 0.0
      %2233 = vmatpush1.msra.mxu0 0.0
      %2234 = vmatprep.subr.mxu0 0.0
      %2235 = vmatpush1.msra.mxu0 0.0
      %2236 = vmatprep.subr.mxu0 0.0
      %2237 = vmatpush1.msra.mxu0 0.0
      %2238 = vmatprep.subr.mxu0 0.0
      %2239 = vmatpush1.msra.mxu0 0.0
      %2240 = vmatprep.subr.mxu0 0.0
      %2241 = vmatpush1.msra.mxu0 0.0
      %2242 = vmatprep.subr.mxu0 0.0
      %2243 = vmatpush1.msra.mxu0 0.0
      %2244 = vmatprep.subr.mxu0 0.0
      %2245 = vmatpush1.msra.mxu0 0.0
      %2246 = vmatprep.subr.mxu0 0.0
      %2247 = vmatpush1.msra.mxu0 0.0
      %2248 = vmatprep.subr.mxu0 0.0
      %2249 = vmatpush1.msra.mxu0 0.0
      %2250 = vmatprep.subr.mxu0 0.0
      %2251 = vmatpush1.msra.mxu0 0.0
      %2252 = vmatprep.subr.mxu0 0.0
      %2253 = vmatpush1.msra.mxu0 0.0
      %2254 = vmatprep.subr.mxu0 0.0
      %2255 = vmatpush1.msra.mxu0 0.0
      %2256 = vmatprep.mubr.f32.mxu0 0.0
      %2257 = vmatmul.mubr.f32.gmra.mrb[0].mxu0 %v2110
      %v2258 = vpop.f32.mrb[0].mxu0
      %v2259 = vadd.f32 0.0, %v2258
      %v2260 = vpop.f32.mrb[0].mxu0
      %2261 = vdwg.mxu0
      %v2262 = vadd.f32 %v2094, %v2188
      %v2263 = vadd.f32 %v2095, %v2190
      %v2264 = vadd.f32 %v2096, %v2259
      %2265 = vrot.lane.b32.xlu0 %v1099, 110
      %v2266 = vpop.permute.xlu0 %2265
      %2267 = vrot.lane.b32.xlu0 %v1103, 110
      %v2268 = vpop.permute.xlu0 %2267
      %2269 = vrot.lane.b32.xlu0 %v1100, 110
      %v2270 = vpop.permute.xlu0 %2269
      %vm2271 = vcmp.lt.s32.totalorder %v1112, 110
      %v2272 = vsel %vm2271, %v2268, %v2270
      %v2273 = vsel %vm2271, %v2266, %v2268
      %v2274 = vsel %vm2271, %v2270, %v2266
      %s2275 = scalar_lea.vmem %s9, 14
      %v2276 = vld [vmem:[%s2275] sm:$0x3]
      %v2278 = vsel %vm1130, %v2276, 0
      %v2281 = vsel %vm1134, %v2273, 0
      %v2284 = vsel %vm1134, %v2272, 0
      %v2287 = vsel %vm1134, %v2274, 0
      %2289 = vmatprep.subr.mxu0 %v2284
      %2290 = vmatpush1.msra.mxu0 %v2281
      %2291 = vmatprep.subr.mxu0 0.0
      %2292 = vmatpush1.msra.mxu0 0.0
      %2293 = vmatprep.subr.mxu0 0.0
      %2294 = vmatpush1.msra.mxu0 0.0
      %2295 = vmatprep.subr.mxu0 0.0
      %2296 = vmatpush1.msra.mxu0 0.0
      %2297 = vmatprep.subr.mxu0 0.0
      %2298 = vmatpush1.msra.mxu0 0.0
      %2299 = vmatprep.subr.mxu0 0.0
      %2300 = vmatpush1.msra.mxu0 0.0
      %2301 = vmatprep.subr.mxu0 0.0
      %2302 = vmatpush1.msra.mxu0 0.0
      %2303 = vmatprep.subr.mxu0 0.0
      %2304 = vmatpush1.msra.mxu0 0.0
      %2305 = vmatprep.subr.mxu0 0.0
      %2306 = vmatpush1.msra.mxu0 0.0
      %2307 = vmatprep.subr.mxu0 0.0
      %2308 = vmatpush1.msra.mxu0 0.0
      %2309 = vmatprep.subr.mxu0 0.0
      %2310 = vmatpush1.msra.mxu0 0.0
      %2311 = vmatprep.subr.mxu0 0.0
      %2312 = vmatpush1.msra.mxu0 0.0
      %2313 = vmatprep.subr.mxu0 0.0
      %2314 = vmatpush1.msra.mxu0 0.0
      %2315 = vmatprep.subr.mxu0 0.0
      %2316 = vmatpush1.msra.mxu0 0.0
      %2317 = vmatprep.subr.mxu0 0.0
      %2318 = vmatpush1.msra.mxu0 0.0
      %2319 = vmatprep.subr.mxu0 0.0
      %2320 = vmatpush1.msra.mxu0 0.0
      %2321 = vmatprep.subr.mxu0 0.0
      %2322 = vmatpush1.msra.mxu0 0.0
      %2323 = vmatprep.subr.mxu0 0.0
      %2324 = vmatpush1.msra.mxu0 0.0
      %2325 = vmatprep.subr.mxu0 0.0
      %2326 = vmatpush1.msra.mxu0 0.0
      %2327 = vmatprep.subr.mxu0 0.0
      %2328 = vmatpush1.msra.mxu0 0.0
      %2329 = vmatprep.subr.mxu0 0.0
      %2330 = vmatpush1.msra.mxu0 0.0
      %2331 = vmatprep.subr.mxu0 0.0
      %2332 = vmatpush1.msra.mxu0 0.0
      %2333 = vmatprep.subr.mxu0 0.0
      %2334 = vmatpush1.msra.mxu0 0.0
      %2335 = vmatprep.subr.mxu0 0.0
      %2336 = vmatpush1.msra.mxu0 0.0
      %2337 = vmatprep.subr.mxu0 0.0
      %2338 = vmatpush1.msra.mxu0 0.0
      %2339 = vmatprep.subr.mxu0 0.0
      %2340 = vmatpush1.msra.mxu0 0.0
      %2341 = vmatprep.subr.mxu0 0.0
      %2342 = vmatpush1.msra.mxu0 0.0
      %2343 = vmatprep.subr.mxu0 0.0
      %2344 = vmatpush1.msra.mxu0 0.0
      %2345 = vmatprep.subr.mxu0 0.0
      %2346 = vmatpush1.msra.mxu0 0.0
      %2347 = vmatprep.subr.mxu0 0.0
      %2348 = vmatpush1.msra.mxu0 0.0
      %2349 = vmatprep.subr.mxu0 0.0
      %2350 = vmatpush1.msra.mxu0 0.0
      %2351 = vmatprep.subr.mxu0 0.0
      %2352 = vmatpush1.msra.mxu0 0.0
      %2353 = vmatprep.mubr.f32.mxu0 0.0
      %2354 = vmatmul.mubr.f32.gmra.mrb[0].mxu0 %v2278
      %v2355 = vpop.f32.mrb[0].mxu0
      %v2356 = vadd.f32 0.0, %v2355
      %v2357 = vpop.f32.mrb[0].mxu0
      %v2358 = vadd.f32 0.0, %v2357
      %2359 = vdwg.mxu0
      %2360 = vmatprep.subr.mxu0 0.0
      %2361 = vmatpush1.msra.mxu0 %v2287
      %2362 = vmatprep.subr.mxu0 0.0
      %2363 = vmatpush1.msra.mxu0 0.0
      %2364 = vmatprep.subr.mxu0 0.0
      %2365 = vmatpush1.msra.mxu0 0.0
      %2366 = vmatprep.subr.mxu0 0.0
      %2367 = vmatpush1.msra.mxu0 0.0
      %2368 = vmatprep.subr.mxu0 0.0
      %2369 = vmatpush1.msra.mxu0 0.0
      %2370 = vmatprep.subr.mxu0 0.0
      %2371 = vmatpush1.msra.mxu0 0.0
      %2372 = vmatprep.subr.mxu0 0.0
      %2373 = vmatpush1.msra.mxu0 0.0
      %2374 = vmatprep.subr.mxu0 0.0
      %2375 = vmatpush1.msra.mxu0 0.0
      %2376 = vmatprep.subr.mxu0 0.0
      %2377 = vmatpush1.msra.mxu0 0.0
      %2378 = vmatprep.subr.mxu0 0.0
      %2379 = vmatpush1.msra.mxu0 0.0
      %2380 = vmatprep.subr.mxu0 0.0
      %2381 = vmatpush1.msra.mxu0 0.0
      %2382 = vmatprep.subr.mxu0 0.0
      %2383 = vmatpush1.msra.mxu0 0.0
      %2384 = vmatprep.subr.mxu0 0.0
      %2385 = vmatpush1.msra.mxu0 0.0
      %2386 = vmatprep.subr.mxu0 0.0
      %2387 = vmatpush1.msra.mxu0 0.0
      %2388 = vmatprep.subr.mxu0 0.0
      %2389 = vmatpush1.msra.mxu0 0.0
      %2390 = vmatprep.subr.mxu0 0.0
      %2391 = vmatpush1.msra.mxu0 0.0
      %2392 = vmatprep.subr.mxu0 0.0
      %2393 = vmatpush1.msra.mxu0 0.0
      %2394 = vmatprep.subr.mxu0 0.0
      %2395 = vmatpush1.msra.mxu0 0.0
      %2396 = vmatprep.subr.mxu0 0.0
      %2397 = vmatpush1.msra.mxu0 0.0
      %2398 = vmatprep.subr.mxu0 0.0
      %2399 = vmatpush1.msra.mxu0 0.0
      %2400 = vmatprep.subr.mxu0 0.0
      %2401 = vmatpush1.msra.mxu0 0.0
      %2402 = vmatprep.subr.mxu0 0.0
      %2403 = vmatpush1.msra.mxu0 0.0
      %2404 = vmatprep.subr.mxu0 0.0
      %2405 = vmatpush1.msra.mxu0 0.0
      %2406 = vmatprep.subr.mxu0 0.0
      %2407 = vmatpush1.msra.mxu0 0.0
      %2408 = vmatprep.subr.mxu0 0.0
      %2409 = vmatpush1.msra.mxu0 0.0
      %2410 = vmatprep.subr.mxu0 0.0
      %2411 = vmatpush1.msra.mxu0 0.0
      %2412 = vmatprep.subr.mxu0 0.0
      %2413 = vmatpush1.msra.mxu0 0.0
      %2414 = vmatprep.subr.mxu0 0.0
      %2415 = vmatpush1.msra.mxu0 0.0
      %2416 = vmatprep.subr.mxu0 0.0
      %2417 = vmatpush1.msra.mxu0 0.0
      %2418 = vmatprep.subr.mxu0 0.0
      %2419 = vmatpush1.msra.mxu0 0.0
      %2420 = vmatprep.subr.mxu0 0.0
      %2421 = vmatpush1.msra.mxu0 0.0
      %2422 = vmatprep.subr.mxu0 0.0
      %2423 = vmatpush1.msra.mxu0 0.0
      %2424 = vmatprep.mubr.f32.mxu0 0.0
      %2425 = vmatmul.mubr.f32.gmra.mrb[0].mxu0 %v2278
      %v2426 = vpop.f32.mrb[0].mxu0
      %v2427 = vadd.f32 0.0, %v2426
      %v2428 = vpop.f32.mrb[0].mxu0
      %2429 = vdwg.mxu0
      %v2430 = vadd.f32 %v2262, %v2356
      %v2431 = vadd.f32 %v2263, %v2358
      %v2432 = vadd.f32 %v2264, %v2427
      %2433 = vrot.lane.b32.xlu0 %v1099, 109
      %v2434 = vpop.permute.xlu0 %2433
      %2435 = vrot.lane.b32.xlu0 %v1103, 109
      %v2436 = vpop.permute.xlu0 %2435
      %2437 = vrot.lane.b32.xlu0 %v1100, 109
      %v2438 = vpop.permute.xlu0 %2437
      %vm2439 = vcmp.lt.s32.totalorder %v1112, 109
      %v2440 = vsel %vm2439, %v2436, %v2438
      %v2441 = vsel %vm2439, %v2434, %v2436
      %v2442 = vsel %vm2439, %v2438, %v2434
      %s2443 = scalar_lea.vmem %s9, 16
      %v2444 = vld [vmem:[%s2443] sm:$0x3]
      %v2446 = vsel %vm1130, %v2444, 0
      %v2449 = vsel %vm1134, %v2441, 0
      %v2452 = vsel %vm1134, %v2440, 0
      %v2455 = vsel %vm1134, %v2442, 0
      %2457 = vmatprep.subr.mxu0 %v2452
      %2458 = vmatpush1.msra.mxu0 %v2449
      %2459 = vmatprep.subr.mxu0 0.0
      %2460 = vmatpush1.msra.mxu0 0.0
      %2461 = vmatprep.subr.mxu0 0.0
      %2462 = vmatpush1.msra.mxu0 0.0
      %2463 = vmatprep.subr.mxu0 0.0
      %2464 = vmatpush1.msra.mxu0 0.0
      %2465 = vmatprep.subr.mxu0 0.0
      %2466 = vmatpush1.msra.mxu0 0.0
      %2467 = vmatprep.subr.mxu0 0.0
      %2468 = vmatpush1.msra.mxu0 0.0
      %2469 = vmatprep.subr.mxu0 0.0
      %2470 = vmatpush1.msra.mxu0 0.0
      %2471 = vmatprep.subr.mxu0 0.0
      %2472 = vmatpush1.msra.mxu0 0.0
      %2473 = vmatprep.subr.mxu0 0.0
      %2474 = vmatpush1.msra.mxu0 0.0
      %2475 = vmatprep.subr.mxu0 0.0
      %2476 = vmatpush1.msra.mxu0 0.0
      %2477 = vmatprep.subr.mxu0 0.0
      %2478 = vmatpush1.msra.mxu0 0.0
      %2479 = vmatprep.subr.mxu0 0.0
      %2480 = vmatpush1.msra.mxu0 0.0
      %2481 = vmatprep.subr.mxu0 0.0
      %2482 = vmatpush1.msra.mxu0 0.0
      %2483 = vmatprep.subr.mxu0 0.0
      %2484 = vmatpush1.msra.mxu0 0.0
      %2485 = vmatprep.subr.mxu0 0.0
      %2486 = vmatpush1.msra.mxu0 0.0
      %2487 = vmatprep.subr.mxu0 0.0
      %2488 = vmatpush1.msra.mxu0 0.0
      %2489 = vmatprep.subr.mxu0 0.0
      %2490 = vmatpush1.msra.mxu0 0.0
      %2491 = vmatprep.subr.mxu0 0.0
      %2492 = vmatpush1.msra.mxu0 0.0
      %2493 = vmatprep.subr.mxu0 0.0
      %2494 = vmatpush1.msra.mxu0 0.0
      %2495 = vmatprep.subr.mxu0 0.0
      %2496 = vmatpush1.msra.mxu0 0.0
      %2497 = vmatprep.subr.mxu0 0.0
      %2498 = vmatpush1.msra.mxu0 0.0
      %2499 = vmatprep.subr.mxu0 0.0
      %2500 = vmatpush1.msra.mxu0 0.0
      %2501 = vmatprep.subr.mxu0 0.0
      %2502 = vmatpush1.msra.mxu0 0.0
      %2503 = vmatprep.subr.mxu0 0.0
      %2504 = vmatpush1.msra.mxu0 0.0
      %2505 = vmatprep.subr.mxu0 0.0
      %2506 = vmatpush1.msra.mxu0 0.0
      %2507 = vmatprep.subr.mxu0 0.0
      %2508 = vmatpush1.msra.mxu0 0.0
      %2509 = vmatprep.subr.mxu0 0.0
      %2510 = vmatpush1.msra.mxu0 0.0
      %2511 = vmatprep.subr.mxu0 0.0
      %2512 = vmatpush1.msra.mxu0 0.0
      %2513 = vmatprep.subr.mxu0 0.0
      %2514 = vmatpush1.msra.mxu0 0.0
      %2515 = vmatprep.subr.mxu0 0.0
      %2516 = vmatpush1.msra.mxu0 0.0
      %2517 = vmatprep.subr.mxu0 0.0
      %2518 = vmatpush1.msra.mxu0 0.0
      %2519 = vmatprep.subr.mxu0 0.0
      %2520 = vmatpush1.msra.mxu0 0.0
      %2521 = vmatprep.mubr.f32.mxu0 0.0
      %2522 = vmatmul.mubr.f32.gmra.mrb[0].mxu0 %v2446
      %v2523 = vpop.f32.mrb[0].mxu0
      %v2524 = vadd.f32 0.0, %v2523
      %v2525 = vpop.f32.mrb[0].mxu0
      %v2526 = vadd.f32 0.0, %v2525
      %2527 = vdwg.mxu0
      %2528 = vmatprep.subr.mxu0 0.0
      %2529 = vmatpush1.msra.mxu0 %v2455
      %2530 = vmatprep.subr.mxu0 0.0
      %2531 = vmatpush1.msra.mxu0 0.0
      %2532 = vmatprep.subr.mxu0 0.0
      %2533 = vmatpush1.msra.mxu0 0.0
      %2534 = vmatprep.subr.mxu0 0.0
      %2535 = vmatpush1.msra.mxu0 0.0
      %2536 = vmatprep.subr.mxu0 0.0
      %2537 = vmatpush1.msra.mxu0 0.0
      %2538 = vmatprep.subr.mxu0 0.0
      %2539 = vmatpush1.msra.mxu0 0.0
      %2540 = vmatprep.subr.mxu0 0.0
      %2541 = vmatpush1.msra.mxu0 0.0
      %2542 = vmatprep.subr.mxu0 0.0
      %2543 = vmatpush1.msra.mxu0 0.0
      %2544 = vmatprep.subr.mxu0 0.0
      %2545 = vmatpush1.msra.mxu0 0.0
      %2546 = vmatprep.subr.mxu0 0.0
      %2547 = vmatpush1.msra.mxu0 0.0
      %2548 = vmatprep.subr.mxu0 0.0
      %2549 = vmatpush1.msra.mxu0 0.0
      %2550 = vmatprep.subr.mxu0 0.0
      %2551 = vmatpush1.msra.mxu0 0.0
      %2552 = vmatprep.subr.mxu0 0.0
      %2553 = vmatpush1.msra.mxu0 0.0
      %2554 = vmatprep.subr.mxu0 0.0
      %2555 = vmatpush1.msra.mxu0 0.0
      %2556 = vmatprep.subr.mxu0 0.0
      %2557 = vmatpush1.msra.mxu0 0.0
      %2558 = vmatprep.subr.mxu0 0.0
      %2559 = vmatpush1.msra.mxu0 0.0
      %2560 = vmatprep.subr.mxu0 0.0
      %2561 = vmatpush1.msra.mxu0 0.0
      %2562 = vmatprep.subr.mxu0 0.0
      %2563 = vmatpush1.msra.mxu0 0.0
      %2564 = vmatprep.subr.mxu0 0.0
      %2565 = vmatpush1.msra.mxu0 0.0
      %2566 = vmatprep.subr.mxu0 0.0
      %2567 = vmatpush1.msra.mxu0 0.0
      %2568 = vmatprep.subr.mxu0 0.0
      %2569 = vmatpush1.msra.mxu0 0.0
      %2570 = vmatprep.subr.mxu0 0.0
      %2571 = vmatpush1.msra.mxu0 0.0
      %2572 = vmatprep.subr.mxu0 0.0
      %2573 = vmatpush1.msra.mxu0 0.0
      %2574 = vmatprep.subr.mxu0 0.0
      %2575 = vmatpush1.msra.mxu0 0.0
      %2576 = vmatprep.subr.mxu0 0.0
      %2577 = vmatpush1.msra.mxu0 0.0
      %2578 = vmatprep.subr.mxu0 0.0
      %2579 = vmatpush1.msra.mxu0 0.0
      %2580 = vmatprep.subr.mxu0 0.0
      %2581 = vmatpush1.msra.mxu0 0.0
      %2582 = vmatprep.subr.mxu0 0.0
      %2583 = vmatpush1.msra.mxu0 0.0
      %2584 = vmatprep.subr.mxu0 0.0
      %2585 = vmatpush1.msra.mxu0 0.0
      %2586 = vmatprep.subr.mxu0 0.0
      %2587 = vmatpush1.msra.mxu0 0.0
      %2588 = vmatprep.subr.mxu0 0.0
      %2589 = vmatpush1.msra.mxu0 0.0
      %2590 = vmatprep.subr.mxu0 0.0
      %2591 = vmatpush1.msra.mxu0 0.0
      %2592 = vmatprep.mubr.f32.mxu0 0.0
      %2593 = vmatmul.mubr.f32.gmra.mrb[0].mxu0 %v2446
      %v2594 = vpop.f32.mrb[0].mxu0
      %v2595 = vadd.f32 0.0, %v2594
      %v2596 = vpop.f32.mrb[0].mxu0
      %2597 = vdwg.mxu0
      %v2598 = vadd.f32 %v2430, %v2524
      %v2599 = vadd.f32 %v2431, %v2526
      %v2600 = vadd.f32 %v2432, %v2595
      %v2601 = vld [vmem:[%s10] sm:$0x3]
      %2603 = vset.pattern.permute.xlu0 0
      %2604 = vperm.xlu0 %2603, %v2601
      %v2605 = vpop.permute.xlu0 %2604
      %v2607 = vadd.f32 %v2598, %v2605
      %v2608 = vadd.f32 %v2599, %v2605
      %v2609 = vadd.f32 %v2600, %v2605
      %v2613 = vcombine.low %v2607, %v2608
      %v2615 = vunpack.c.l.s4 1983009808
      %v2616 = vunpack.c.0.s8 %v2615
      %v2617 = vlaneseq
      %v2618 = vshrl.u32 %v2617, 7
      %v2619 = vsub.s32 %v2616, %v2618
      %v2620 = vrot.slane %v2613, %v2619
      %v2622 = vunpack.c.l.s4 1983009808
      %v2623 = vunpack.c.0.s8 %v2622
      %v2624 = vlaneseq
      %v2625 = vshrl.u32 %v2624, 7
      %v2626 = vsub.s32 %v2623, %v2625
      %v2627 = vrot.slane %v2609, %v2626
      %v2628 = vcombine.low %v2620, %v2627
      %2630 = vst [vmem:[%s506] sm:$0x3f] %v2628
      %v2631 = vlaneseq
      %v2632 = vshrl.u32 %v2631, 7
      %v2633 = vsub.s32 0, %v2632
      %v2634 = vrot.slane %v1024, %v2633
      %v2635 = vlaneseq
      %v2636 = vshrl.u32 %v2635, 7
      %v2637 = vsub.s32 0, %v2636
      %v2638 = vrot.slane %v1026, %v2637
      %v2639 = vlaneseq
      %v2640 = vshrl.u32 %v2639, 7
      %v2641 = vsub.s32 0, %v2640
      %v2642 = vrot.slane %v1028, %v2641
      %v2643 = vmul.f32 %v2607, %v2634
      %v2644 = vmul.f32 %v2608, %v2638
      %v2645 = vmul.f32 %v2609, %v2642
      %vm2646 = vcmp.gt.f32.partialorder %v517, 0.5
      %v2647 = vsel %vm2646, 1, 0
      %v2648 = vlaneseq
      %v2649 = vshrl.u32 %v2648, 7
      %v2650 = vsub.s32 0, %v2649
      %v2651 = vrot.slane %v2647, %v2650
      %v2652 = vlaneseq
      %v2653 = vshrl.u32 %v2652, 7
      %v2654 = vsub.s32 1, %v2653
      %v2655 = vrot.slane %v2647, %v2654
      %v2656 = vlaneseq
      %v2657 = vshrl.u32 %v2656, 7
      %v2658 = vsub.s32 2, %v2657
      %v2659 = vrot.slane %v2647, %v2658
      %vm2660 = vcmp.eq.s32.totalorder %v2651, 1
      %vm2661 = vcmp.eq.s32.totalorder %v2655, 1
      %vm2662 = vcmp.eq.s32.totalorder %v2659, 1
      %v2663 = vsel %vm2660, %v2643, inf
      %v2664 = vsel %vm2661, %v2644, inf
      %v2665 = vsel %vm2662, %v2645, inf
      %v2666 = vsel %vm860, %v2663, inf
      %v2667 = vsel %vm860, %v2664, inf
      %v2668 = vsel %vm860, %v2665, inf
      %v2669 = vmin.f32 %v2666, %v2667
      %v2670 = vmin.f32 %v2669, %v2668
      %2671 = vmin.xlane.f32.xlu0 %v2670
      %v2672 = vpop.xlane.xlu0 %2671
      %v2673 = vrot.slane %v2672, 4
      %v2674 = vmin.f32 %v2672, %v2673
      %v2675 = vrot.slane %v2674, 2
      %v2676 = vmin.f32 %v2674, %v2675
      %v2677 = vrot.slane %v2676, 1
      %v2678 = vmin.f32 %v2676, %v2677
      %s2679 = vtos %v2678
      %v2680 = vstv %s2679
      %vm2681 = vcmask 0
      %2682 = vst.msk [vmem:[%s513] sm:$0x1] %vm2681, %v2680
      %v2683 = vsel %vm2660, %v2643, -inf
      %v2684 = vsel %vm2661, %v2644, -inf
      %v2685 = vsel %vm2662, %v2645, -inf
      %v2686 = vsel %vm860, %v2683, -inf
      %v2687 = vsel %vm860, %v2684, -inf
      %v2688 = vsel %vm860, %v2685, -inf
      %v2689 = vmax.f32 %v2686, %v2687
      %v2690 = vmax.f32 %v2689, %v2688
      %2691 = vmax.xlane.f32.xlu0 %v2690
      %v2692 = vpop.xlane.xlu0 %2691
      %v2693 = vrot.slane %v2692, 4
      %v2694 = vmax.f32 %v2692, %v2693
      %v2695 = vrot.slane %v2694, 2
      %v2696 = vmax.f32 %v2694, %v2695
      %v2697 = vrot.slane %v2696, 1
      %v2698 = vmax.f32 %v2696, %v2697
      %s2699 = vtos %v2698
      %v2700 = vstv %s2699
      %2701 = vst.msk [vmem:[%s516] sm:$0x1] %vm2681, %v2700
      %p2702 = scmp.lt.s32.totalorder %s28, 1
      %s2703 = scalar_select %p2702, %s28, 1
      %s2704 = smul.addr %s2703, 3
      %s2705 = smul.addr %s2704, 2
      %s2706 = scalar_lea.vmem %s11, %s2705
      %p2707 = scmp.lt.s32.totalorder %s28, 1
      %s2708 = scalar_select %p2707, %s28, 1
      %s2709 = smul.addr %s2708, 3
      %s2710 = scalar_lea.vmem %s12, %s2709
      %p2711 = scmp.lt.s32.totalorder %s28, 1
      %s2712 = scalar_select %p2711, %s28, 1
      %s2713 = scalar_lea.vmem %s13, %s2712
      %p2714 = scmp.lt.s32.totalorder %s28, 1
      %s2715 = scalar_select %p2714, %s28, 1
      %s2716 = scalar_lea.vmem %s14, %s2715
      // Predicated region
      $region65: #{sab_forward.2} parent=63 // pred_check
        %p2717 = pneg %p287
      $region66: #{sab_forward.2} parent=63 // pred_check_branch
        %2719 = sbr.rel (%p2717) target = $region68
      $region67: #{sab_forward.2} parent=63 // pred_region
        _
      $region68: #{sab_forward.2} parent=63 // pred_fallthru
        _
      // Predicated region
      $region69: #{sab_forward.2} parent=63 // pred_check
        %p2720 = pneg %p313
      $region70: #{sab_forward.2} parent=63 // pred_check_branch
        %2722 = sbr.rel (%p2720) target = $region72
      $region71: #{sab_forward.2} parent=63 // pred_region
        _
      $region72: #{sab_forward.2} parent=63 // pred_fallthru
        _
      // Predicated region
      $region73: #{sab_forward.2} parent=63 // pred_check
        %p2723 = pneg %p339
      $region74: #{sab_forward.2} parent=63 // pred_check_branch
        %2725 = sbr.rel (%p2723) target = $region76
      $region75: #{sab_forward.2} parent=63 // pred_region
        _
      $region76: #{sab_forward.2} parent=63 // pred_fallthru
        _
      // Predicated region
      $region77: #{sab_forward.2} parent=63 // pred_check
        %p2726 = pneg %p365
      $region78: #{sab_forward.2} parent=63 // pred_check_branch
        %2728 = sbr.rel (%p2726) target = $region80
      $region79: #{sab_forward.2} parent=63 // pred_region
        _
      $region80: #{sab_forward.2} parent=63 // pred_fallthru
        _
    $region64: #{sab_forward.2} parent=5 // pred_fallthru
      _
    %p2729 = scmp.le.s32.totalorder 2, %s23
    // Predicated region
    $region81: #{sab_forward.2} parent=5 // pred_check
      %p2730 = pneg %p2729
    $region82: #{sab_forward.2} parent=5 // pred_check_branch
      %2732 = sbr.rel (%p2730) target = $region84
    $region83: #{sab_forward.2} parent=5 // pred_region
      %s2733 = ssub.s32 %s23, 2
      // Predicated region
      $region85: #{sab_forward.2} parent=83 // pred_check
        %p2734 = pneg %p293
      $region86: #{sab_forward.2} parent=83 // pred_check_branch
        %2736 = sbr.rel (%p2734) target = $region88
      $region87: #{sab_forward.2} parent=83 // pred_region
        %p2737 = scmp.lt.s32.totalorder %s29, 1
        %s2738 = scalar_select %p2737, %s29, 1
        %s2739 = smul.addr %s2738, 3
        %s2740 = smul.addr %s2739, 2
        %s2741 = scalar_lea.vmem %s11, %s2740
      $region88: #{sab_forward.2} parent=83 // pred_fallthru
        _
      // Predicated region
      $region89: #{sab_forward.2} parent=83 // pred_check
        %p2742 = pneg %p319
      $region90: #{sab_forward.2} parent=83 // pred_check_branch
        %2744 = sbr.rel (%p2742) target = $region92
      $region91: #{sab_forward.2} parent=83 // pred_region
        %p2745 = scmp.lt.s32.totalorder %s29, 1
        %s2746 = scalar_select %p2745, %s29, 1
        %s2747 = smul.addr %s2746, 3
        %s2748 = scalar_lea.vmem %s12, %s2747
      $region92: #{sab_forward.2} parent=83 // pred_fallthru
        _
      // Predicated region
      $region93: #{sab_forward.2} parent=83 // pred_check
        %p2749 = pneg %p345
      $region94: #{sab_forward.2} parent=83 // pred_check_branch
        %2751 = sbr.rel (%p2749) target = $region96
      $region95: #{sab_forward.2} parent=83 // pred_region
        %p2752 = scmp.lt.s32.totalorder %s29, 1
        %s2753 = scalar_select %p2752, %s29, 1
        %s2754 = scalar_lea.vmem %s13, %s2753
      $region96: #{sab_forward.2} parent=83 // pred_fallthru
        _
      // Predicated region
      $region97: #{sab_forward.2} parent=83 // pred_check
        %p2755 = pneg %p371
      $region98: #{sab_forward.2} parent=83 // pred_check_branch
        %2757 = sbr.rel (%p2755) target = $region100
      $region99: #{sab_forward.2} parent=83 // pred_region
        %p2758 = scmp.lt.s32.totalorder %s29, 1
        %s2759 = scalar_select %p2758, %s29, 1
        %s2760 = scalar_lea.vmem %s14, %s2759
      $region100: #{sab_forward.2} parent=83 // pred_fallthru
        _
    $region84: #{sab_forward.2} parent=5 // pred_fallthru
      _
  $region6: #{sab_forward.2} parent=0 // loop_footer
    %s27 = sadd.s32 1, %s23
  $region7: #{sab_forward.2} parent=0 // loop_footer_branch
    %22 = sbr.rel target = $region3
  $region8: #{sab_forward.2} parent=0 // loop_exit
    _

</llo_original>
